<compile_context>
chip_gen: v7x
topology: tpu7x:2x2x1
jax: 0.10.0
libtpu: 0.0.40
codegen_flags: <defaults>
</compile_context>

<pallas_src>
import functools

import jax
import jax.numpy as jnp
import numpy as np
from jax.experimental import pallas as pl
from jax.experimental.pallas import tpu as pltpu


_VMEM_LIMIT = 48 * 1024 * 1024   # <= v7x 64 MiB/TC; raises v5e's 16 MiB default


# ---------------------------------------------------------------------------
# Fused whole-network kernel (one grid step == one image)
# ---------------------------------------------------------------------------
def _dqn_fused_kernel(p1_ref, w1_ref, b1_ref,
                      g2_ref, w2_ref, b2_ref,
                      g3_ref, w3_ref, b3_ref,
                      wf1_ref, bf1_ref, wf2_ref, bf2_ref,
                      o_ref):
    f32 = jnp.float32

    # ---- conv1 (patches prebuilt outside): (P1, K1) @ (K1, C1) + bias, ReLU
    a1 = jnp.dot(p1_ref[0], w1_ref[...], preferred_element_type=f32)
    a1 = jnp.maximum(a1 + b1_ref[...], 0.0).astype(jnp.bfloat16)       # (P1, C1)

    # ---- conv2: tap-sum, strided spatial gather as a one-hot MXU matmul ----
    t2, p2, _ = g2_ref.shape
    c2 = w2_ref.shape[2]
    acc2 = jnp.zeros((p2, c2), f32)
    for t in range(t2):                                   # kh*kw = 16 taps
        xt = jnp.dot(g2_ref[t], a1, preferred_element_type=f32).astype(jnp.bfloat16)
        acc2 = acc2 + jnp.dot(xt, w2_ref[t], preferred_element_type=f32)
    a2 = jnp.maximum(acc2 + b2_ref[...], 0.0).astype(jnp.bfloat16)     # (P2, C2)

    # ---- conv3: same tap-sum pattern (stride 1) ----
    t3, p3, _ = g3_ref.shape
    c3 = w3_ref.shape[2]
    acc3 = jnp.zeros((p3, c3), f32)
    for t in range(t3):                                   # kh*kw = 9 taps
        xt = jnp.dot(g3_ref[t], a2, preferred_element_type=f32).astype(jnp.bfloat16)
        acc3 = acc3 + jnp.dot(xt, w3_ref[t], preferred_element_type=f32)
    a3 = jnp.maximum(acc3 + b3_ref[...], 0.0).astype(jnp.bfloat16)     # (P3, C3)

    # ---- fc1: per spatial position (PyTorch NCHW-flatten order is folded
    #      into wf1 at prep time, so no in-kernel flatten/relayout is needed).
    # TODO(synk): for large conv-out spatial extents, replace the per-position
    # loop with a single flattened matmul.
    hdim = wf1_ref.shape[2]
    acc_h = jnp.zeros((1, hdim), f32)
    for p in range(p3):
        acc_h = acc_h + jnp.dot(a3[p:p + 1, :], wf1_ref[p],
                                preferred_element_type=f32)
    h = jnp.maximum(acc_h + bf1_ref[...], 0.0).astype(jnp.bfloat16)    # (1, H)

    # ---- fc2 (output pre-padded to a lane-dense 128, sliced off outside) ----
    out = jnp.dot(h, wf2_ref[...], preferred_element_type=f32) + bf2_ref[...]
    o_ref[0] = out                                                      # (1, NP)


def dqn_fused(patches, pr):
    """patches: (N, P1, K1) bf16; pr: prepared weights -> (N, 1, NP) f32."""
    n, p1, k1 = patches.shape
    k1w, c1 = pr["c1_w"].shape
    t2, p2, _ = pr["g2"].shape
    _, _, c2 = pr["c2_w"].shape
    t3, p3, _ = pr["g3"].shape
    _, _, c3 = pr["c3_w"].shape
    hdim = pr["fc1_w"].shape[2]
    npad = pr["fc2_w"].shape[1]
    assert k1 == k1w

    flops_per_img = (2 * p1 * k1 * c1
                     + t2 * (2 * p2 * p1 * c1 + 2 * p2 * c1 * c2)
                     + t3 * (2 * p3 * p2 * c2 + 2 * p3 * c2 * c3)
                     + 2 * p3 * c3 * hdim + 2 * hdim * npad)
    weight_bytes = sum(int(v.size) * v.dtype.itemsize for v in pr.values())
    bytes_accessed = (int(patches.size) * patches.dtype.itemsize
                      + weight_bytes + n * npad * 4)

    def full(*s):
        return pl.BlockSpec(s, lambda b: (0,) * len(s))

    grid_spec = pl.GridSpec(
        grid=(n,),
        in_specs=[
            pl.BlockSpec((1, p1, k1), lambda b: (b, 0, 0)),   # conv1 patches
            full(k1, c1), full(1, c1),                        # conv1 w, b
            full(t2, p2, p1), full(t2, c1, c2), full(1, c2),  # conv2 g, w, b
            full(t3, p3, p2), full(t3, c2, c3), full(1, c3),  # conv3 g, w, b
            full(p3, c3, hdim), full(1, hdim),                # fc1 w, b
            full(hdim, npad), full(1, npad),                  # fc2 w, b
        ],
        out_specs=pl.BlockSpec((1, 1, npad), lambda b: (b, 0, 0)),
    )
    return pl.pallas_call(
        _dqn_fused_kernel,
        out_shape=jax.ShapeDtypeStruct((n, 1, npad), jnp.float32),
        grid_spec=grid_spec,
        compiler_params=pltpu.CompilerParams(
            dimension_semantics=("parallel",),   # >=2 steps -> both v7x cores
            vmem_limit_bytes=_VMEM_LIMIT,
        ),
        cost_estimate=pl.CostEstimate(
            flops=int(n * flops_per_img),
            transcendentals=0,
            bytes_accessed=int(bytes_accessed),
        ),
    )(patches, pr["c1_w"], pr["c1_b"],
      pr["g2"], pr["c2_w"], pr["c2_b"],
      pr["g3"], pr["c3_w"], pr["c3_b"],
      pr["fc1_w"], pr["fc1_b"], pr["fc2_w"], pr["fc2_b"])


# ---------------------------------------------------------------------------
# conv1 im2col glue (plain JAX, NHWC, patch feature order = (kh, kw, c))
# ---------------------------------------------------------------------------
def _im2col_nhwc(x, kh, kw, stride):
    n, h, w, c = x.shape
    oh = (h - kh) // stride + 1
    ow = (w - kw) // stride + 1
    cols = []
    for i in range(kh):
        for j in range(kw):
            cols.append(x[:, i:i + stride * oh:stride,
                             j:j + stride * ow:stride, :])
    return jnp.stack(cols, axis=3).reshape(n, oh * ow, kh * kw * c)


# ---------------------------------------------------------------------------
# Parameter init (PyTorch layout, f32) + one-time prep for the Pallas path
# ---------------------------------------------------------------------------
def _layer_hw(h, w):
    oh1, ow1 = (h - 8) // 4 + 1, (w - 8) // 4 + 1
    oh2, ow2 = (oh1 - 4) // 2 + 1, (ow1 - 4) // 2 + 1
    oh3, ow3 = (oh2 - 3) + 1, (ow2 - 3) + 1
    return (oh1, ow1), (oh2, ow2), (oh3, ow3)


def init_params(key, input_shape, n_actions):
    c_in, h, w = input_shape
    ks = jax.random.split(key, 10)

    def _w(k, shape, fan_in):
        return jax.random.normal(k, shape, jnp.float32) / jnp.sqrt(fan_in)

    params = {}
    params["c1_w"] = _w(ks[0], (32, c_in, 8, 8), c_in * 64)
    params["c1_b"] = _w(ks[1], (32,), c_in * 64)
    params["c2_w"] = _w(ks[2], (64, 32, 4, 4), 32 * 16)
    params["c2_b"] = _w(ks[3], (64,), 32 * 16)
    params["c3_w"] = _w(ks[4], (64, 64, 3, 3), 64 * 9)
    params["c3_b"] = _w(ks[5], (64,), 64 * 9)

    (_, _), (_, _), (oh3, ow3) = _layer_hw(h, w)
    conv_out_size = 64 * oh3 * ow3

    params["fc1_w"] = _w(ks[6], (512, conv_out_size), conv_out_size)
    params["fc1_b"] = _w(ks[7], (512,), conv_out_size)
    params["fc2_w"] = _w(ks[8], (n_actions, 512), 512)
    params["fc2_b"] = _w(ks[9], (n_actions,), 512)
    return params


def _gather_mats(h_in, w_in, kh, kw, stride):
    """One-hot spatial gather matrices: (kh*kw, oh*ow, h_in*w_in) bf16."""
    oh = (h_in - kh) // stride + 1
    ow = (w_in - kw) // stride + 1
    g = np.zeros((kh * kw, oh * ow, h_in * w_in), np.float32)
    for i in range(kh):
        for j in range(kw):
            t = i * kw + j
            for r in range(oh):
                for c in range(ow):
                    g[t, r * ow + c, (r * stride + i) * w_in + (c * stride + j)] = 1.0
    return jnp.asarray(g, dtype=jnp.bfloat16)


def _prep_conv_taps(w):
    # (O, C, KH, KW) -> (KH*KW, C, O) bf16: one (C_in, C_out) matrix per tap.
    o, c, kh, kw = w.shape
    return jnp.transpose(w, (2, 3, 1, 0)).reshape(kh * kw, c, o).astype(jnp.bfloat16)


def _prep_conv1_w(w):
    # (O, C, KH, KW) -> (KH*KW*C, O) bf16, matching _im2col_nhwc feature order,
    # zero-padded so K is a multiple of 128 (lane-dense contraction).
    o, c, kh, kw = w.shape
    wp = jnp.transpose(w, (2, 3, 1, 0)).reshape(kh * kw * c, o)
    k = kh * kw * c
    kpad = ((k + 127) // 128) * 128 - k
    if kpad:
        wp = jnp.pad(wp, ((0, kpad), (0, 0)))
    return wp.astype(jnp.bfloat16)


def prepare_params(params, input_shape, n_actions):
    """One-time weight prep (reshape/transpose/pad/cast + gather matrices)."""
    c_in, h, w = input_shape
    (oh1, ow1), (oh2, ow2), (oh3, ow3) = _layer_hw(h, w)

    p = {}
    p["c1_w"] = _prep_conv1_w(params["c1_w"])
    p["c1_b"] = params["c1_b"].reshape(1, -1).astype(jnp.float32)

    p["g2"] = _gather_mats(oh1, ow1, 4, 4, 2)
    p["c2_w"] = _prep_conv_taps(params["c2_w"])
    p["c2_b"] = params["c2_b"].reshape(1, -1).astype(jnp.float32)

    p["g3"] = _gather_mats(oh2, ow2, 3, 3, 1)
    p["c3_w"] = _prep_conv_taps(params["c3_w"])
    p["c3_b"] = params["c3_b"].reshape(1, -1).astype(jnp.float32)

    # fc1: fold PyTorch's NCHW flatten order into a per-spatial-position weight
    # stack (P3, C3, 512) so the kernel never has to flatten (P3, C3) -> lanes.
    w1 = params["fc1_w"].reshape(512, 64, oh3, ow3)
    w1 = jnp.transpose(w1, (2, 3, 1, 0)).reshape(oh3 * ow3, 64, 512)
    p["fc1_w"] = w1.astype(jnp.bfloat16)
    p["fc1_b"] = params["fc1_b"].reshape(1, -1).astype(jnp.float32)

    # fc2: transpose + pad the tiny n_actions output to a lane-dense 128.
    np_out = max(128, ((n_actions + 127) // 128) * 128)
    w2 = jnp.zeros((512, np_out), jnp.float32).at[:, :n_actions].set(params["fc2_w"].T)
    b2 = jnp.zeros((1, np_out), jnp.float32).at[0, :n_actions].set(params["fc2_b"])
    p["fc2_w"] = w2.astype(jnp.bfloat16)
    p["fc2_b"] = b2
    return p


# ---------------------------------------------------------------------------
# DQNSolver forward (fused Pallas path)
# ---------------------------------------------------------------------------
@functools.partial(jax.jit, static_argnames=("n_actions",))
def dqn_forward(prepared, x, *, n_actions):
    """x: (N, C, H, W) float32 (PyTorch layout) -> (N, n_actions) float32."""
    # TODO(synk): fold the NCHW->NHWC transpose / bf16 cast / conv1 im2col into
    # the kernel (strided VMEM reads) to drop the remaining input-side HBM pass.
    x = jnp.transpose(x, (0, 2, 3, 1)).astype(jnp.bfloat16)
    patches = _im2col_nhwc(x, 8, 8, 4)                     # (N, P1, kh*kw*C)
    kpad = prepared["c1_w"].shape[0] - patches.shape[-1]
    if kpad:
        patches = jnp.pad(patches, ((0, 0), (0, 0), (0, kpad)))
    out = dqn_fused(patches, prepared)                     # (N, 1, 128)
    return out[:, 0, :n_actions]


# ---------------------------------------------------------------------------
# Pure-JAX f32 reference (PyTorch-layout params) for correctness check
# ---------------------------------------------------------------------------
def dqn_forward_ref(params, x):
    def conv(x, w, b, s):
        y = jax.lax.conv_general_dilated(
            x, w, window_strides=(s, s), padding="VALID",
            dimension_numbers=("NCHW", "OIHW", "NCHW"))
        return jax.nn.relu(y + b[None, :, None, None])

    h = conv(x, params["c1_w"], params["c1_b"], 4)
    h = conv(h, params["c2_w"], params["c2_b"], 2)
    h = conv(h, params["c3_w"], params["c3_b"], 1)
    flat = h.reshape(h.shape[0], -1)
    h = jax.nn.relu(flat @ params["fc1_w"].T + params["fc1_b"])
    return h @ params["fc2_w"].T + params["fc2_b"]


if __name__ == "__main__":
    # 36x36 is the minimum spatial size for the 8/4, 4/2, 3/1 conv stack.
    batch, c_in, hw, n_actions = 2, 4, 36, 6
    key = jax.random.PRNGKey(0)
    k_params, k_x = jax.random.split(key)

    params = init_params(k_params, (c_in, hw, hw), n_actions)
    prepared = prepare_params(params, (c_in, hw, hw), n_actions)
    x = jax.random.normal(k_x, (batch, c_in, hw, hw), jnp.float32)

    out = dqn_forward(prepared, x, n_actions=n_actions)
    out = jax.block_until_ready(out)

    ref = dqn_forward_ref(params, x)
    assert out.shape == (batch, n_actions)
    # bf16 MXU operands -> relaxed tolerance vs. the f32 reference.
    assert jnp.allclose(out, ref, atol=5e-2, rtol=5e-2), float(jnp.max(jnp.abs(out - ref)))

    print("KERNEL_OK")
</pallas_src>

<mosaic_0001>
module attributes {stable_mosaic.version = 11 : i64} {
  func.func @_dqn_fused_kernel(%arg0: i32, %arg1: memref<1x64x256xbf16, #tpu.memory_space<vmem>>, %arg2: memref<256x32xbf16, #tpu.memory_space<vmem>>, %arg3: memref<1x32xf32, #tpu.memory_space<vmem>>, %arg4: memref<16x9x64xbf16, #tpu.memory_space<vmem>>, %arg5: memref<16x32x64xbf16, #tpu.memory_space<vmem>>, %arg6: memref<1x64xf32, #tpu.memory_space<vmem>>, %arg7: memref<9x1x9xbf16, #tpu.memory_space<vmem>>, %arg8: memref<9x64x64xbf16, #tpu.memory_space<vmem>>, %arg9: memref<1x64xf32, #tpu.memory_space<vmem>>, %arg10: memref<1x64x512xbf16, #tpu.memory_space<vmem>>, %arg11: memref<1x512xf32, #tpu.memory_space<vmem>>, %arg12: memref<512x128xbf16, #tpu.memory_space<vmem>>, %arg13: memref<1x128xf32, #tpu.memory_space<vmem>>, %arg14: memref<1x1x128xf32, #tpu.memory_space<vmem>>) attributes {dimension_semantics = [#tpu.dimension_semantics<parallel>], iteration_bounds = array<i64: 2>, scalar_prefetch = 0 : i64, scratch_operands = 0 : i64, tpu.core_type = #tpu.core_type<tc>, window_params = [{transform_indices = @transform_0, window_bounds = array<i64: 1, 64, 256>}, {pipeline_mode = #tpu.pipeline_mode<synchronous>, transform_indices = @transform_1, window_bounds = array<i64: 256, 32>}, {pipeline_mode = #tpu.pipeline_mode<synchronous>, transform_indices = @transform_2, window_bounds = array<i64: 1, 32>}, {pipeline_mode = #tpu.pipeline_mode<synchronous>, transform_indices = @transform_3, window_bounds = array<i64: 16, 9, 64>}, {pipeline_mode = #tpu.pipeline_mode<synchronous>, transform_indices = @transform_4, window_bounds = array<i64: 16, 32, 64>}, {pipeline_mode = #tpu.pipeline_mode<synchronous>, transform_indices = @transform_5, window_bounds = array<i64: 1, 64>}, {pipeline_mode = #tpu.pipeline_mode<synchronous>, transform_indices = @transform_6, window_bounds = array<i64: 9, 1, 9>}, {pipeline_mode = #tpu.pipeline_mode<synchronous>, transform_indices = @transform_7, window_bounds = array<i64: 9, 64, 64>}, {pipeline_mode = #tpu.pipeline_mode<synchronous>, transform_indices = @transform_8, window_bounds = array<i64: 1, 64>}, {pipeline_mode = #tpu.pipeline_mode<synchronous>, transform_indices = @transform_9, window_bounds = array<i64: 1, 64, 512>}, {pipeline_mode = #tpu.pipeline_mode<synchronous>, transform_indices = @transform_10, window_bounds = array<i64: 1, 512>}, {pipeline_mode = #tpu.pipeline_mode<synchronous>, transform_indices = @transform_11, window_bounds = array<i64: 512, 128>}, {pipeline_mode = #tpu.pipeline_mode<synchronous>, transform_indices = @transform_12, window_bounds = array<i64: 1, 128>}, {transform_indices = @transform_13, window_bounds = array<i64: 1, 1, 128>}]} {
    %c0 = arith.constant 0 : index
    %c0_0 = arith.constant 0 : index
    %c0_1 = arith.constant 0 : index
    %0 = vector.load %arg1[%c0, %c0_0, %c0_1] : memref<1x64x256xbf16, #tpu.memory_space<vmem>>, vector<1x64x256xbf16>
    %1 = vector.shape_cast %0 : vector<1x64x256xbf16> to vector<64x256xbf16>
    %c0_2 = arith.constant 0 : index
    %c0_3 = arith.constant 0 : index
    %2 = vector.load %arg2[%c0_2, %c0_3] : memref<256x32xbf16, #tpu.memory_space<vmem>>, vector<256x32xbf16>
    %cst = arith.constant dense<0.000000e+00> : vector<64x32xf32>
    %3 = tpu.matmul %1, %2, %cst {dimension_numbers = #tpu.dot_dimension_numbers<[1], [0], [0], [1], [0, 0, 1, 1], [], []>} : vector<64x256xbf16>, vector<256x32xbf16>, vector<64x32xf32> -> vector<64x32xf32>
    %c0_4 = arith.constant 0 : index
    %c0_5 = arith.constant 0 : index
    %4 = vector.load %arg3[%c0_4, %c0_5] : memref<1x32xf32, #tpu.memory_space<vmem>>, vector<1x32xf32>
    %5 = vector.broadcast %4 : vector<1x32xf32> to vector<64x32xf32>
    %6 = arith.addf %3, %5 : vector<64x32xf32>
    %cst_6 = arith.constant 0.000000e+00 : f32
    %7 = vector.broadcast %cst_6 : f32 to vector<64x32xf32>
    %8 = arith.maximumf %6, %7 : vector<64x32xf32>
    %9 = arith.truncf %8 : vector<64x32xf32> to vector<64x32xbf16>
    %cst_7 = arith.constant 0.000000e+00 : f32
    %10 = vector.broadcast %cst_7 : f32 to vector<9x64xf32>
    %c0_8 = arith.constant 0 : index
    %c0_9 = arith.constant 0 : index
    %c0_10 = arith.constant 0 : index
    %11 = vector.load %arg4[%c0_8, %c0_9, %c0_10] : memref<16x9x64xbf16, #tpu.memory_space<vmem>>, vector<1x9x64xbf16>
    %12 = vector.shape_cast %11 : vector<1x9x64xbf16> to vector<9x64xbf16>
    %cst_11 = arith.constant dense<0.000000e+00> : vector<9x32xf32>
    %13 = tpu.matmul %12, %9, %cst_11 {dimension_numbers = #tpu.dot_dimension_numbers<[1], [0], [0], [1], [0, 0, 1, 1], [], []>} : vector<9x64xbf16>, vector<64x32xbf16>, vector<9x32xf32> -> vector<9x32xf32>
    %14 = arith.truncf %13 : vector<9x32xf32> to vector<9x32xbf16>
    %c0_12 = arith.constant 0 : index
    %c0_13 = arith.constant 0 : index
    %c0_14 = arith.constant 0 : index
    %15 = vector.load %arg5[%c0_12, %c0_13, %c0_14] : memref<16x32x64xbf16, #tpu.memory_space<vmem>>, vector<1x32x64xbf16>
    %16 = vector.shape_cast %15 : vector<1x32x64xbf16> to vector<32x64xbf16>
    %cst_15 = arith.constant dense<0.000000e+00> : vector<9x64xf32>
    %17 = tpu.matmul %14, %16, %cst_15 {dimension_numbers = #tpu.dot_dimension_numbers<[1], [0], [0], [1], [0, 0, 1, 1], [], []>} : vector<9x32xbf16>, vector<32x64xbf16>, vector<9x64xf32> -> vector<9x64xf32>
    %18 = arith.addf %10, %17 : vector<9x64xf32>
    %c1 = arith.constant 1 : index
    %c0_16 = arith.constant 0 : index
    %c0_17 = arith.constant 0 : index
    %19 = vector.load %arg4[%c1, %c0_16, %c0_17] : memref<16x9x64xbf16, #tpu.memory_space<vmem>>, vector<1x9x64xbf16>
    %20 = vector.shape_cast %19 : vector<1x9x64xbf16> to vector<9x64xbf16>
    %cst_18 = arith.constant dense<0.000000e+00> : vector<9x32xf32>
    %21 = tpu.matmul %20, %9, %cst_18 {dimension_numbers = #tpu.dot_dimension_numbers<[1], [0], [0], [1], [0, 0, 1, 1], [], []>} : vector<9x64xbf16>, vector<64x32xbf16>, vector<9x32xf32> -> vector<9x32xf32>
    %22 = arith.truncf %21 : vector<9x32xf32> to vector<9x32xbf16>
    %c1_19 = arith.constant 1 : index
    %c0_20 = arith.constant 0 : index
    %c0_21 = arith.constant 0 : index
    %23 = vector.load %arg5[%c1_19, %c0_20, %c0_21] : memref<16x32x64xbf16, #tpu.memory_space<vmem>>, vector<1x32x64xbf16>
    %24 = vector.shape_cast %23 : vector<1x32x64xbf16> to vector<32x64xbf16>
    %cst_22 = arith.constant dense<0.000000e+00> : vector<9x64xf32>
    %25 = tpu.matmul %22, %24, %cst_22 {dimension_numbers = #tpu.dot_dimension_numbers<[1], [0], [0], [1], [0, 0, 1, 1], [], []>} : vector<9x32xbf16>, vector<32x64xbf16>, vector<9x64xf32> -> vector<9x64xf32>
    %26 = arith.addf %18, %25 : vector<9x64xf32>
    %c2 = arith.constant 2 : index
    %c0_23 = arith.constant 0 : index
    %c0_24 = arith.constant 0 : index
    %27 = vector.load %arg4[%c2, %c0_23, %c0_24] : memref<16x9x64xbf16, #tpu.memory_space<vmem>>, vector<1x9x64xbf16>
    %28 = vector.shape_cast %27 : vector<1x9x64xbf16> to vector<9x64xbf16>
    %cst_25 = arith.constant dense<0.000000e+00> : vector<9x32xf32>
    %29 = tpu.matmul %28, %9, %cst_25 {dimension_numbers = #tpu.dot_dimension_numbers<[1], [0], [0], [1], [0, 0, 1, 1], [], []>} : vector<9x64xbf16>, vector<64x32xbf16>, vector<9x32xf32> -> vector<9x32xf32>
    %30 = arith.truncf %29 : vector<9x32xf32> to vector<9x32xbf16>
    %c2_26 = arith.constant 2 : index
    %c0_27 = arith.constant 0 : index
    %c0_28 = arith.constant 0 : index
    %31 = vector.load %arg5[%c2_26, %c0_27, %c0_28] : memref<16x32x64xbf16, #tpu.memory_space<vmem>>, vector<1x32x64xbf16>
    %32 = vector.shape_cast %31 : vector<1x32x64xbf16> to vector<32x64xbf16>
    %cst_29 = arith.constant dense<0.000000e+00> : vector<9x64xf32>
    %33 = tpu.matmul %30, %32, %cst_29 {dimension_numbers = #tpu.dot_dimension_numbers<[1], [0], [0], [1], [0, 0, 1, 1], [], []>} : vector<9x32xbf16>, vector<32x64xbf16>, vector<9x64xf32> -> vector<9x64xf32>
    %34 = arith.addf %26, %33 : vector<9x64xf32>
    %c3 = arith.constant 3 : index
    %c0_30 = arith.constant 0 : index
    %c0_31 = arith.constant 0 : index
    %35 = vector.load %arg4[%c3, %c0_30, %c0_31] : memref<16x9x64xbf16, #tpu.memory_space<vmem>>, vector<1x9x64xbf16>
    %36 = vector.shape_cast %35 : vector<1x9x64xbf16> to vector<9x64xbf16>
    %cst_32 = arith.constant dense<0.000000e+00> : vector<9x32xf32>
    %37 = tpu.matmul %36, %9, %cst_32 {dimension_numbers = #tpu.dot_dimension_numbers<[1], [0], [0], [1], [0, 0, 1, 1], [], []>} : vector<9x64xbf16>, vector<64x32xbf16>, vector<9x32xf32> -> vector<9x32xf32>
    %38 = arith.truncf %37 : vector<9x32xf32> to vector<9x32xbf16>
    %c3_33 = arith.constant 3 : index
    %c0_34 = arith.constant 0 : index
    %c0_35 = arith.constant 0 : index
    %39 = vector.load %arg5[%c3_33, %c0_34, %c0_35] : memref<16x32x64xbf16, #tpu.memory_space<vmem>>, vector<1x32x64xbf16>
    %40 = vector.shape_cast %39 : vector<1x32x64xbf16> to vector<32x64xbf16>
    %cst_36 = arith.constant dense<0.000000e+00> : vector<9x64xf32>
    %41 = tpu.matmul %38, %40, %cst_36 {dimension_numbers = #tpu.dot_dimension_numbers<[1], [0], [0], [1], [0, 0, 1, 1], [], []>} : vector<9x32xbf16>, vector<32x64xbf16>, vector<9x64xf32> -> vector<9x64xf32>
    %42 = arith.addf %34, %41 : vector<9x64xf32>
    %c4 = arith.constant 4 : index
    %c0_37 = arith.constant 0 : index
    %c0_38 = arith.constant 0 : index
    %43 = vector.load %arg4[%c4, %c0_37, %c0_38] : memref<16x9x64xbf16, #tpu.memory_space<vmem>>, vector<1x9x64xbf16>
    %44 = vector.shape_cast %43 : vector<1x9x64xbf16> to vector<9x64xbf16>
    %cst_39 = arith.constant dense<0.000000e+00> : vector<9x32xf32>
    %45 = tpu.matmul %44, %9, %cst_39 {dimension_numbers = #tpu.dot_dimension_numbers<[1], [0], [0], [1], [0, 0, 1, 1], [], []>} : vector<9x64xbf16>, vector<64x32xbf16>, vector<9x32xf32> -> vector<9x32xf32>
    %46 = arith.truncf %45 : vector<9x32xf32> to vector<9x32xbf16>
    %c4_40 = arith.constant 4 : index
    %c0_41 = arith.constant 0 : index
    %c0_42 = arith.constant 0 : index
    %47 = vector.load %arg5[%c4_40, %c0_41, %c0_42] : memref<16x32x64xbf16, #tpu.memory_space<vmem>>, vector<1x32x64xbf16>
    %48 = vector.shape_cast %47 : vector<1x32x64xbf16> to vector<32x64xbf16>
    %cst_43 = arith.constant dense<0.000000e+00> : vector<9x64xf32>
    %49 = tpu.matmul %46, %48, %cst_43 {dimension_numbers = #tpu.dot_dimension_numbers<[1], [0], [0], [1], [0, 0, 1, 1], [], []>} : vector<9x32xbf16>, vector<32x64xbf16>, vector<9x64xf32> -> vector<9x64xf32>
    %50 = arith.addf %42, %49 : vector<9x64xf32>
    %c5 = arith.constant 5 : index
    %c0_44 = arith.constant 0 : index
    %c0_45 = arith.constant 0 : index
    %51 = vector.load %arg4[%c5, %c0_44, %c0_45] : memref<16x9x64xbf16, #tpu.memory_space<vmem>>, vector<1x9x64xbf16>
    %52 = vector.shape_cast %51 : vector<1x9x64xbf16> to vector<9x64xbf16>
    %cst_46 = arith.constant dense<0.000000e+00> : vector<9x32xf32>
    %53 = tpu.matmul %52, %9, %cst_46 {dimension_numbers = #tpu.dot_dimension_numbers<[1], [0], [0], [1], [0, 0, 1, 1], [], []>} : vector<9x64xbf16>, vector<64x32xbf16>, vector<9x32xf32> -> vector<9x32xf32>
    %54 = arith.truncf %53 : vector<9x32xf32> to vector<9x32xbf16>
    %c5_47 = arith.constant 5 : index
    %c0_48 = arith.constant 0 : index
    %c0_49 = arith.constant 0 : index
    %55 = vector.load %arg5[%c5_47, %c0_48, %c0_49] : memref<16x32x64xbf16, #tpu.memory_space<vmem>>, vector<1x32x64xbf16>
    %56 = vector.shape_cast %55 : vector<1x32x64xbf16> to vector<32x64xbf16>
    %cst_50 = arith.constant dense<0.000000e+00> : vector<9x64xf32>
    %57 = tpu.matmul %54, %56, %cst_50 {dimension_numbers = #tpu.dot_dimension_numbers<[1], [0], [0], [1], [0, 0, 1, 1], [], []>} : vector<9x32xbf16>, vector<32x64xbf16>, vector<9x64xf32> -> vector<9x64xf32>
    %58 = arith.addf %50, %57 : vector<9x64xf32>
    %c6 = arith.constant 6 : index
    %c0_51 = arith.constant 0 : index
    %c0_52 = arith.constant 0 : index
    %59 = vector.load %arg4[%c6, %c0_51, %c0_52] : memref<16x9x64xbf16, #tpu.memory_space<vmem>>, vector<1x9x64xbf16>
    %60 = vector.shape_cast %59 : vector<1x9x64xbf16> to vector<9x64xbf16>
    %cst_53 = arith.constant dense<0.000000e+00> : vector<9x32xf32>
    %61 = tpu.matmul %60, %9, %cst_53 {dimension_numbers = #tpu.dot_dimension_numbers<[1], [0], [0], [1], [0, 0, 1, 1], [], []>} : vector<9x64xbf16>, vector<64x32xbf16>, vector<9x32xf32> -> vector<9x32xf32>
    %62 = arith.truncf %61 : vector<9x32xf32> to vector<9x32xbf16>
    %c6_54 = arith.constant 6 : index
    %c0_55 = arith.constant 0 : index
    %c0_56 = arith.constant 0 : index
    %63 = vector.load %arg5[%c6_54, %c0_55, %c0_56] : memref<16x32x64xbf16, #tpu.memory_space<vmem>>, vector<1x32x64xbf16>
    %64 = vector.shape_cast %63 : vector<1x32x64xbf16> to vector<32x64xbf16>
    %cst_57 = arith.constant dense<0.000000e+00> : vector<9x64xf32>
    %65 = tpu.matmul %62, %64, %cst_57 {dimension_numbers = #tpu.dot_dimension_numbers<[1], [0], [0], [1], [0, 0, 1, 1], [], []>} : vector<9x32xbf16>, vector<32x64xbf16>, vector<9x64xf32> -> vector<9x64xf32>
    %66 = arith.addf %58, %65 : vector<9x64xf32>
    %c7 = arith.constant 7 : index
    %c0_58 = arith.constant 0 : index
    %c0_59 = arith.constant 0 : index
    %67 = vector.load %arg4[%c7, %c0_58, %c0_59] : memref<16x9x64xbf16, #tpu.memory_space<vmem>>, vector<1x9x64xbf16>
    %68 = vector.shape_cast %67 : vector<1x9x64xbf16> to vector<9x64xbf16>
    %cst_60 = arith.constant dense<0.000000e+00> : vector<9x32xf32>
    %69 = tpu.matmul %68, %9, %cst_60 {dimension_numbers = #tpu.dot_dimension_numbers<[1], [0], [0], [1], [0, 0, 1, 1], [], []>} : vector<9x64xbf16>, vector<64x32xbf16>, vector<9x32xf32> -> vector<9x32xf32>
    %70 = arith.truncf %69 : vector<9x32xf32> to vector<9x32xbf16>
    %c7_61 = arith.constant 7 : index
    %c0_62 = arith.constant 0 : index
    %c0_63 = arith.constant 0 : index
    %71 = vector.load %arg5[%c7_61, %c0_62, %c0_63] : memref<16x32x64xbf16, #tpu.memory_space<vmem>>, vector<1x32x64xbf16>
    %72 = vector.shape_cast %71 : vector<1x32x64xbf16> to vector<32x64xbf16>
    %cst_64 = arith.constant dense<0.000000e+00> : vector<9x64xf32>
    %73 = tpu.matmul %70, %72, %cst_64 {dimension_numbers = #tpu.dot_dimension_numbers<[1], [0], [0], [1], [0, 0, 1, 1], [], []>} : vector<9x32xbf16>, vector<32x64xbf16>, vector<9x64xf32> -> vector<9x64xf32>
    %74 = arith.addf %66, %73 : vector<9x64xf32>
    %c8 = arith.constant 8 : index
    %c0_65 = arith.constant 0 : index
    %c0_66 = arith.constant 0 : index
    %75 = vector.load %arg4[%c8, %c0_65, %c0_66] : memref<16x9x64xbf16, #tpu.memory_space<vmem>>, vector<1x9x64xbf16>
    %76 = vector.shape_cast %75 : vector<1x9x64xbf16> to vector<9x64xbf16>
    %cst_67 = arith.constant dense<0.000000e+00> : vector<9x32xf32>
    %77 = tpu.matmul %76, %9, %cst_67 {dimension_numbers = #tpu.dot_dimension_numbers<[1], [0], [0], [1], [0, 0, 1, 1], [], []>} : vector<9x64xbf16>, vector<64x32xbf16>, vector<9x32xf32> -> vector<9x32xf32>
    %78 = arith.truncf %77 : vector<9x32xf32> to vector<9x32xbf16>
    %c8_68 = arith.constant 8 : index
    %c0_69 = arith.constant 0 : index
    %c0_70 = arith.constant 0 : index
    %79 = vector.load %arg5[%c8_68, %c0_69, %c0_70] : memref<16x32x64xbf16, #tpu.memory_space<vmem>>, vector<1x32x64xbf16>
    %80 = vector.shape_cast %79 : vector<1x32x64xbf16> to vector<32x64xbf16>
    %cst_71 = arith.constant dense<0.000000e+00> : vector<9x64xf32>
    %81 = tpu.matmul %78, %80, %cst_71 {dimension_numbers = #tpu.dot_dimension_numbers<[1], [0], [0], [1], [0, 0, 1, 1], [], []>} : vector<9x32xbf16>, vector<32x64xbf16>, vector<9x64xf32> -> vector<9x64xf32>
    %82 = arith.addf %74, %81 : vector<9x64xf32>
    %c9 = arith.constant 9 : index
    %c0_72 = arith.constant 0 : index
    %c0_73 = arith.constant 0 : index
    %83 = vector.load %arg4[%c9, %c0_72, %c0_73] : memref<16x9x64xbf16, #tpu.memory_space<vmem>>, vector<1x9x64xbf16>
    %84 = vector.shape_cast %83 : vector<1x9x64xbf16> to vector<9x64xbf16>
    %cst_74 = arith.constant dense<0.000000e+00> : vector<9x32xf32>
    %85 = tpu.matmul %84, %9, %cst_74 {dimension_numbers = #tpu.dot_dimension_numbers<[1], [0], [0], [1], [0, 0, 1, 1], [], []>} : vector<9x64xbf16>, vector<64x32xbf16>, vector<9x32xf32> -> vector<9x32xf32>
    %86 = arith.truncf %85 : vector<9x32xf32> to vector<9x32xbf16>
    %c9_75 = arith.constant 9 : index
    %c0_76 = arith.constant 0 : index
    %c0_77 = arith.constant 0 : index
    %87 = vector.load %arg5[%c9_75, %c0_76, %c0_77] : memref<16x32x64xbf16, #tpu.memory_space<vmem>>, vector<1x32x64xbf16>
    %88 = vector.shape_cast %87 : vector<1x32x64xbf16> to vector<32x64xbf16>
    %cst_78 = arith.constant dense<0.000000e+00> : vector<9x64xf32>
    %89 = tpu.matmul %86, %88, %cst_78 {dimension_numbers = #tpu.dot_dimension_numbers<[1], [0], [0], [1], [0, 0, 1, 1], [], []>} : vector<9x32xbf16>, vector<32x64xbf16>, vector<9x64xf32> -> vector<9x64xf32>
    %90 = arith.addf %82, %89 : vector<9x64xf32>
    %c10 = arith.constant 10 : index
    %c0_79 = arith.constant 0 : index
    %c0_80 = arith.constant 0 : index
    %91 = vector.load %arg4[%c10, %c0_79, %c0_80] : memref<16x9x64xbf16, #tpu.memory_space<vmem>>, vector<1x9x64xbf16>
    %92 = vector.shape_cast %91 : vector<1x9x64xbf16> to vector<9x64xbf16>
    %cst_81 = arith.constant dense<0.000000e+00> : vector<9x32xf32>
    %93 = tpu.matmul %92, %9, %cst_81 {dimension_numbers = #tpu.dot_dimension_numbers<[1], [0], [0], [1], [0, 0, 1, 1], [], []>} : vector<9x64xbf16>, vector<64x32xbf16>, vector<9x32xf32> -> vector<9x32xf32>
    %94 = arith.truncf %93 : vector<9x32xf32> to vector<9x32xbf16>
    %c10_82 = arith.constant 10 : index
    %c0_83 = arith.constant 0 : index
    %c0_84 = arith.constant 0 : index
    %95 = vector.load %arg5[%c10_82, %c0_83, %c0_84] : memref<16x32x64xbf16, #tpu.memory_space<vmem>>, vector<1x32x64xbf16>
    %96 = vector.shape_cast %95 : vector<1x32x64xbf16> to vector<32x64xbf16>
    %cst_85 = arith.constant dense<0.000000e+00> : vector<9x64xf32>
    %97 = tpu.matmul %94, %96, %cst_85 {dimension_numbers = #tpu.dot_dimension_numbers<[1], [0], [0], [1], [0, 0, 1, 1], [], []>} : vector<9x32xbf16>, vector<32x64xbf16>, vector<9x64xf32> -> vector<9x64xf32>
    %98 = arith.addf %90, %97 : vector<9x64xf32>
    %c11 = arith.constant 11 : index
    %c0_86 = arith.constant 0 : index
    %c0_87 = arith.constant 0 : index
    %99 = vector.load %arg4[%c11, %c0_86, %c0_87] : memref<16x9x64xbf16, #tpu.memory_space<vmem>>, vector<1x9x64xbf16>
    %100 = vector.shape_cast %99 : vector<1x9x64xbf16> to vector<9x64xbf16>
    %cst_88 = arith.constant dense<0.000000e+00> : vector<9x32xf32>
    %101 = tpu.matmul %100, %9, %cst_88 {dimension_numbers = #tpu.dot_dimension_numbers<[1], [0], [0], [1], [0, 0, 1, 1], [], []>} : vector<9x64xbf16>, vector<64x32xbf16>, vector<9x32xf32> -> vector<9x32xf32>
    %102 = arith.truncf %101 : vector<9x32xf32> to vector<9x32xbf16>
    %c11_89 = arith.constant 11 : index
    %c0_90 = arith.constant 0 : index
    %c0_91 = arith.constant 0 : index
    %103 = vector.load %arg5[%c11_89, %c0_90, %c0_91] : memref<16x32x64xbf16, #tpu.memory_space<vmem>>, vector<1x32x64xbf16>
    %104 = vector.shape_cast %103 : vector<1x32x64xbf16> to vector<32x64xbf16>
    %cst_92 = arith.constant dense<0.000000e+00> : vector<9x64xf32>
    %105 = tpu.matmul %102, %104, %cst_92 {dimension_numbers = #tpu.dot_dimension_numbers<[1], [0], [0], [1], [0, 0, 1, 1], [], []>} : vector<9x32xbf16>, vector<32x64xbf16>, vector<9x64xf32> -> vector<9x64xf32>
    %106 = arith.addf %98, %105 : vector<9x64xf32>
    %c12 = arith.constant 12 : index
    %c0_93 = arith.constant 0 : index
    %c0_94 = arith.constant 0 : index
    %107 = vector.load %arg4[%c12, %c0_93, %c0_94] : memref<16x9x64xbf16, #tpu.memory_space<vmem>>, vector<1x9x64xbf16>
    %108 = vector.shape_cast %107 : vector<1x9x64xbf16> to vector<9x64xbf16>
    %cst_95 = arith.constant dense<0.000000e+00> : vector<9x32xf32>
    %109 = tpu.matmul %108, %9, %cst_95 {dimension_numbers = #tpu.dot_dimension_numbers<[1], [0], [0], [1], [0, 0, 1, 1], [], []>} : vector<9x64xbf16>, vector<64x32xbf16>, vector<9x32xf32> -> vector<9x32xf32>
    %110 = arith.truncf %109 : vector<9x32xf32> to vector<9x32xbf16>
    %c12_96 = arith.constant 12 : index
    %c0_97 = arith.constant 0 : index
    %c0_98 = arith.constant 0 : index
    %111 = vector.load %arg5[%c12_96, %c0_97, %c0_98] : memref<16x32x64xbf16, #tpu.memory_space<vmem>>, vector<1x32x64xbf16>
    %112 = vector.shape_cast %111 : vector<1x32x64xbf16> to vector<32x64xbf16>
    %cst_99 = arith.constant dense<0.000000e+00> : vector<9x64xf32>
    %113 = tpu.matmul %110, %112, %cst_99 {dimension_numbers = #tpu.dot_dimension_numbers<[1], [0], [0], [1], [0, 0, 1, 1], [], []>} : vector<9x32xbf16>, vector<32x64xbf16>, vector<9x64xf32> -> vector<9x64xf32>
    %114 = arith.addf %106, %113 : vector<9x64xf32>
    %c13 = arith.constant 13 : index
    %c0_100 = arith.constant 0 : index
    %c0_101 = arith.constant 0 : index
    %115 = vector.load %arg4[%c13, %c0_100, %c0_101] : memref<16x9x64xbf16, #tpu.memory_space<vmem>>, vector<1x9x64xbf16>
    %116 = vector.shape_cast %115 : vector<1x9x64xbf16> to vector<9x64xbf16>
    %cst_102 = arith.constant dense<0.000000e+00> : vector<9x32xf32>
    %117 = tpu.matmul %116, %9, %cst_102 {dimension_numbers = #tpu.dot_dimension_numbers<[1], [0], [0], [1], [0, 0, 1, 1], [], []>} : vector<9x64xbf16>, vector<64x32xbf16>, vector<9x32xf32> -> vector<9x32xf32>
    %118 = arith.truncf %117 : vector<9x32xf32> to vector<9x32xbf16>
    %c13_103 = arith.constant 13 : index
    %c0_104 = arith.constant 0 : index
    %c0_105 = arith.constant 0 : index
    %119 = vector.load %arg5[%c13_103, %c0_104, %c0_105] : memref<16x32x64xbf16, #tpu.memory_space<vmem>>, vector<1x32x64xbf16>
    %120 = vector.shape_cast %119 : vector<1x32x64xbf16> to vector<32x64xbf16>
    %cst_106 = arith.constant dense<0.000000e+00> : vector<9x64xf32>
    %121 = tpu.matmul %118, %120, %cst_106 {dimension_numbers = #tpu.dot_dimension_numbers<[1], [0], [0], [1], [0, 0, 1, 1], [], []>} : vector<9x32xbf16>, vector<32x64xbf16>, vector<9x64xf32> -> vector<9x64xf32>
    %122 = arith.addf %114, %121 : vector<9x64xf32>
    %c14 = arith.constant 14 : index
    %c0_107 = arith.constant 0 : index
    %c0_108 = arith.constant 0 : index
    %123 = vector.load %arg4[%c14, %c0_107, %c0_108] : memref<16x9x64xbf16, #tpu.memory_space<vmem>>, vector<1x9x64xbf16>
    %124 = vector.shape_cast %123 : vector<1x9x64xbf16> to vector<9x64xbf16>
    %cst_109 = arith.constant dense<0.000000e+00> : vector<9x32xf32>
    %125 = tpu.matmul %124, %9, %cst_109 {dimension_numbers = #tpu.dot_dimension_numbers<[1], [0], [0], [1], [0, 0, 1, 1], [], []>} : vector<9x64xbf16>, vector<64x32xbf16>, vector<9x32xf32> -> vector<9x32xf32>
    %126 = arith.truncf %125 : vector<9x32xf32> to vector<9x32xbf16>
    %c14_110 = arith.constant 14 : index
    %c0_111 = arith.constant 0 : index
    %c0_112 = arith.constant 0 : index
    %127 = vector.load %arg5[%c14_110, %c0_111, %c0_112] : memref<16x32x64xbf16, #tpu.memory_space<vmem>>, vector<1x32x64xbf16>
    %128 = vector.shape_cast %127 : vector<1x32x64xbf16> to vector<32x64xbf16>
    %cst_113 = arith.constant dense<0.000000e+00> : vector<9x64xf32>
    %129 = tpu.matmul %126, %128, %cst_113 {dimension_numbers = #tpu.dot_dimension_numbers<[1], [0], [0], [1], [0, 0, 1, 1], [], []>} : vector<9x32xbf16>, vector<32x64xbf16>, vector<9x64xf32> -> vector<9x64xf32>
    %130 = arith.addf %122, %129 : vector<9x64xf32>
    %c15 = arith.constant 15 : index
    %c0_114 = arith.constant 0 : index
    %c0_115 = arith.constant 0 : index
    %131 = vector.load %arg4[%c15, %c0_114, %c0_115] : memref<16x9x64xbf16, #tpu.memory_space<vmem>>, vector<1x9x64xbf16>
    %132 = vector.shape_cast %131 : vector<1x9x64xbf16> to vector<9x64xbf16>
    %cst_116 = arith.constant dense<0.000000e+00> : vector<9x32xf32>
    %133 = tpu.matmul %132, %9, %cst_116 {dimension_numbers = #tpu.dot_dimension_numbers<[1], [0], [0], [1], [0, 0, 1, 1], [], []>} : vector<9x64xbf16>, vector<64x32xbf16>, vector<9x32xf32> -> vector<9x32xf32>
    %134 = arith.truncf %133 : vector<9x32xf32> to vector<9x32xbf16>
    %c15_117 = arith.constant 15 : index
    %c0_118 = arith.constant 0 : index
    %c0_119 = arith.constant 0 : index
    %135 = vector.load %arg5[%c15_117, %c0_118, %c0_119] : memref<16x32x64xbf16, #tpu.memory_space<vmem>>, vector<1x32x64xbf16>
    %136 = vector.shape_cast %135 : vector<1x32x64xbf16> to vector<32x64xbf16>
    %cst_120 = arith.constant dense<0.000000e+00> : vector<9x64xf32>
    %137 = tpu.matmul %134, %136, %cst_120 {dimension_numbers = #tpu.dot_dimension_numbers<[1], [0], [0], [1], [0, 0, 1, 1], [], []>} : vector<9x32xbf16>, vector<32x64xbf16>, vector<9x64xf32> -> vector<9x64xf32>
    %138 = arith.addf %130, %137 : vector<9x64xf32>
    %c0_121 = arith.constant 0 : index
    %c0_122 = arith.constant 0 : index
    %139 = vector.load %arg6[%c0_121, %c0_122] : memref<1x64xf32, #tpu.memory_space<vmem>>, vector<1x64xf32>
    %140 = vector.broadcast %139 : vector<1x64xf32> to vector<9x64xf32>
    %141 = arith.addf %138, %140 : vector<9x64xf32>
    %cst_123 = arith.constant 0.000000e+00 : f32
    %142 = vector.broadcast %cst_123 : f32 to vector<9x64xf32>
    %143 = arith.maximumf %141, %142 : vector<9x64xf32>
    %144 = arith.truncf %143 : vector<9x64xf32> to vector<9x64xbf16>
    %cst_124 = arith.constant 0.000000e+00 : f32
    %145 = vector.broadcast %cst_124 : f32 to vector<1x64xf32>
    %c0_125 = arith.constant 0 : index
    %c0_126 = arith.constant 0 : index
    %c0_127 = arith.constant 0 : index
    %146 = vector.load %arg7[%c0_125, %c0_126, %c0_127] : memref<9x1x9xbf16, #tpu.memory_space<vmem>>, vector<1x1x9xbf16>
    %147 = vector.shape_cast %146 : vector<1x1x9xbf16> to vector<1x9xbf16>
    %cst_128 = arith.constant dense<0.000000e+00> : vector<1x64xf32>
    %148 = tpu.matmul %147, %144, %cst_128 {dimension_numbers = #tpu.dot_dimension_numbers<[1], [0], [0], [1], [0, 0, 1, 1], [], []>} : vector<1x9xbf16>, vector<9x64xbf16>, vector<1x64xf32> -> vector<1x64xf32>
    %149 = arith.truncf %148 : vector<1x64xf32> to vector<1x64xbf16>
    %c0_129 = arith.constant 0 : index
    %c0_130 = arith.constant 0 : index
    %c0_131 = arith.constant 0 : index
    %150 = vector.load %arg8[%c0_129, %c0_130, %c0_131] : memref<9x64x64xbf16, #tpu.memory_space<vmem>>, vector<1x64x64xbf16>
    %151 = vector.shape_cast %150 : vector<1x64x64xbf16> to vector<64x64xbf16>
    %cst_132 = arith.constant dense<0.000000e+00> : vector<1x64xf32>
    %152 = tpu.matmul %149, %151, %cst_132 {dimension_numbers = #tpu.dot_dimension_numbers<[1], [0], [0], [1], [0, 0, 1, 1], [], []>} : vector<1x64xbf16>, vector<64x64xbf16>, vector<1x64xf32> -> vector<1x64xf32>
    %153 = arith.addf %145, %152 : vector<1x64xf32>
    %c1_133 = arith.constant 1 : index
    %c0_134 = arith.constant 0 : index
    %c0_135 = arith.constant 0 : index
    %154 = vector.load %arg7[%c1_133, %c0_134, %c0_135] : memref<9x1x9xbf16, #tpu.memory_space<vmem>>, vector<1x1x9xbf16>
    %155 = vector.shape_cast %154 : vector<1x1x9xbf16> to vector<1x9xbf16>
    %cst_136 = arith.constant dense<0.000000e+00> : vector<1x64xf32>
    %156 = tpu.matmul %155, %144, %cst_136 {dimension_numbers = #tpu.dot_dimension_numbers<[1], [0], [0], [1], [0, 0, 1, 1], [], []>} : vector<1x9xbf16>, vector<9x64xbf16>, vector<1x64xf32> -> vector<1x64xf32>
    %157 = arith.truncf %156 : vector<1x64xf32> to vector<1x64xbf16>
    %c1_137 = arith.constant 1 : index
    %c0_138 = arith.constant 0 : index
    %c0_139 = arith.constant 0 : index
    %158 = vector.load %arg8[%c1_137, %c0_138, %c0_139] : memref<9x64x64xbf16, #tpu.memory_space<vmem>>, vector<1x64x64xbf16>
    %159 = vector.shape_cast %158 : vector<1x64x64xbf16> to vector<64x64xbf16>
    %cst_140 = arith.constant dense<0.000000e+00> : vector<1x64xf32>
    %160 = tpu.matmul %157, %159, %cst_140 {dimension_numbers = #tpu.dot_dimension_numbers<[1], [0], [0], [1], [0, 0, 1, 1], [], []>} : vector<1x64xbf16>, vector<64x64xbf16>, vector<1x64xf32> -> vector<1x64xf32>
    %161 = arith.addf %153, %160 : vector<1x64xf32>
    %c2_141 = arith.constant 2 : index
    %c0_142 = arith.constant 0 : index
    %c0_143 = arith.constant 0 : index
    %162 = vector.load %arg7[%c2_141, %c0_142, %c0_143] : memref<9x1x9xbf16, #tpu.memory_space<vmem>>, vector<1x1x9xbf16>
    %163 = vector.shape_cast %162 : vector<1x1x9xbf16> to vector<1x9xbf16>
    %cst_144 = arith.constant dense<0.000000e+00> : vector<1x64xf32>
    %164 = tpu.matmul %163, %144, %cst_144 {dimension_numbers = #tpu.dot_dimension_numbers<[1], [0], [0], [1], [0, 0, 1, 1], [], []>} : vector<1x9xbf16>, vector<9x64xbf16>, vector<1x64xf32> -> vector<1x64xf32>
    %165 = arith.truncf %164 : vector<1x64xf32> to vector<1x64xbf16>
    %c2_145 = arith.constant 2 : index
    %c0_146 = arith.constant 0 : index
    %c0_147 = arith.constant 0 : index
    %166 = vector.load %arg8[%c2_145, %c0_146, %c0_147] : memref<9x64x64xbf16, #tpu.memory_space<vmem>>, vector<1x64x64xbf16>
    %167 = vector.shape_cast %166 : vector<1x64x64xbf16> to vector<64x64xbf16>
    %cst_148 = arith.constant dense<0.000000e+00> : vector<1x64xf32>
    %168 = tpu.matmul %165, %167, %cst_148 {dimension_numbers = #tpu.dot_dimension_numbers<[1], [0], [0], [1], [0, 0, 1, 1], [], []>} : vector<1x64xbf16>, vector<64x64xbf16>, vector<1x64xf32> -> vector<1x64xf32>
    %169 = arith.addf %161, %168 : vector<1x64xf32>
    %c3_149 = arith.constant 3 : index
    %c0_150 = arith.constant 0 : index
    %c0_151 = arith.constant 0 : index
    %170 = vector.load %arg7[%c3_149, %c0_150, %c0_151] : memref<9x1x9xbf16, #tpu.memory_space<vmem>>, vector<1x1x9xbf16>
    %171 = vector.shape_cast %170 : vector<1x1x9xbf16> to vector<1x9xbf16>
    %cst_152 = arith.constant dense<0.000000e+00> : vector<1x64xf32>
    %172 = tpu.matmul %171, %144, %cst_152 {dimension_numbers = #tpu.dot_dimension_numbers<[1], [0], [0], [1], [0, 0, 1, 1], [], []>} : vector<1x9xbf16>, vector<9x64xbf16>, vector<1x64xf32> -> vector<1x64xf32>
    %173 = arith.truncf %172 : vector<1x64xf32> to vector<1x64xbf16>
    %c3_153 = arith.constant 3 : index
    %c0_154 = arith.constant 0 : index
    %c0_155 = arith.constant 0 : index
    %174 = vector.load %arg8[%c3_153, %c0_154, %c0_155] : memref<9x64x64xbf16, #tpu.memory_space<vmem>>, vector<1x64x64xbf16>
    %175 = vector.shape_cast %174 : vector<1x64x64xbf16> to vector<64x64xbf16>
    %cst_156 = arith.constant dense<0.000000e+00> : vector<1x64xf32>
    %176 = tpu.matmul %173, %175, %cst_156 {dimension_numbers = #tpu.dot_dimension_numbers<[1], [0], [0], [1], [0, 0, 1, 1], [], []>} : vector<1x64xbf16>, vector<64x64xbf16>, vector<1x64xf32> -> vector<1x64xf32>
    %177 = arith.addf %169, %176 : vector<1x64xf32>
    %c4_157 = arith.constant 4 : index
    %c0_158 = arith.constant 0 : index
    %c0_159 = arith.constant 0 : index
    %178 = vector.load %arg7[%c4_157, %c0_158, %c0_159] : memref<9x1x9xbf16, #tpu.memory_space<vmem>>, vector<1x1x9xbf16>
    %179 = vector.shape_cast %178 : vector<1x1x9xbf16> to vector<1x9xbf16>
    %cst_160 = arith.constant dense<0.000000e+00> : vector<1x64xf32>
    %180 = tpu.matmul %179, %144, %cst_160 {dimension_numbers = #tpu.dot_dimension_numbers<[1], [0], [0], [1], [0, 0, 1, 1], [], []>} : vector<1x9xbf16>, vector<9x64xbf16>, vector<1x64xf32> -> vector<1x64xf32>
    %181 = arith.truncf %180 : vector<1x64xf32> to vector<1x64xbf16>
    %c4_161 = arith.constant 4 : index
    %c0_162 = arith.constant 0 : index
    %c0_163 = arith.constant 0 : index
    %182 = vector.load %arg8[%c4_161, %c0_162, %c0_163] : memref<9x64x64xbf16, #tpu.memory_space<vmem>>, vector<1x64x64xbf16>
    %183 = vector.shape_cast %182 : vector<1x64x64xbf16> to vector<64x64xbf16>
    %cst_164 = arith.constant dense<0.000000e+00> : vector<1x64xf32>
    %184 = tpu.matmul %181, %183, %cst_164 {dimension_numbers = #tpu.dot_dimension_numbers<[1], [0], [0], [1], [0, 0, 1, 1], [], []>} : vector<1x64xbf16>, vector<64x64xbf16>, vector<1x64xf32> -> vector<1x64xf32>
    %185 = arith.addf %177, %184 : vector<1x64xf32>
    %c5_165 = arith.constant 5 : index
    %c0_166 = arith.constant 0 : index
    %c0_167 = arith.constant 0 : index
    %186 = vector.load %arg7[%c5_165, %c0_166, %c0_167] : memref<9x1x9xbf16, #tpu.memory_space<vmem>>, vector<1x1x9xbf16>
    %187 = vector.shape_cast %186 : vector<1x1x9xbf16> to vector<1x9xbf16>
    %cst_168 = arith.constant dense<0.000000e+00> : vector<1x64xf32>
    %188 = tpu.matmul %187, %144, %cst_168 {dimension_numbers = #tpu.dot_dimension_numbers<[1], [0], [0], [1], [0, 0, 1, 1], [], []>} : vector<1x9xbf16>, vector<9x64xbf16>, vector<1x64xf32> -> vector<1x64xf32>
    %189 = arith.truncf %188 : vector<1x64xf32> to vector<1x64xbf16>
    %c5_169 = arith.constant 5 : index
    %c0_170 = arith.constant 0 : index
    %c0_171 = arith.constant 0 : index
    %190 = vector.load %arg8[%c5_169, %c0_170, %c0_171] : memref<9x64x64xbf16, #tpu.memory_space<vmem>>, vector<1x64x64xbf16>
    %191 = vector.shape_cast %190 : vector<1x64x64xbf16> to vector<64x64xbf16>
    %cst_172 = arith.constant dense<0.000000e+00> : vector<1x64xf32>
    %192 = tpu.matmul %189, %191, %cst_172 {dimension_numbers = #tpu.dot_dimension_numbers<[1], [0], [0], [1], [0, 0, 1, 1], [], []>} : vector<1x64xbf16>, vector<64x64xbf16>, vector<1x64xf32> -> vector<1x64xf32>
    %193 = arith.addf %185, %192 : vector<1x64xf32>
    %c6_173 = arith.constant 6 : index
    %c0_174 = arith.constant 0 : index
    %c0_175 = arith.constant 0 : index
    %194 = vector.load %arg7[%c6_173, %c0_174, %c0_175] : memref<9x1x9xbf16, #tpu.memory_space<vmem>>, vector<1x1x9xbf16>
    %195 = vector.shape_cast %194 : vector<1x1x9xbf16> to vector<1x9xbf16>
    %cst_176 = arith.constant dense<0.000000e+00> : vector<1x64xf32>
    %196 = tpu.matmul %195, %144, %cst_176 {dimension_numbers = #tpu.dot_dimension_numbers<[1], [0], [0], [1], [0, 0, 1, 1], [], []>} : vector<1x9xbf16>, vector<9x64xbf16>, vector<1x64xf32> -> vector<1x64xf32>
    %197 = arith.truncf %196 : vector<1x64xf32> to vector<1x64xbf16>
    %c6_177 = arith.constant 6 : index
    %c0_178 = arith.constant 0 : index
    %c0_179 = arith.constant 0 : index
    %198 = vector.load %arg8[%c6_177, %c0_178, %c0_179] : memref<9x64x64xbf16, #tpu.memory_space<vmem>>, vector<1x64x64xbf16>
    %199 = vector.shape_cast %198 : vector<1x64x64xbf16> to vector<64x64xbf16>
    %cst_180 = arith.constant dense<0.000000e+00> : vector<1x64xf32>
    %200 = tpu.matmul %197, %199, %cst_180 {dimension_numbers = #tpu.dot_dimension_numbers<[1], [0], [0], [1], [0, 0, 1, 1], [], []>} : vector<1x64xbf16>, vector<64x64xbf16>, vector<1x64xf32> -> vector<1x64xf32>
    %201 = arith.addf %193, %200 : vector<1x64xf32>
    %c7_181 = arith.constant 7 : index
    %c0_182 = arith.constant 0 : index
    %c0_183 = arith.constant 0 : index
    %202 = vector.load %arg7[%c7_181, %c0_182, %c0_183] : memref<9x1x9xbf16, #tpu.memory_space<vmem>>, vector<1x1x9xbf16>
    %203 = vector.shape_cast %202 : vector<1x1x9xbf16> to vector<1x9xbf16>
    %cst_184 = arith.constant dense<0.000000e+00> : vector<1x64xf32>
    %204 = tpu.matmul %203, %144, %cst_184 {dimension_numbers = #tpu.dot_dimension_numbers<[1], [0], [0], [1], [0, 0, 1, 1], [], []>} : vector<1x9xbf16>, vector<9x64xbf16>, vector<1x64xf32> -> vector<1x64xf32>
    %205 = arith.truncf %204 : vector<1x64xf32> to vector<1x64xbf16>
    %c7_185 = arith.constant 7 : index
    %c0_186 = arith.constant 0 : index
    %c0_187 = arith.constant 0 : index
    %206 = vector.load %arg8[%c7_185, %c0_186, %c0_187] : memref<9x64x64xbf16, #tpu.memory_space<vmem>>, vector<1x64x64xbf16>
    %207 = vector.shape_cast %206 : vector<1x64x64xbf16> to vector<64x64xbf16>
    %cst_188 = arith.constant dense<0.000000e+00> : vector<1x64xf32>
    %208 = tpu.matmul %205, %207, %cst_188 {dimension_numbers = #tpu.dot_dimension_numbers<[1], [0], [0], [1], [0, 0, 1, 1], [], []>} : vector<1x64xbf16>, vector<64x64xbf16>, vector<1x64xf32> -> vector<1x64xf32>
    %209 = arith.addf %201, %208 : vector<1x64xf32>
    %c8_189 = arith.constant 8 : index
    %c0_190 = arith.constant 0 : index
    %c0_191 = arith.constant 0 : index
    %210 = vector.load %arg7[%c8_189, %c0_190, %c0_191] : memref<9x1x9xbf16, #tpu.memory_space<vmem>>, vector<1x1x9xbf16>
    %211 = vector.shape_cast %210 : vector<1x1x9xbf16> to vector<1x9xbf16>
    %cst_192 = arith.constant dense<0.000000e+00> : vector<1x64xf32>
    %212 = tpu.matmul %211, %144, %cst_192 {dimension_numbers = #tpu.dot_dimension_numbers<[1], [0], [0], [1], [0, 0, 1, 1], [], []>} : vector<1x9xbf16>, vector<9x64xbf16>, vector<1x64xf32> -> vector<1x64xf32>
    %213 = arith.truncf %212 : vector<1x64xf32> to vector<1x64xbf16>
    %c8_193 = arith.constant 8 : index
    %c0_194 = arith.constant 0 : index
    %c0_195 = arith.constant 0 : index
    %214 = vector.load %arg8[%c8_193, %c0_194, %c0_195] : memref<9x64x64xbf16, #tpu.memory_space<vmem>>, vector<1x64x64xbf16>
    %215 = vector.shape_cast %214 : vector<1x64x64xbf16> to vector<64x64xbf16>
    %cst_196 = arith.constant dense<0.000000e+00> : vector<1x64xf32>
    %216 = tpu.matmul %213, %215, %cst_196 {dimension_numbers = #tpu.dot_dimension_numbers<[1], [0], [0], [1], [0, 0, 1, 1], [], []>} : vector<1x64xbf16>, vector<64x64xbf16>, vector<1x64xf32> -> vector<1x64xf32>
    %217 = arith.addf %209, %216 : vector<1x64xf32>
    %c0_197 = arith.constant 0 : index
    %c0_198 = arith.constant 0 : index
    %218 = vector.load %arg9[%c0_197, %c0_198] : memref<1x64xf32, #tpu.memory_space<vmem>>, vector<1x64xf32>
    %219 = arith.addf %217, %218 : vector<1x64xf32>
    %cst_199 = arith.constant 0.000000e+00 : f32
    %220 = vector.broadcast %cst_199 : f32 to vector<1x64xf32>
    %221 = arith.maximumf %219, %220 : vector<1x64xf32>
    %222 = arith.truncf %221 : vector<1x64xf32> to vector<1x64xbf16>
    %cst_200 = arith.constant 0.000000e+00 : f32
    %223 = vector.broadcast %cst_200 : f32 to vector<1x512xf32>
    %c0_201 = arith.constant 0 : index
    %c0_202 = arith.constant 0 : index
    %c0_203 = arith.constant 0 : index
    %224 = vector.load %arg10[%c0_201, %c0_202, %c0_203] : memref<1x64x512xbf16, #tpu.memory_space<vmem>>, vector<1x64x512xbf16>
    %225 = vector.shape_cast %224 : vector<1x64x512xbf16> to vector<64x512xbf16>
    %cst_204 = arith.constant dense<0.000000e+00> : vector<1x512xf32>
    %226 = tpu.matmul %222, %225, %cst_204 {dimension_numbers = #tpu.dot_dimension_numbers<[1], [0], [0], [1], [0, 0, 1, 1], [], []>} : vector<1x64xbf16>, vector<64x512xbf16>, vector<1x512xf32> -> vector<1x512xf32>
    %227 = arith.addf %223, %226 : vector<1x512xf32>
    %c0_205 = arith.constant 0 : index
    %c0_206 = arith.constant 0 : index
    %228 = vector.load %arg11[%c0_205, %c0_206] : memref<1x512xf32, #tpu.memory_space<vmem>>, vector<1x512xf32>
    %229 = arith.addf %227, %228 : vector<1x512xf32>
    %cst_207 = arith.constant 0.000000e+00 : f32
    %230 = vector.broadcast %cst_207 : f32 to vector<1x512xf32>
    %231 = arith.maximumf %229, %230 : vector<1x512xf32>
    %232 = arith.truncf %231 : vector<1x512xf32> to vector<1x512xbf16>
    %c0_208 = arith.constant 0 : index
    %c0_209 = arith.constant 0 : index
    %233 = vector.load %arg12[%c0_208, %c0_209] : memref<512x128xbf16, #tpu.memory_space<vmem>>, vector<512x128xbf16>
    %cst_210 = arith.constant dense<0.000000e+00> : vector<1x128xf32>
    %234 = tpu.matmul %232, %233, %cst_210 {dimension_numbers = #tpu.dot_dimension_numbers<[1], [0], [0], [1], [0, 0, 1, 1], [], []>} : vector<1x512xbf16>, vector<512x128xbf16>, vector<1x128xf32> -> vector<1x128xf32>
    %c0_211 = arith.constant 0 : index
    %c0_212 = arith.constant 0 : index
    %235 = vector.load %arg13[%c0_211, %c0_212] : memref<1x128xf32, #tpu.memory_space<vmem>>, vector<1x128xf32>
    %236 = arith.addf %234, %235 : vector<1x128xf32>
    %c0_213 = arith.constant 0 : index
    %c0_214 = arith.constant 0 : index
    %c0_215 = arith.constant 0 : index
    %237 = vector.load %arg14[%c0_213, %c0_214, %c0_215] : memref<1x1x128xf32, #tpu.memory_space<vmem>>, vector<1x1x128xf32>
    %238 = vector.shape_cast %237 : vector<1x1x128xf32> to vector<1x128xf32>
    %239 = vector.shape_cast %236 : vector<1x128xf32> to vector<1x1x128xf32>
    tpu.vector_store %arg14[%c0_213, %c0_214, %c0_215], %239 {strides = array<i32>} : memref<1x1x128xf32, #tpu.memory_space<vmem>>, vector<1x1x128xf32>,
    return
  }
  func.func @transform_0(%arg0: i32) -> (i32, i32, i32) {
    %c0_i32 = arith.constant 0 : i32
    %c0_i32_0 = arith.constant 0 : i32
    %c0_i32_1 = arith.constant 0 : i32
    return %arg0, %c0_i32, %c0_i32_0 : i32, i32, i32
  }
  func.func @transform_1(%arg0: i32) -> (i32, i32) {
    %c0_i32 = arith.constant 0 : i32
    %c0_i32_0 = arith.constant 0 : i32
    %c0_i32_1 = arith.constant 0 : i32
    return %c0_i32, %c0_i32_0 : i32, i32
  }
  func.func @transform_2(%arg0: i32) -> (i32, i32) {
    %c0_i32 = arith.constant 0 : i32
    %c0_i32_0 = arith.constant 0 : i32
    %c0_i32_1 = arith.constant 0 : i32
    return %c0_i32, %c0_i32_0 : i32, i32
  }
  func.func @transform_3(%arg0: i32) -> (i32, i32, i32) {
    %c0_i32 = arith.constant 0 : i32
    %c0_i32_0 = arith.constant 0 : i32
    %c0_i32_1 = arith.constant 0 : i32
    %c0_i32_2 = arith.constant 0 : i32
    return %c0_i32, %c0_i32_0, %c0_i32_1 : i32, i32, i32
  }
  func.func @transform_4(%arg0: i32) -> (i32, i32, i32) {
    %c0_i32 = arith.constant 0 : i32
    %c0_i32_0 = arith.constant 0 : i32
    %c0_i32_1 = arith.constant 0 : i32
    %c0_i32_2 = arith.constant 0 : i32
    return %c0_i32, %c0_i32_0, %c0_i32_1 : i32, i32, i32
  }
  func.func @transform_5(%arg0: i32) -> (i32, i32) {
    %c0_i32 = arith.constant 0 : i32
    %c0_i32_0 = arith.constant 0 : i32
    %c0_i32_1 = arith.constant 0 : i32
    return %c0_i32, %c0_i32_0 : i32, i32
  }
  func.func @transform_6(%arg0: i32) -> (i32, i32, i32) {
    %c0_i32 = arith.constant 0 : i32
    %c0_i32_0 = arith.constant 0 : i32
    %c0_i32_1 = arith.constant 0 : i32
    %c0_i32_2 = arith.constant 0 : i32
    return %c0_i32, %c0_i32_0, %c0_i32_1 : i32, i32, i32
  }
  func.func @transform_7(%arg0: i32) -> (i32, i32, i32) {
    %c0_i32 = arith.constant 0 : i32
    %c0_i32_0 = arith.constant 0 : i32
    %c0_i32_1 = arith.constant 0 : i32
    %c0_i32_2 = arith.constant 0 : i32
    return %c0_i32, %c0_i32_0, %c0_i32_1 : i32, i32, i32
  }
  func.func @transform_8(%arg0: i32) -> (i32, i32) {
    %c0_i32 = arith.constant 0 : i32
    %c0_i32_0 = arith.constant 0 : i32
    %c0_i32_1 = arith.constant 0 : i32
    return %c0_i32, %c0_i32_0 : i32, i32
  }
  func.func @transform_9(%arg0: i32) -> (i32, i32, i32) {
    %c0_i32 = arith.constant 0 : i32
    %c0_i32_0 = arith.constant 0 : i32
    %c0_i32_1 = arith.constant 0 : i32
    %c0_i32_2 = arith.constant 0 : i32
    return %c0_i32, %c0_i32_0, %c0_i32_1 : i32, i32, i32
  }
  func.func @transform_10(%arg0: i32) -> (i32, i32) {
    %c0_i32 = arith.constant 0 : i32
    %c0_i32_0 = arith.constant 0 : i32
    %c0_i32_1 = arith.constant 0 : i32
    return %c0_i32, %c0_i32_0 : i32, i32
  }
  func.func @transform_11(%arg0: i32) -> (i32, i32) {
    %c0_i32 = arith.constant 0 : i32
    %c0_i32_0 = arith.constant 0 : i32
    %c0_i32_1 = arith.constant 0 : i32
    return %c0_i32, %c0_i32_0 : i32, i32
  }
  func.func @transform_12(%arg0: i32) -> (i32, i32) {
    %c0_i32 = arith.constant 0 : i32
    %c0_i32_0 = arith.constant 0 : i32
    %c0_i32_1 = arith.constant 0 : i32
    return %c0_i32, %c0_i32_0 : i32, i32
  }
  func.func @transform_13(%arg0: i32) -> (i32, i32, i32) {
    %c0_i32 = arith.constant 0 : i32
    %c0_i32_0 = arith.constant 0 : i32
    %c0_i32_1 = arith.constant 0 : i32
    return %arg0, %c0_i32, %c0_i32_0 : i32, i32, i32
  }
}

</mosaic_0001>

<llo_original>
// kernel: dqn_forward.1
$region0: #{dqn_forward.1}
  #allocation0 [shape = 'u32[]', space=smem, size = 0x4, offset = 0x4, fixed_abs, tag = 'smem constant byte address 0x4 - core index']
  #allocation1 [shape = 'u32[144,128]{1,0:T(1,128)}', space=vmem, size = 0x12000, scoped, tag = 'internal scratch']
  %s0 = inlined_call_operand.vmem [shape: bf16[2,64,256], index: 0, kind: input, shape index: {}]
  %s1 = inlined_call_operand.vmem [shape: bf16[256,32], index: 1, kind: input, shape index: {}]
  %s2 = inlined_call_operand.vmem [shape: f32[1,32], index: 2, kind: input, shape index: {}]
  %s3 = inlined_call_operand.vmem [shape: bf16[16,9,64], index: 3, kind: input, shape index: {}]
  %s4 = inlined_call_operand.vmem [shape: bf16[16,32,64], index: 4, kind: input, shape index: {}]
  %s5 = inlined_call_operand.vmem [shape: f32[1,64], index: 5, kind: input, shape index: {}]
  %s6 = inlined_call_operand.vmem [shape: bf16[9,1,9], index: 6, kind: input, shape index: {}]
  %s7 = inlined_call_operand.vmem [shape: bf16[9,64,64], index: 7, kind: input, shape index: {}]
  %s8 = inlined_call_operand.vmem [shape: f32[1,64], index: 8, kind: input, shape index: {}]
  %s9 = inlined_call_operand.vmem [shape: bf16[1,64,512], index: 9, kind: input, shape index: {}]
  %s10 = inlined_call_operand.vmem [shape: f32[1,512], index: 10, kind: input, shape index: {}]
  %s11 = inlined_call_operand.vmem [shape: bf16[512,128], index: 11, kind: input, shape index: {}]
  %s12 = inlined_call_operand.vmem [shape: f32[1,128], index: 12, kind: input, shape index: {}]
  %s13 = inlined_call_operand.hbm [shape: f32[2,1,128], index: 13, kind: output, shape index: {}]
  %s14 = sld [smem:[#allocation0]]
  $region85: #{dqn_forward.1} parent=0
    _
  %s16 = ssub.s32 1, %s14
  %s17 = scalar_select 0, %s16, %s14
  $region1: #{dqn_forward.1} parent=0
    #allocation2 [shape = 'u8[1024]{0}', space=vmem, size = 0x400, scoped, tag = 'output window, operand 0']
    #allocation3 [shape = 's32[2]{0}', space=sflag, size = 0x8, scoped, tag = 'scoped memory for dqn_forward.1']
    %18 = vsyncpa [#allocation3], 0
    %s19 = scalar_lea.sflag [#allocation3], 1
    %20 = vsyncpa %s19, 0
    loop: start=0, step=1, limit=4
    $region2: #{dqn_forward.1} parent=1 // loop_pre_header
      _
    $region3: #{dqn_forward.1} parent=1 // loop_header
      %s22 = sphi 0, %s26
      %p23 = scmp.ge.s32.totalorder %s22, 4
      %s32 = sphi 0, %s34
      %s35 = sphi 0, %s32
      %s36 = sphi 0, %s35
      %s52 = sphi 0, %s36
      %s56 = sphi 0, %s56
      %s58 = sphi 0, %s56
      %s59 = sphi 0, %s58
      %s73 = sphi 0, %s59
      %s77 = sphi 0, %s77
      %s79 = sphi 0, %s77
      %s80 = sphi 0, %s79
      %s94 = sphi 0, %s80
      %s98 = sphi 0, %s98
      %s100 = sphi 0, %s98
      %s101 = sphi 0, %s100
      %s115 = sphi 0, %s101
      %s119 = sphi 0, %s119
      %s121 = sphi 0, %s119
      %s122 = sphi 0, %s121
      %s136 = sphi 0, %s122
      %s140 = sphi 0, %s140
      %s142 = sphi 0, %s140
      %s143 = sphi 0, %s142
      %s157 = sphi 0, %s143
      %s161 = sphi 0, %s161
      %s163 = sphi 0, %s161
      %s164 = sphi 0, %s163
      %s178 = sphi 0, %s164
      %s182 = sphi 0, %s182
      %s184 = sphi 0, %s182
      %s185 = sphi 0, %s184
      %s199 = sphi 0, %s185
      %s203 = sphi 0, %s203
      %s205 = sphi 0, %s203
      %s206 = sphi 0, %s205
      %s220 = sphi 0, %s206
      %s224 = sphi 0, %s224
      %s226 = sphi 0, %s224
      %s227 = sphi 0, %s226
      %s241 = sphi 0, %s227
      %s245 = sphi 0, %s245
      %s247 = sphi 0, %s245
      %s248 = sphi 0, %s247
      %s262 = sphi 0, %s248
      %s266 = sphi 0, %s266
      %s268 = sphi 0, %s266
      %s269 = sphi 0, %s268
      %s283 = sphi 0, %s269
      %s287 = sphi 0, %s287
      %s289 = sphi 0, %s287
      %s290 = sphi 0, %s289
      %s304 = sphi 0, %s290
      %s310 = sphi 0, %s312
      %s313 = sphi 0, %s310
      %s314 = sphi 0, %s313
      %s330 = sphi 0, %s314
    $region4: #{dqn_forward.1} parent=1 // loop_header_branch
      %25 = sbr.rel (%p23) target = $region8
    $region5: #{dqn_forward.1} parent=1 // loop_body
      %s27 = ssub.s32 %s22, 1
      %s28 = ssub.s32 %s22, 2
      %s29 = sadd.s32 %s22, 1
      %s30 = ssub.s32 %s22, %s29
      %p31 = scmp.eq.s32.totalorder %s30, 0
      %s33 = sadd.s32 %s32, 1
      %s34 = scalar_select %p31, %s32, %s33
      %p37 = pneg %p31
      %p38 = scmp.eq.s32.totalorder %s22, 1
      %p39 = por %p37, %p38
      %p40 = scmp.ne.s32.totalorder %s32, %s35
      %p41 = scmp.eq.s32.totalorder %s22, 0
      %p42 = por %p40, %p41
      %p43 = scmp.ne.s32.totalorder %s32, %s35
      %p44 = scmp.eq.s32.totalorder %s27, 1
      %p45 = por %p43, %p44
      %p46 = scmp.ne.s32.totalorder %s35, %s36
      %p47 = scmp.eq.s32.totalorder %s27, 0
      %p48 = por %p46, %p47
      %p49 = scmp.ne.s32.totalorder %s35, %s36
      %p50 = scmp.eq.s32.totalorder %s28, 1
      %p51 = por %p49, %p50
      %p53 = scmp.ne.s32.totalorder %s36, %s52
      %p54 = scmp.eq.s32.totalorder %s28, 0
      %p55 = por %p53, %p54
      %s57 = sadd.s32 %s56, 1
      %p60 = scmp.eq.s32.totalorder %s22, 1
      %p61 = scmp.ne.s32.totalorder %s56, %s58
      %p62 = scmp.eq.s32.totalorder %s22, 0
      %p63 = por %p61, %p62
      %p64 = scmp.ne.s32.totalorder %s56, %s58
      %p65 = scmp.eq.s32.totalorder %s27, 1
      %p66 = por %p64, %p65
      %p67 = scmp.ne.s32.totalorder %s58, %s59
      %p68 = scmp.eq.s32.totalorder %s27, 0
      %p69 = por %p67, %p68
      %p70 = scmp.ne.s32.totalorder %s58, %s59
      %p71 = scmp.eq.s32.totalorder %s28, 1
      %p72 = por %p70, %p71
      %p74 = scmp.ne.s32.totalorder %s59, %s73
      %p75 = scmp.eq.s32.totalorder %s28, 0
      %p76 = por %p74, %p75
      %s78 = sadd.s32 %s77, 1
      %p81 = scmp.eq.s32.totalorder %s22, 1
      %p82 = scmp.ne.s32.totalorder %s77, %s79
      %p83 = scmp.eq.s32.totalorder %s22, 0
      %p84 = por %p82, %p83
      %p85 = scmp.ne.s32.totalorder %s77, %s79
      %p86 = scmp.eq.s32.totalorder %s27, 1
      %p87 = por %p85, %p86
      %p88 = scmp.ne.s32.totalorder %s79, %s80
      %p89 = scmp.eq.s32.totalorder %s27, 0
      %p90 = por %p88, %p89
      %p91 = scmp.ne.s32.totalorder %s79, %s80
      %p92 = scmp.eq.s32.totalorder %s28, 1
      %p93 = por %p91, %p92
      %p95 = scmp.ne.s32.totalorder %s80, %s94
      %p96 = scmp.eq.s32.totalorder %s28, 0
      %p97 = por %p95, %p96
      %s99 = sadd.s32 %s98, 1
      %p102 = scmp.eq.s32.totalorder %s22, 1
      %p103 = scmp.ne.s32.totalorder %s98, %s100
      %p104 = scmp.eq.s32.totalorder %s22, 0
      %p105 = por %p103, %p104
      %p106 = scmp.ne.s32.totalorder %s98, %s100
      %p107 = scmp.eq.s32.totalorder %s27, 1
      %p108 = por %p106, %p107
      %p109 = scmp.ne.s32.totalorder %s100, %s101
      %p110 = scmp.eq.s32.totalorder %s27, 0
      %p111 = por %p109, %p110
      %p112 = scmp.ne.s32.totalorder %s100, %s101
      %p113 = scmp.eq.s32.totalorder %s28, 1
      %p114 = por %p112, %p113
      %p116 = scmp.ne.s32.totalorder %s101, %s115
      %p117 = scmp.eq.s32.totalorder %s28, 0
      %p118 = por %p116, %p117
      %s120 = sadd.s32 %s119, 1
      %p123 = scmp.eq.s32.totalorder %s22, 1
      %p124 = scmp.ne.s32.totalorder %s119, %s121
      %p125 = scmp.eq.s32.totalorder %s22, 0
      %p126 = por %p124, %p125
      %p127 = scmp.ne.s32.totalorder %s119, %s121
      %p128 = scmp.eq.s32.totalorder %s27, 1
      %p129 = por %p127, %p128
      %p130 = scmp.ne.s32.totalorder %s121, %s122
      %p131 = scmp.eq.s32.totalorder %s27, 0
      %p132 = por %p130, %p131
      %p133 = scmp.ne.s32.totalorder %s121, %s122
      %p134 = scmp.eq.s32.totalorder %s28, 1
      %p135 = por %p133, %p134
      %p137 = scmp.ne.s32.totalorder %s122, %s136
      %p138 = scmp.eq.s32.totalorder %s28, 0
      %p139 = por %p137, %p138
      %s141 = sadd.s32 %s140, 1
      %p144 = scmp.eq.s32.totalorder %s22, 1
      %p145 = scmp.ne.s32.totalorder %s140, %s142
      %p146 = scmp.eq.s32.totalorder %s22, 0
      %p147 = por %p145, %p146
      %p148 = scmp.ne.s32.totalorder %s140, %s142
      %p149 = scmp.eq.s32.totalorder %s27, 1
      %p150 = por %p148, %p149
      %p151 = scmp.ne.s32.totalorder %s142, %s143
      %p152 = scmp.eq.s32.totalorder %s27, 0
      %p153 = por %p151, %p152
      %p154 = scmp.ne.s32.totalorder %s142, %s143
      %p155 = scmp.eq.s32.totalorder %s28, 1
      %p156 = por %p154, %p155
      %p158 = scmp.ne.s32.totalorder %s143, %s157
      %p159 = scmp.eq.s32.totalorder %s28, 0
      %p160 = por %p158, %p159
      %s162 = sadd.s32 %s161, 1
      %p165 = scmp.eq.s32.totalorder %s22, 1
      %p166 = scmp.ne.s32.totalorder %s161, %s163
      %p167 = scmp.eq.s32.totalorder %s22, 0
      %p168 = por %p166, %p167
      %p169 = scmp.ne.s32.totalorder %s161, %s163
      %p170 = scmp.eq.s32.totalorder %s27, 1
      %p171 = por %p169, %p170
      %p172 = scmp.ne.s32.totalorder %s163, %s164
      %p173 = scmp.eq.s32.totalorder %s27, 0
      %p174 = por %p172, %p173
      %p175 = scmp.ne.s32.totalorder %s163, %s164
      %p176 = scmp.eq.s32.totalorder %s28, 1
      %p177 = por %p175, %p176
      %p179 = scmp.ne.s32.totalorder %s164, %s178
      %p180 = scmp.eq.s32.totalorder %s28, 0
      %p181 = por %p179, %p180
      %s183 = sadd.s32 %s182, 1
      %p186 = scmp.eq.s32.totalorder %s22, 1
      %p187 = scmp.ne.s32.totalorder %s182, %s184
      %p188 = scmp.eq.s32.totalorder %s22, 0
      %p189 = por %p187, %p188
      %p190 = scmp.ne.s32.totalorder %s182, %s184
      %p191 = scmp.eq.s32.totalorder %s27, 1
      %p192 = por %p190, %p191
      %p193 = scmp.ne.s32.totalorder %s184, %s185
      %p194 = scmp.eq.s32.totalorder %s27, 0
      %p195 = por %p193, %p194
      %p196 = scmp.ne.s32.totalorder %s184, %s185
      %p197 = scmp.eq.s32.totalorder %s28, 1
      %p198 = por %p196, %p197
      %p200 = scmp.ne.s32.totalorder %s185, %s199
      %p201 = scmp.eq.s32.totalorder %s28, 0
      %p202 = por %p200, %p201
      %s204 = sadd.s32 %s203, 1
      %p207 = scmp.eq.s32.totalorder %s22, 1
      %p208 = scmp.ne.s32.totalorder %s203, %s205
      %p209 = scmp.eq.s32.totalorder %s22, 0
      %p210 = por %p208, %p209
      %p211 = scmp.ne.s32.totalorder %s203, %s205
      %p212 = scmp.eq.s32.totalorder %s27, 1
      %p213 = por %p211, %p212
      %p214 = scmp.ne.s32.totalorder %s205, %s206
      %p215 = scmp.eq.s32.totalorder %s27, 0
      %p216 = por %p214, %p215
      %p217 = scmp.ne.s32.totalorder %s205, %s206
      %p218 = scmp.eq.s32.totalorder %s28, 1
      %p219 = por %p217, %p218
      %p221 = scmp.ne.s32.totalorder %s206, %s220
      %p222 = scmp.eq.s32.totalorder %s28, 0
      %p223 = por %p221, %p222
      %s225 = sadd.s32 %s224, 1
      %p228 = scmp.eq.s32.totalorder %s22, 1
      %p229 = scmp.ne.s32.totalorder %s224, %s226
      %p230 = scmp.eq.s32.totalorder %s22, 0
      %p231 = por %p229, %p230
      %p232 = scmp.ne.s32.totalorder %s224, %s226
      %p233 = scmp.eq.s32.totalorder %s27, 1
      %p234 = por %p232, %p233
      %p235 = scmp.ne.s32.totalorder %s226, %s227
      %p236 = scmp.eq.s32.totalorder %s27, 0
      %p237 = por %p235, %p236
      %p238 = scmp.ne.s32.totalorder %s226, %s227
      %p239 = scmp.eq.s32.totalorder %s28, 1
      %p240 = por %p238, %p239
      %p242 = scmp.ne.s32.totalorder %s227, %s241
      %p243 = scmp.eq.s32.totalorder %s28, 0
      %p244 = por %p242, %p243
      %s246 = sadd.s32 %s245, 1
      %p249 = scmp.eq.s32.totalorder %s22, 1
      %p250 = scmp.ne.s32.totalorder %s245, %s247
      %p251 = scmp.eq.s32.totalorder %s22, 0
      %p252 = por %p250, %p251
      %p253 = scmp.ne.s32.totalorder %s245, %s247
      %p254 = scmp.eq.s32.totalorder %s27, 1
      %p255 = por %p253, %p254
      %p256 = scmp.ne.s32.totalorder %s247, %s248
      %p257 = scmp.eq.s32.totalorder %s27, 0
      %p258 = por %p256, %p257
      %p259 = scmp.ne.s32.totalorder %s247, %s248
      %p260 = scmp.eq.s32.totalorder %s28, 1
      %p261 = por %p259, %p260
      %p263 = scmp.ne.s32.totalorder %s248, %s262
      %p264 = scmp.eq.s32.totalorder %s28, 0
      %p265 = por %p263, %p264
      %s267 = sadd.s32 %s266, 1
      %p270 = scmp.eq.s32.totalorder %s22, 1
      %p271 = scmp.ne.s32.totalorder %s266, %s268
      %p272 = scmp.eq.s32.totalorder %s22, 0
      %p273 = por %p271, %p272
      %p274 = scmp.ne.s32.totalorder %s266, %s268
      %p275 = scmp.eq.s32.totalorder %s27, 1
      %p276 = por %p274, %p275
      %p277 = scmp.ne.s32.totalorder %s268, %s269
      %p278 = scmp.eq.s32.totalorder %s27, 0
      %p279 = por %p277, %p278
      %p280 = scmp.ne.s32.totalorder %s268, %s269
      %p281 = scmp.eq.s32.totalorder %s28, 1
      %p282 = por %p280, %p281
      %p284 = scmp.ne.s32.totalorder %s269, %s283
      %p285 = scmp.eq.s32.totalorder %s28, 0
      %p286 = por %p284, %p285
      %s288 = sadd.s32 %s287, 1
      %p291 = scmp.eq.s32.totalorder %s22, 1
      %p292 = scmp.ne.s32.totalorder %s287, %s289
      %p293 = scmp.eq.s32.totalorder %s22, 0
      %p294 = por %p292, %p293
      %p295 = scmp.ne.s32.totalorder %s287, %s289
      %p296 = scmp.eq.s32.totalorder %s27, 1
      %p297 = por %p295, %p296
      %p298 = scmp.ne.s32.totalorder %s289, %s290
      %p299 = scmp.eq.s32.totalorder %s27, 0
      %p300 = por %p298, %p299
      %p301 = scmp.ne.s32.totalorder %s289, %s290
      %p302 = scmp.eq.s32.totalorder %s28, 1
      %p303 = por %p301, %p302
      %p305 = scmp.ne.s32.totalorder %s290, %s304
      %p306 = scmp.eq.s32.totalorder %s28, 0
      %p307 = por %p305, %p306
      %s308 = ssub.s32 %s22, %s29
      %p309 = scmp.eq.s32.totalorder %s308, 0
      %s311 = sadd.s32 %s310, 1
      %s312 = scalar_select %p309, %s310, %s311
      %p315 = pneg %p309
      %p316 = scmp.eq.s32.totalorder %s22, 1
      %p317 = por %p315, %p316
      %p318 = scmp.ne.s32.totalorder %s310, %s313
      %p319 = scmp.eq.s32.totalorder %s22, 0
      %p320 = por %p318, %p319
      %p321 = scmp.ne.s32.totalorder %s310, %s313
      %p322 = scmp.eq.s32.totalorder %s27, 1
      %p323 = por %p321, %p322
      %p324 = scmp.ne.s32.totalorder %s313, %s314
      %p325 = scmp.eq.s32.totalorder %s27, 0
      %p326 = por %p324, %p325
      %p327 = scmp.ne.s32.totalorder %s313, %s314
      %p328 = scmp.eq.s32.totalorder %s28, 1
      %p329 = por %p327, %p328
      %p331 = scmp.ne.s32.totalorder %s314, %s330
      %p332 = scmp.eq.s32.totalorder %s28, 0
      %p333 = por %p331, %p332
      %p334 = scmp.le.s32.totalorder 1, %s22
      %p335 = scmp.lt.s32.totalorder %s22, 3
      %p336 = pnand %p334, %p335
      %p337 = pneg %p336
      // Predicated region
      $region9: #{dqn_forward.1} parent=5 // pred_check
        _
      $region10: #{dqn_forward.1} parent=5 // pred_check_branch
        %339 = sbr.rel (%p336) target = $region12
      $region11: #{dqn_forward.1} parent=5 // pred_region
        %s340 = ssub.s32 %s22, 1
        // Predicated region
        $region13: #{dqn_forward.1} parent=11 // pred_check
          %p341 = pneg %p69
        $region14: #{dqn_forward.1} parent=11 // pred_check_branch
          %343 = sbr.rel (%p341) target = $region16
        $region15: #{dqn_forward.1} parent=11 // pred_region
          _
        $region16: #{dqn_forward.1} parent=11 // pred_fallthru
          _
        // Predicated region
        $region17: #{dqn_forward.1} parent=11 // pred_check
          %p344 = pneg %p90
        $region18: #{dqn_forward.1} parent=11 // pred_check_branch
          %346 = sbr.rel (%p344) target = $region20
        $region19: #{dqn_forward.1} parent=11 // pred_region
          _
        $region20: #{dqn_forward.1} parent=11 // pred_fallthru
          _
        // Predicated region
        $region21: #{dqn_forward.1} parent=11 // pred_check
          %p347 = pneg %p111
        $region22: #{dqn_forward.1} parent=11 // pred_check_branch
          %349 = sbr.rel (%p347) target = $region24
        $region23: #{dqn_forward.1} parent=11 // pred_region
          _
        $region24: #{dqn_forward.1} parent=11 // pred_fallthru
          _
        // Predicated region
        $region25: #{dqn_forward.1} parent=11 // pred_check
          %p350 = pneg %p132
        $region26: #{dqn_forward.1} parent=11 // pred_check_branch
          %352 = sbr.rel (%p350) target = $region28
        $region27: #{dqn_forward.1} parent=11 // pred_region
          _
        $region28: #{dqn_forward.1} parent=11 // pred_fallthru
          _
        // Predicated region
        $region29: #{dqn_forward.1} parent=11 // pred_check
          %p353 = pneg %p153
        $region30: #{dqn_forward.1} parent=11 // pred_check_branch
          %355 = sbr.rel (%p353) target = $region32
        $region31: #{dqn_forward.1} parent=11 // pred_region
          _
        $region32: #{dqn_forward.1} parent=11 // pred_fallthru
          _
        // Predicated region
        $region33: #{dqn_forward.1} parent=11 // pred_check
          %p356 = pneg %p174
        $region34: #{dqn_forward.1} parent=11 // pred_check_branch
          %358 = sbr.rel (%p356) target = $region36
        $region35: #{dqn_forward.1} parent=11 // pred_region
          _
        $region36: #{dqn_forward.1} parent=11 // pred_fallthru
          _
        // Predicated region
        $region37: #{dqn_forward.1} parent=11 // pred_check
          %p359 = pneg %p195
        $region38: #{dqn_forward.1} parent=11 // pred_check_branch
          %361 = sbr.rel (%p359) target = $region40
        $region39: #{dqn_forward.1} parent=11 // pred_region
          _
        $region40: #{dqn_forward.1} parent=11 // pred_fallthru
          _
        // Predicated region
        $region41: #{dqn_forward.1} parent=11 // pred_check
          %p362 = pneg %p216
        $region42: #{dqn_forward.1} parent=11 // pred_check_branch
          %364 = sbr.rel (%p362) target = $region44
        $region43: #{dqn_forward.1} parent=11 // pred_region
          _
        $region44: #{dqn_forward.1} parent=11 // pred_fallthru
          _
        // Predicated region
        $region45: #{dqn_forward.1} parent=11 // pred_check
          %p365 = pneg %p237
        $region46: #{dqn_forward.1} parent=11 // pred_check_branch
          %367 = sbr.rel (%p365) target = $region48
        $region47: #{dqn_forward.1} parent=11 // pred_region
          _
        $region48: #{dqn_forward.1} parent=11 // pred_fallthru
          _
        // Predicated region
        $region49: #{dqn_forward.1} parent=11 // pred_check
          %p368 = pneg %p258
        $region50: #{dqn_forward.1} parent=11 // pred_check_branch
          %370 = sbr.rel (%p368) target = $region52
        $region51: #{dqn_forward.1} parent=11 // pred_region
          _
        $region52: #{dqn_forward.1} parent=11 // pred_fallthru
          _
        // Predicated region
        $region53: #{dqn_forward.1} parent=11 // pred_check
          %p371 = pneg %p279
        $region54: #{dqn_forward.1} parent=11 // pred_check_branch
          %373 = sbr.rel (%p371) target = $region56
        $region55: #{dqn_forward.1} parent=11 // pred_region
          _
        $region56: #{dqn_forward.1} parent=11 // pred_fallthru
          _
        // Predicated region
        $region57: #{dqn_forward.1} parent=11 // pred_check
          %p374 = pneg %p300
        $region58: #{dqn_forward.1} parent=11 // pred_check_branch
          %376 = sbr.rel (%p374) target = $region60
        $region59: #{dqn_forward.1} parent=11 // pred_region
          _
        $region60: #{dqn_forward.1} parent=11 // pred_fallthru
          _
      $region12: #{dqn_forward.1} parent=5 // pred_fallthru
        _
      %p377 = scmp.lt.s32.totalorder %s22, 2
      // Predicated region
      $region61: #{dqn_forward.1} parent=5 // pred_check
        %p378 = pneg %p377
      $region62: #{dqn_forward.1} parent=5 // pred_check_branch
        %380 = sbr.rel (%p378) target = $region64
      $region63: #{dqn_forward.1} parent=5 // pred_region
        // Predicated region
        $region65: #{dqn_forward.1} parent=63 // pred_check
          %p381 = pneg %p42
        $region66: #{dqn_forward.1} parent=63 // pred_check_branch
          %383 = sbr.rel (%p381) target = $region68
        $region67: #{dqn_forward.1} parent=63 // pred_region
          %p384 = scmp.lt.s32.totalorder %s22, 1
          %s385 = scalar_select %p384, %s22, 1
          %s386 = smul.addr %s385, 16
          %s387 = smul.addr %s386, 4
          %s388 = scalar_lea.vmem %s0, %s387
        $region68: #{dqn_forward.1} parent=63 // pred_fallthru
          _
      $region64: #{dqn_forward.1} parent=5 // pred_fallthru
        _
      %p389 = scmp.le.s32.totalorder 1, %s22
      %p390 = scmp.lt.s32.totalorder %s22, 3
      %p391 = pnand %p389, %p390
      %p392 = pneg %p391
      // Predicated region
      $region69: #{dqn_forward.1} parent=5 // pred_check
        _
      $region70: #{dqn_forward.1} parent=5 // pred_check_branch
        %394 = sbr.rel (%p391) target = $region72
      $region71: #{dqn_forward.1} parent=5 // pred_region
        %s395 = ssub.s32 %s22, 1
        %p396 = scmp.lt.s32.totalorder %s27, 1
        %s397 = scalar_select %p396, %s27, 1
        %s398 = smul.addr %s397, 16
        %s399 = smul.addr %s398, 4
        %s400 = scalar_lea.vmem %s0, %s399
        %p401 = pneg %p48
        %p402 = pneg %p45
        %p403 = pneg %p69
        %p404 = pneg %p66
        %p405 = pneg %p90
        %p406 = pneg %p87
        %p407 = pneg %p111
        %p408 = pneg %p108
        %p409 = pneg %p132
        %p410 = pneg %p129
        %p411 = pneg %p153
        %p412 = pneg %p150
        %p413 = pneg %p174
        %p414 = pneg %p171
        %p415 = pneg %p195
        %p416 = pneg %p192
        %p417 = pneg %p216
        %p418 = pneg %p213
        %p419 = pneg %p237
        %p420 = pneg %p234
        %p421 = pneg %p258
        %p422 = pneg %p255
        %p423 = pneg %p279
        %p424 = pneg %p276
        %p425 = pneg %p300
        %p426 = pneg %p297
        %p427 = pneg %p326
        %p428 = pneg %p323
        %s429 = sand.u32 %s313, 1
        %s430 = scalar_lea.sflag [#allocation3], %s429
        %s431 = sand.u32 %s313, 1
        %s432 = scalar_lea.vmem [#allocation2], %s431
        %p433 = scmp.lt.s32.totalorder %s27, 1
        %s434 = scalar_select %p433, %s27, 1
        %s435 = smul.addr %s434, 16
        %s436 = smul.addr %s435, 4
        %s437 = scalar_lea.vmem %s0, %s436
        %v439 = vld [vmem:[%s437] sm:$0xff]
        %v440 = vld [vmem:[%s437 + $0x8] sm:$0xff]
        %v441 = vld [vmem:[%s437 + $0x10] sm:$0xff]
        %v442 = vld [vmem:[%s437 + $0x18] sm:$0xff]
        %v443 = vld [vmem:[%s437 + $0x20] sm:$0xff]
        %v444 = vld [vmem:[%s437 + $0x28] sm:$0xff]
        %v445 = vld [vmem:[%s437 + $0x30] sm:$0xff]
        %v446 = vld [vmem:[%s437 + $0x38] sm:$0xff]
        %v447 = vld [vmem:[%s1] sm:$0xf]
        %v448 = vld [vmem:[%s1 + $0x4] sm:$0xf]
        %v449 = vld [vmem:[%s1 + $0x8] sm:$0xf]
        %v450 = vld [vmem:[%s1 + $0xc] sm:$0xf]
        %v451 = vld [vmem:[%s1 + $0x10] sm:$0xf]
        %v452 = vld [vmem:[%s1 + $0x14] sm:$0xf]
        %v453 = vld [vmem:[%s1 + $0x18] sm:$0xf]
        %v454 = vld [vmem:[%s1 + $0x1c] sm:$0xf]
        %v455 = vld [vmem:[%s1 + $0x20] sm:$0xf]
        %v456 = vld [vmem:[%s1 + $0x24] sm:$0xf]
        %v457 = vld [vmem:[%s1 + $0x28] sm:$0xf]
        %v458 = vld [vmem:[%s1 + $0x2c] sm:$0xf]
        %v459 = vld [vmem:[%s1 + $0x30] sm:$0xf]
        %v460 = vld [vmem:[%s1 + $0x34] sm:$0xf]
        %v461 = vld [vmem:[%s1 + $0x38] sm:$0xf]
        %v462 = vld [vmem:[%s1 + $0x3c] sm:$0xf]
        %v463 = vld [vmem:[%s1 + $0x40] sm:$0xf]
        %v464 = vld [vmem:[%s1 + $0x44] sm:$0xf]
        %v465 = vld [vmem:[%s1 + $0x48] sm:$0xf]
        %v466 = vld [vmem:[%s1 + $0x4c] sm:$0xf]
        %v467 = vld [vmem:[%s1 + $0x50] sm:$0xf]
        %v468 = vld [vmem:[%s1 + $0x54] sm:$0xf]
        %v469 = vld [vmem:[%s1 + $0x58] sm:$0xf]
        %v470 = vld [vmem:[%s1 + $0x5c] sm:$0xf]
        %v471 = vld [vmem:[%s1 + $0x60] sm:$0xf]
        %v472 = vld [vmem:[%s1 + $0x64] sm:$0xf]
        %v473 = vld [vmem:[%s1 + $0x68] sm:$0xf]
        %v474 = vld [vmem:[%s1 + $0x6c] sm:$0xf]
        %v475 = vld [vmem:[%s1 + $0x70] sm:$0xf]
        %v476 = vld [vmem:[%s1 + $0x74] sm:$0xf]
        %v477 = vld [vmem:[%s1 + $0x78] sm:$0xf]
        %v478 = vld [vmem:[%s1 + $0x7c] sm:$0xf]
        %v479 = vld [vmem:[%s2] sm:$0x1]
        %v481 = vlaneseq
        %v482 = vshrl.u32 %v481, 7
        %v483 = vsub.s32 0, %v482
        %v484 = vrot.slane %v479, %v483
        %v494 = vunpack.c.l.b16 %v439
        %v495 = vunpack.c.h.b16 %v439
        %v496 = vunpack.c.l.b16 %v440
        %v497 = vunpack.c.h.b16 %v440
        %v498 = vunpack.c.l.b16 %v441
        %v499 = vunpack.c.h.b16 %v441
        %v500 = vunpack.c.l.b16 %v442
        %v501 = vunpack.c.h.b16 %v442
        %v502 = vunpack.c.l.b16 %v443
        %v503 = vunpack.c.h.b16 %v443
        %v504 = vunpack.c.l.b16 %v444
        %v505 = vunpack.c.h.b16 %v444
        %v506 = vunpack.c.l.b16 %v445
        %v507 = vunpack.c.h.b16 %v445
        %v508 = vunpack.c.l.b16 %v446
        %v509 = vunpack.c.h.b16 %v446
        %v510 = vpack.c.b16 %v496, %v494
        %v511 = vpack.c.b16 %v497, %v495
        %v512 = vpack.c.b16 %v500, %v498
        %v513 = vpack.c.b16 %v501, %v499
        %v514 = vpack.c.b16 %v504, %v502
        %v515 = vpack.c.b16 %v505, %v503
        %v516 = vpack.c.b16 %v508, %v506
        %v517 = vpack.c.b16 %v509, %v507
        %v558 = vunpack.c.l.b16 %v447
        %v559 = vunpack.c.l.b16 %v448
        %v560 = vunpack.c.l.b16 %v449
        %v561 = vunpack.c.l.b16 %v450
        %v562 = vunpack.c.l.b16 %v451
        %v563 = vunpack.c.l.b16 %v452
        %v564 = vunpack.c.l.b16 %v453
        %v565 = vunpack.c.l.b16 %v454
        %v566 = vunpack.c.l.b16 %v455
        %v567 = vunpack.c.l.b16 %v456
        %v568 = vunpack.c.l.b16 %v457
        %v569 = vunpack.c.l.b16 %v458
        %v570 = vunpack.c.l.b16 %v459
        %v571 = vunpack.c.l.b16 %v460
        %v572 = vunpack.c.l.b16 %v461
        %v573 = vunpack.c.l.b16 %v462
        %v574 = vunpack.c.l.b16 %v463
        %v575 = vunpack.c.l.b16 %v464
        %v576 = vunpack.c.l.b16 %v465
        %v577 = vunpack.c.l.b16 %v466
        %v578 = vunpack.c.l.b16 %v467
        %v579 = vunpack.c.l.b16 %v468
        %v580 = vunpack.c.l.b16 %v469
        %v581 = vunpack.c.l.b16 %v470
        %v582 = vunpack.c.l.b16 %v471
        %v583 = vunpack.c.l.b16 %v472
        %v584 = vunpack.c.l.b16 %v473
        %v585 = vunpack.c.l.b16 %v474
        %v586 = vunpack.c.l.b16 %v475
        %v587 = vunpack.c.l.b16 %v476
        %v588 = vunpack.c.l.b16 %v477
        %v589 = vunpack.c.l.b16 %v478
        %v590 = vpack.c.b16 %v559, %v558
        %v591 = vpack.c.b16 %v561, %v560
        %v592 = vpack.c.b16 %v563, %v562
        %v593 = vpack.c.b16 %v565, %v564
        %v594 = vpack.c.b16 %v567, %v566
        %v595 = vpack.c.b16 %v569, %v568
        %v596 = vpack.c.b16 %v571, %v570
        %v597 = vpack.c.b16 %v573, %v572
        %v598 = vpack.c.b16 %v575, %v574
        %v599 = vpack.c.b16 %v577, %v576
        %v600 = vpack.c.b16 %v579, %v578
        %v601 = vpack.c.b16 %v581, %v580
        %v602 = vpack.c.b16 %v583, %v582
        %v603 = vpack.c.b16 %v585, %v584
        %v604 = vpack.c.b16 %v587, %v586
        %v605 = vpack.c.b16 %v589, %v588
        %622 = vmatprep.subr.bf16.mxu0 0
        %623 = vmatpush1.bf16.msra.mxu0 %v590
        %624 = vmatprep.subr.bf16.mxu0 0
        %625 = vmatpush1.bf16.msra.mxu0 %v591
        %626 = vmatprep.subr.bf16.mxu0 0
        %627 = vmatpush1.bf16.msra.mxu0 %v592
        %628 = vmatprep.subr.bf16.mxu0 0
        %629 = vmatpush1.bf16.msra.mxu0 %v593
        %630 = vmatprep.subr.bf16.mxu0 0
        %631 = vmatpush1.bf16.msra.mxu0 %v594
        %632 = vmatprep.subr.bf16.mxu0 0
        %633 = vmatpush1.bf16.msra.mxu0 %v595
        %634 = vmatprep.subr.bf16.mxu0 0
        %635 = vmatpush1.bf16.msra.mxu0 %v596
        %636 = vmatprep.subr.bf16.mxu0 0
        %637 = vmatpush1.bf16.msra.mxu0 %v597
        %638 = vmatprep.subr.bf16.mxu0 0
        %639 = vmatpush1.bf16.msra.mxu0 %v598
        %640 = vmatprep.subr.bf16.mxu0 0
        %641 = vmatpush1.bf16.msra.mxu0 %v599
        %642 = vmatprep.subr.bf16.mxu0 0
        %643 = vmatpush1.bf16.msra.mxu0 %v600
        %644 = vmatprep.subr.bf16.mxu0 0
        %645 = vmatpush1.bf16.msra.mxu0 %v601
        %646 = vmatprep.subr.bf16.mxu0 0
        %647 = vmatpush1.bf16.msra.mxu0 %v602
        %648 = vmatprep.subr.bf16.mxu0 0
        %649 = vmatpush1.bf16.msra.mxu0 %v603
        %650 = vmatprep.subr.bf16.mxu0 0
        %651 = vmatpush1.bf16.msra.mxu0 %v604
        %652 = vmatprep.subr.bf16.mxu0 0
        %653 = vmatpush1.bf16.msra.mxu0 %v605
        %654 = vmatprep.mubr.bf16.mxu0 %v511
        %655 = vmatmul.mubr.bf16.gmra.mrb[0].mxu0 %v510
        %v656 = vpop.f32.mrb[0].mxu0
        %v657 = vadd.f32 %v484, %v656
        %v658 = vpop.f32.mrb[0].mxu0
        %v659 = vpop.f32.mrb[0].mxu0
        %v660 = vadd.f32 %v484, %v659
        %v661 = vpop.f32.mrb[0].mxu0
        %662 = vmatprep.mubr.bf16.mxu0 %v513
        %663 = vmatmul.mubr.bf16.gmra.mrb[0].mxu0 %v512
        %v664 = vpop.f32.mrb[0].mxu0
        %v665 = vadd.f32 %v484, %v664
        %v666 = vpop.f32.mrb[0].mxu0
        %v667 = vpop.f32.mrb[0].mxu0
        %v668 = vadd.f32 %v484, %v667
        %v669 = vpop.f32.mrb[0].mxu0
        %670 = vmatprep.mubr.bf16.mxu0 %v515
        %671 = vmatmul.mubr.bf16.gmra.mrb[0].mxu0 %v514
        %v672 = vpop.f32.mrb[0].mxu0
        %v673 = vadd.f32 %v484, %v672
        %v674 = vpop.f32.mrb[0].mxu0
        %v675 = vpop.f32.mrb[0].mxu0
        %v676 = vadd.f32 %v484, %v675
        %v677 = vpop.f32.mrb[0].mxu0
        %678 = vmatprep.mubr.bf16.mxu0 %v517
        %679 = vmatmul.mubr.bf16.gmra.mrb[0].mxu0 %v516
        %v680 = vpop.f32.mrb[0].mxu0
        %v681 = vadd.f32 %v484, %v680
        %v682 = vpop.f32.mrb[0].mxu0
        %v683 = vpop.f32.mrb[0].mxu0
        %v684 = vadd.f32 %v484, %v683
        %v685 = vpop.f32.mrb[0].mxu0
        %686 = vdwg.mxu0
        %v687 = vmax.f32 %v657, 0.0
        %v688 = vmax.f32 %v660, 0.0
        %v689 = vmax.f32 %v665, 0.0
        %v690 = vmax.f32 %v668, 0.0
        %v691 = vmax.f32 %v673, 0.0
        %v692 = vmax.f32 %v676, 0.0
        %v693 = vmax.f32 %v681, 0.0
        %v694 = vmax.f32 %v684, 0.0
        %v695 = vpack.c.bf16 %v688, %v687
        %v696 = vpack.c.bf16 %v690, %v689
        %v697 = vpack.c.bf16 %v692, %v691
        %v698 = vpack.c.bf16 %v694, %v693
        %v699 = vld [vmem:[%s3] sm:$0xf]
        %v700 = vld [vmem:[%s3 + $0x4] sm:$0x1]
        %v703 = vunpack.c.l.b16 %v699
        %v704 = vunpack.c.l.b16 %v700
        %v705 = vpack.c.b16 %v704, %v703
        %vm706 = vcmask 523264
        %v708 = vsel %vm706, %v705, 0
        %710 = vmatprep.subr.bf16.mxu0 0
        %711 = vmatpush1.bf16.msra.mxu0 %v695
        %712 = vmatprep.subr.bf16.mxu0 0
        %713 = vmatpush1.bf16.msra.mxu0 %v696
        %714 = vmatprep.subr.bf16.mxu0 0
        %715 = vmatpush1.bf16.msra.mxu0 %v697
        %716 = vmatprep.subr.bf16.mxu0 0
        %717 = vmatpush1.bf16.msra.mxu0 %v698
        %718 = vmatprep.subr.bf16.mxu0 0
        %719 = vmatpush1.bf16.msra.mxu0 0
        %720 = vmatprep.subr.bf16.mxu0 0
        %721 = vmatpush1.bf16.msra.mxu0 0
        %722 = vmatprep.subr.bf16.mxu0 0
        %723 = vmatpush1.bf16.msra.mxu0 0
        %724 = vmatprep.subr.bf16.mxu0 0
        %725 = vmatpush1.bf16.msra.mxu0 0
        %726 = vmatprep.subr.bf16.mxu0 0
        %727 = vmatpush1.bf16.msra.mxu0 0
        %728 = vmatprep.subr.bf16.mxu0 0
        %729 = vmatpush1.bf16.msra.mxu0 0
        %730 = vmatprep.subr.bf16.mxu0 0
        %731 = vmatpush1.bf16.msra.mxu0 0
        %732 = vmatprep.subr.bf16.mxu0 0
        %733 = vmatpush1.bf16.msra.mxu0 0
        %734 = vmatprep.subr.bf16.mxu0 0
        %735 = vmatpush1.bf16.msra.mxu0 0
        %736 = vmatprep.subr.bf16.mxu0 0
        %737 = vmatpush1.bf16.msra.mxu0 0
        %738 = vmatprep.subr.bf16.mxu0 0
        %739 = vmatpush1.bf16.msra.mxu0 0
        %740 = vmatprep.subr.bf16.mxu0 0
        %741 = vmatpush1.bf16.msra.mxu0 0
        %742 = vmatprep.mubr.bf16.mxu0 0
        %743 = vmatmul.mubr.bf16.gmra.mrb[0].mxu0 %v708
        %v744 = vpop.f32.mrb[0].mxu0
        %v745 = vadd.f32 0.0, %v744
        %v746 = vpop.f32.mrb[0].mxu0
        %v747 = vpop.f32.mrb[0].mxu0
        %v748 = vadd.f32 0.0, %v747
        %v749 = vpop.f32.mrb[0].mxu0
        %750 = vdwg.mxu0
        %v751 = vpack.c.bf16 %v748, %v745
        %v752 = vld [vmem:[%s4] sm:$0xf]
        %v753 = vld [vmem:[%s4 + $0x4] sm:$0xf]
        %v754 = vld [vmem:[%s4 + $0x8] sm:$0xf]
        %v755 = vld [vmem:[%s4 + $0xc] sm:$0xf]
        %s756 = scalar_lea.vmem %s3, 8
        %v757 = vld [vmem:[%s756] sm:$0xf]
        %v758 = vld [vmem:[%s756 + $0x4] sm:$0x1]
        %v761 = vunpack.c.l.b16 %v757
        %v762 = vunpack.c.l.b16 %v758
        %v763 = vpack.c.b16 %v762, %v761
        %v765 = vsel %vm706, %v763, 0
        %767 = vmatprep.subr.bf16.mxu0 0
        %768 = vmatpush1.bf16.msra.mxu0 %v695
        %769 = vmatprep.subr.bf16.mxu0 0
        %770 = vmatpush1.bf16.msra.mxu0 %v696
        %771 = vmatprep.subr.bf16.mxu0 0
        %772 = vmatpush1.bf16.msra.mxu0 %v697
        %773 = vmatprep.subr.bf16.mxu0 0
        %774 = vmatpush1.bf16.msra.mxu0 %v698
        %775 = vmatprep.subr.bf16.mxu0 0
        %776 = vmatpush1.bf16.msra.mxu0 0
        %777 = vmatprep.subr.bf16.mxu0 0
        %778 = vmatpush1.bf16.msra.mxu0 0
        %779 = vmatprep.subr.bf16.mxu0 0
        %780 = vmatpush1.bf16.msra.mxu0 0
        %781 = vmatprep.subr.bf16.mxu0 0
        %782 = vmatpush1.bf16.msra.mxu0 0
        %783 = vmatprep.subr.bf16.mxu0 0
        %784 = vmatpush1.bf16.msra.mxu0 0
        %785 = vmatprep.subr.bf16.mxu0 0
        %786 = vmatpush1.bf16.msra.mxu0 0
        %787 = vmatprep.subr.bf16.mxu0 0
        %788 = vmatpush1.bf16.msra.mxu0 0
        %789 = vmatprep.subr.bf16.mxu0 0
        %790 = vmatpush1.bf16.msra.mxu0 0
        %791 = vmatprep.subr.bf16.mxu0 0
        %792 = vmatpush1.bf16.msra.mxu0 0
        %793 = vmatprep.subr.bf16.mxu0 0
        %794 = vmatpush1.bf16.msra.mxu0 0
        %795 = vmatprep.subr.bf16.mxu0 0
        %796 = vmatpush1.bf16.msra.mxu0 0
        %797 = vmatprep.subr.bf16.mxu0 0
        %798 = vmatpush1.bf16.msra.mxu0 0
        %799 = vmatprep.mubr.bf16.mxu0 0
        %800 = vmatmul.mubr.bf16.gmra.mrb[0].mxu0 %v765
        %v801 = vpop.f32.mrb[0].mxu0
        %v802 = vadd.f32 0.0, %v801
        %v803 = vpop.f32.mrb[0].mxu0
        %v804 = vpop.f32.mrb[0].mxu0
        %v805 = vadd.f32 0.0, %v804
        %v806 = vpop.f32.mrb[0].mxu0
        %807 = vdwg.mxu0
        %v808 = vpack.c.bf16 %v805, %v802
        %s809 = scalar_lea.vmem %s4, 16
        %v810 = vld [vmem:[%s809] sm:$0xf]
        %v811 = vld [vmem:[%s809 + $0x4] sm:$0xf]
        %v812 = vld [vmem:[%s809 + $0x8] sm:$0xf]
        %v813 = vld [vmem:[%s809 + $0xc] sm:$0xf]
        %v818 = vunpack.c.l.b16 %v810
        %v819 = vunpack.c.l.b16 %v811
        %v820 = vunpack.c.l.b16 %v812
        %v821 = vunpack.c.l.b16 %v813
        %v822 = vpack.c.b16 %v819, %v818
        %v823 = vpack.c.b16 %v821, %v820
        %vm826 = vcmask 261120
        %v828 = vsel %vm826, %v808, 0
        %830 = vmatprep.subr.bf16.mxu0 0
        %831 = vmatpush1.bf16.msra.mxu0 %v822
        %832 = vmatprep.subr.bf16.mxu0 0
        %833 = vmatpush1.bf16.msra.mxu0 %v823
        %834 = vmatprep.subr.bf16.mxu0 0
        %835 = vmatpush1.bf16.msra.mxu0 0
        %836 = vmatprep.subr.bf16.mxu0 0
        %837 = vmatpush1.bf16.msra.mxu0 0
        %838 = vmatprep.subr.bf16.mxu0 0
        %839 = vmatpush1.bf16.msra.mxu0 0
        %840 = vmatprep.subr.bf16.mxu0 0
        %841 = vmatpush1.bf16.msra.mxu0 0
        %842 = vmatprep.subr.bf16.mxu0 0
        %843 = vmatpush1.bf16.msra.mxu0 0
        %844 = vmatprep.subr.bf16.mxu0 0
        %845 = vmatpush1.bf16.msra.mxu0 0
        %846 = vmatprep.subr.bf16.mxu0 0
        %847 = vmatpush1.bf16.msra.mxu0 0
        %848 = vmatprep.subr.bf16.mxu0 0
        %849 = vmatpush1.bf16.msra.mxu0 0
        %850 = vmatprep.subr.bf16.mxu0 0
        %851 = vmatpush1.bf16.msra.mxu0 0
        %852 = vmatprep.subr.bf16.mxu0 0
        %853 = vmatpush1.bf16.msra.mxu0 0
        %854 = vmatprep.subr.bf16.mxu0 0
        %855 = vmatpush1.bf16.msra.mxu0 0
        %856 = vmatprep.subr.bf16.mxu0 0
        %857 = vmatpush1.bf16.msra.mxu0 0
        %858 = vmatprep.subr.bf16.mxu0 0
        %859 = vmatpush1.bf16.msra.mxu0 0
        %860 = vmatprep.subr.bf16.mxu0 0
        %861 = vmatpush1.bf16.msra.mxu0 0
        %862 = vmatprep.mubr.bf16.mxu0 0
        %863 = vmatmul.mubr.bf16.gmra.mrb[0].mxu0 %v828
        %v864 = vpop.f32.mrb[0].mxu0
        %v865 = vadd.f32 0.0, %v864
        %v866 = vpop.f32.mrb[0].mxu0
        %v867 = vpop.f32.mrb[0].mxu0
        %v868 = vadd.f32 0.0, %v867
        %v869 = vpop.f32.mrb[0].mxu0
        %870 = vdwg.mxu0
        %v875 = vunpack.c.l.b16 %v752
        %v876 = vunpack.c.l.b16 %v753
        %v877 = vunpack.c.l.b16 %v754
        %v878 = vunpack.c.l.b16 %v755
        %v879 = vpack.c.b16 %v876, %v875
        %v880 = vpack.c.b16 %v878, %v877
        %v884 = vsel %vm826, %v751, 0
        %886 = vmatprep.subr.bf16.mxu0 0
        %887 = vmatpush1.bf16.msra.mxu0 %v879
        %888 = vmatprep.subr.bf16.mxu0 0
        %889 = vmatpush1.bf16.msra.mxu0 %v880
        %890 = vmatprep.subr.bf16.mxu0 0
        %891 = vmatpush1.bf16.msra.mxu0 0
        %892 = vmatprep.subr.bf16.mxu0 0
        %893 = vmatpush1.bf16.msra.mxu0 0
        %894 = vmatprep.subr.bf16.mxu0 0
        %895 = vmatpush1.bf16.msra.mxu0 0
        %896 = vmatprep.subr.bf16.mxu0 0
        %897 = vmatpush1.bf16.msra.mxu0 0
        %898 = vmatprep.subr.bf16.mxu0 0
        %899 = vmatpush1.bf16.msra.mxu0 0
        %900 = vmatprep.subr.bf16.mxu0 0
        %901 = vmatpush1.bf16.msra.mxu0 0
        %902 = vmatprep.subr.bf16.mxu0 0
        %903 = vmatpush1.bf16.msra.mxu0 0
        %904 = vmatprep.subr.bf16.mxu0 0
        %905 = vmatpush1.bf16.msra.mxu0 0
        %906 = vmatprep.subr.bf16.mxu0 0
        %907 = vmatpush1.bf16.msra.mxu0 0
        %908 = vmatprep.subr.bf16.mxu0 0
        %909 = vmatpush1.bf16.msra.mxu0 0
        %910 = vmatprep.subr.bf16.mxu0 0
        %911 = vmatpush1.bf16.msra.mxu0 0
        %912 = vmatprep.subr.bf16.mxu0 0
        %913 = vmatpush1.bf16.msra.mxu0 0
        %914 = vmatprep.subr.bf16.mxu0 0
        %915 = vmatpush1.bf16.msra.mxu0 0
        %916 = vmatprep.subr.bf16.mxu0 0
        %917 = vmatpush1.bf16.msra.mxu0 0
        %918 = vmatprep.mubr.bf16.mxu0 0
        %919 = vmatmul.mubr.bf16.gmra.mrb[0].mxu0 %v884
        %v920 = vpop.f32.mrb[0].mxu0
        %v921 = vadd.f32 %v865, %v920
        %v922 = vpop.f32.mrb[0].mxu0
        %v923 = vpop.f32.mrb[0].mxu0
        %v924 = vadd.f32 %v868, %v923
        %v925 = vpop.f32.mrb[0].mxu0
        %926 = vdwg.mxu0
        %s927 = scalar_lea.vmem %s3, 16
        %v928 = vld [vmem:[%s927] sm:$0xf]
        %v929 = vld [vmem:[%s927 + $0x4] sm:$0x1]
        %v932 = vunpack.c.l.b16 %v928
        %v933 = vunpack.c.l.b16 %v929
        %v934 = vpack.c.b16 %v933, %v932
        %v936 = vsel %vm706, %v934, 0
        %938 = vmatprep.subr.bf16.mxu0 0
        %939 = vmatpush1.bf16.msra.mxu0 %v695
        %940 = vmatprep.subr.bf16.mxu0 0
        %941 = vmatpush1.bf16.msra.mxu0 %v696
        %942 = vmatprep.subr.bf16.mxu0 0
        %943 = vmatpush1.bf16.msra.mxu0 %v697
        %944 = vmatprep.subr.bf16.mxu0 0
        %945 = vmatpush1.bf16.msra.mxu0 %v698
        %946 = vmatprep.subr.bf16.mxu0 0
        %947 = vmatpush1.bf16.msra.mxu0 0
        %948 = vmatprep.subr.bf16.mxu0 0
        %949 = vmatpush1.bf16.msra.mxu0 0
        %950 = vmatprep.subr.bf16.mxu0 0
        %951 = vmatpush1.bf16.msra.mxu0 0
        %952 = vmatprep.subr.bf16.mxu0 0
        %953 = vmatpush1.bf16.msra.mxu0 0
        %954 = vmatprep.subr.bf16.mxu0 0
        %955 = vmatpush1.bf16.msra.mxu0 0
        %956 = vmatprep.subr.bf16.mxu0 0
        %957 = vmatpush1.bf16.msra.mxu0 0
        %958 = vmatprep.subr.bf16.mxu0 0
        %959 = vmatpush1.bf16.msra.mxu0 0
        %960 = vmatprep.subr.bf16.mxu0 0
        %961 = vmatpush1.bf16.msra.mxu0 0
        %962 = vmatprep.subr.bf16.mxu0 0
        %963 = vmatpush1.bf16.msra.mxu0 0
        %964 = vmatprep.subr.bf16.mxu0 0
        %965 = vmatpush1.bf16.msra.mxu0 0
        %966 = vmatprep.subr.bf16.mxu0 0
        %967 = vmatpush1.bf16.msra.mxu0 0
        %968 = vmatprep.subr.bf16.mxu0 0
        %969 = vmatpush1.bf16.msra.mxu0 0
        %970 = vmatprep.mubr.bf16.mxu0 0
        %971 = vmatmul.mubr.bf16.gmra.mrb[0].mxu0 %v936
        %v972 = vpop.f32.mrb[0].mxu0
        %v973 = vadd.f32 0.0, %v972
        %v974 = vpop.f32.mrb[0].mxu0
        %v975 = vpop.f32.mrb[0].mxu0
        %v976 = vadd.f32 0.0, %v975
        %v977 = vpop.f32.mrb[0].mxu0
        %978 = vdwg.mxu0
        %v979 = vpack.c.bf16 %v976, %v973
        %s980 = scalar_lea.vmem %s4, 32
        %v981 = vld [vmem:[%s980] sm:$0xf]
        %v982 = vld [vmem:[%s980 + $0x4] sm:$0xf]
        %v983 = vld [vmem:[%s980 + $0x8] sm:$0xf]
        %v984 = vld [vmem:[%s980 + $0xc] sm:$0xf]
        %v989 = vunpack.c.l.b16 %v981
        %v990 = vunpack.c.l.b16 %v982
        %v991 = vunpack.c.l.b16 %v983
        %v992 = vunpack.c.l.b16 %v984
        %v993 = vpack.c.b16 %v990, %v989
        %v994 = vpack.c.b16 %v992, %v991
        %v998 = vsel %vm826, %v979, 0
        %1000 = vmatprep.subr.bf16.mxu0 0
        %1001 = vmatpush1.bf16.msra.mxu0 %v993
        %1002 = vmatprep.subr.bf16.mxu0 0
        %1003 = vmatpush1.bf16.msra.mxu0 %v994
        %1004 = vmatprep.subr.bf16.mxu0 0
        %1005 = vmatpush1.bf16.msra.mxu0 0
        %1006 = vmatprep.subr.bf16.mxu0 0
        %1007 = vmatpush1.bf16.msra.mxu0 0
        %1008 = vmatprep.subr.bf16.mxu0 0
        %1009 = vmatpush1.bf16.msra.mxu0 0
        %1010 = vmatprep.subr.bf16.mxu0 0
        %1011 = vmatpush1.bf16.msra.mxu0 0
        %1012 = vmatprep.subr.bf16.mxu0 0
        %1013 = vmatpush1.bf16.msra.mxu0 0
        %1014 = vmatprep.subr.bf16.mxu0 0
        %1015 = vmatpush1.bf16.msra.mxu0 0
        %1016 = vmatprep.subr.bf16.mxu0 0
        %1017 = vmatpush1.bf16.msra.mxu0 0
        %1018 = vmatprep.subr.bf16.mxu0 0
        %1019 = vmatpush1.bf16.msra.mxu0 0
        %1020 = vmatprep.subr.bf16.mxu0 0
        %1021 = vmatpush1.bf16.msra.mxu0 0
        %1022 = vmatprep.subr.bf16.mxu0 0
        %1023 = vmatpush1.bf16.msra.mxu0 0
        %1024 = vmatprep.subr.bf16.mxu0 0
        %1025 = vmatpush1.bf16.msra.mxu0 0
        %1026 = vmatprep.subr.bf16.mxu0 0
        %1027 = vmatpush1.bf16.msra.mxu0 0
        %1028 = vmatprep.subr.bf16.mxu0 0
        %1029 = vmatpush1.bf16.msra.mxu0 0
        %1030 = vmatprep.subr.bf16.mxu0 0
        %1031 = vmatpush1.bf16.msra.mxu0 0
        %1032 = vmatprep.mubr.bf16.mxu0 0
        %1033 = vmatmul.mubr.bf16.gmra.mrb[0].mxu0 %v998
        %v1034 = vpop.f32.mrb[0].mxu0
        %v1035 = vadd.f32 0.0, %v1034
        %v1036 = vpop.f32.mrb[0].mxu0
        %v1037 = vpop.f32.mrb[0].mxu0
        %v1038 = vadd.f32 0.0, %v1037
        %v1039 = vpop.f32.mrb[0].mxu0
        %1040 = vdwg.mxu0
        %v1041 = vadd.f32 %v921, %v1035
        %v1042 = vadd.f32 %v924, %v1038
        %s1043 = scalar_lea.vmem %s3, 24
        %v1044 = vld [vmem:[%s1043] sm:$0xf]
        %v1045 = vld [vmem:[%s1043 + $0x4] sm:$0x1]
        %v1048 = vunpack.c.l.b16 %v1044
        %v1049 = vunpack.c.l.b16 %v1045
        %v1050 = vpack.c.b16 %v1049, %v1048
        %v1052 = vsel %vm706, %v1050, 0
        %1054 = vmatprep.subr.bf16.mxu0 0
        %1055 = vmatpush1.bf16.msra.mxu0 %v695
        %1056 = vmatprep.subr.bf16.mxu0 0
        %1057 = vmatpush1.bf16.msra.mxu0 %v696
        %1058 = vmatprep.subr.bf16.mxu0 0
        %1059 = vmatpush1.bf16.msra.mxu0 %v697
        %1060 = vmatprep.subr.bf16.mxu0 0
        %1061 = vmatpush1.bf16.msra.mxu0 %v698
        %1062 = vmatprep.subr.bf16.mxu0 0
        %1063 = vmatpush1.bf16.msra.mxu0 0
        %1064 = vmatprep.subr.bf16.mxu0 0
        %1065 = vmatpush1.bf16.msra.mxu0 0
        %1066 = vmatprep.subr.bf16.mxu0 0
        %1067 = vmatpush1.bf16.msra.mxu0 0
        %1068 = vmatprep.subr.bf16.mxu0 0
        %1069 = vmatpush1.bf16.msra.mxu0 0
        %1070 = vmatprep.subr.bf16.mxu0 0
        %1071 = vmatpush1.bf16.msra.mxu0 0
        %1072 = vmatprep.subr.bf16.mxu0 0
        %1073 = vmatpush1.bf16.msra.mxu0 0
        %1074 = vmatprep.subr.bf16.mxu0 0
        %1075 = vmatpush1.bf16.msra.mxu0 0
        %1076 = vmatprep.subr.bf16.mxu0 0
        %1077 = vmatpush1.bf16.msra.mxu0 0
        %1078 = vmatprep.subr.bf16.mxu0 0
        %1079 = vmatpush1.bf16.msra.mxu0 0
        %1080 = vmatprep.subr.bf16.mxu0 0
        %1081 = vmatpush1.bf16.msra.mxu0 0
        %1082 = vmatprep.subr.bf16.mxu0 0
        %1083 = vmatpush1.bf16.msra.mxu0 0
        %1084 = vmatprep.subr.bf16.mxu0 0
        %1085 = vmatpush1.bf16.msra.mxu0 0
        %1086 = vmatprep.mubr.bf16.mxu0 0
        %1087 = vmatmul.mubr.bf16.gmra.mrb[0].mxu0 %v1052
        %v1088 = vpop.f32.mrb[0].mxu0
        %v1089 = vadd.f32 0.0, %v1088
        %v1090 = vpop.f32.mrb[0].mxu0
        %v1091 = vpop.f32.mrb[0].mxu0
        %v1092 = vadd.f32 0.0, %v1091
        %v1093 = vpop.f32.mrb[0].mxu0
        %1094 = vdwg.mxu0
        %v1095 = vpack.c.bf16 %v1092, %v1089
        %s1096 = scalar_lea.vmem %s4, 48
        %v1097 = vld [vmem:[%s1096] sm:$0xf]
        %v1098 = vld [vmem:[%s1096 + $0x4] sm:$0xf]
        %v1099 = vld [vmem:[%s1096 + $0x8] sm:$0xf]
        %v1100 = vld [vmem:[%s1096 + $0xc] sm:$0xf]
        %v1105 = vunpack.c.l.b16 %v1097
        %v1106 = vunpack.c.l.b16 %v1098
        %v1107 = vunpack.c.l.b16 %v1099
        %v1108 = vunpack.c.l.b16 %v1100
        %v1109 = vpack.c.b16 %v1106, %v1105
        %v1110 = vpack.c.b16 %v1108, %v1107
        %v1114 = vsel %vm826, %v1095, 0
        %1116 = vmatprep.subr.bf16.mxu0 0
        %1117 = vmatpush1.bf16.msra.mxu0 %v1109
        %1118 = vmatprep.subr.bf16.mxu0 0
        %1119 = vmatpush1.bf16.msra.mxu0 %v1110
        %1120 = vmatprep.subr.bf16.mxu0 0
        %1121 = vmatpush1.bf16.msra.mxu0 0
        %1122 = vmatprep.subr.bf16.mxu0 0
        %1123 = vmatpush1.bf16.msra.mxu0 0
        %1124 = vmatprep.subr.bf16.mxu0 0
        %1125 = vmatpush1.bf16.msra.mxu0 0
        %1126 = vmatprep.subr.bf16.mxu0 0
        %1127 = vmatpush1.bf16.msra.mxu0 0
        %1128 = vmatprep.subr.bf16.mxu0 0
        %1129 = vmatpush1.bf16.msra.mxu0 0
        %1130 = vmatprep.subr.bf16.mxu0 0
        %1131 = vmatpush1.bf16.msra.mxu0 0
        %1132 = vmatprep.subr.bf16.mxu0 0
        %1133 = vmatpush1.bf16.msra.mxu0 0
        %1134 = vmatprep.subr.bf16.mxu0 0
        %1135 = vmatpush1.bf16.msra.mxu0 0
        %1136 = vmatprep.subr.bf16.mxu0 0
        %1137 = vmatpush1.bf16.msra.mxu0 0
        %1138 = vmatprep.subr.bf16.mxu0 0
        %1139 = vmatpush1.bf16.msra.mxu0 0
        %1140 = vmatprep.subr.bf16.mxu0 0
        %1141 = vmatpush1.bf16.msra.mxu0 0
        %1142 = vmatprep.subr.bf16.mxu0 0
        %1143 = vmatpush1.bf16.msra.mxu0 0
        %1144 = vmatprep.subr.bf16.mxu0 0
        %1145 = vmatpush1.bf16.msra.mxu0 0
        %1146 = vmatprep.subr.bf16.mxu0 0
        %1147 = vmatpush1.bf16.msra.mxu0 0
        %1148 = vmatprep.mubr.bf16.mxu0 0
        %1149 = vmatmul.mubr.bf16.gmra.mrb[0].mxu0 %v1114
        %v1150 = vpop.f32.mrb[0].mxu0
        %v1151 = vadd.f32 0.0, %v1150
        %v1152 = vpop.f32.mrb[0].mxu0
        %v1153 = vpop.f32.mrb[0].mxu0
        %v1154 = vadd.f32 0.0, %v1153
        %v1155 = vpop.f32.mrb[0].mxu0
        %1156 = vdwg.mxu0
        %v1157 = vadd.f32 %v1041, %v1151
        %v1158 = vadd.f32 %v1042, %v1154
        %s1159 = scalar_lea.vmem %s3, 32
        %v1160 = vld [vmem:[%s1159] sm:$0xf]
        %v1161 = vld [vmem:[%s1159 + $0x4] sm:$0x1]
        %v1164 = vunpack.c.l.b16 %v1160
        %v1165 = vunpack.c.l.b16 %v1161
        %v1166 = vpack.c.b16 %v1165, %v1164
        %v1168 = vsel %vm706, %v1166, 0
        %1170 = vmatprep.subr.bf16.mxu0 0
        %1171 = vmatpush1.bf16.msra.mxu0 %v695
        %1172 = vmatprep.subr.bf16.mxu0 0
        %1173 = vmatpush1.bf16.msra.mxu0 %v696
        %1174 = vmatprep.subr.bf16.mxu0 0
        %1175 = vmatpush1.bf16.msra.mxu0 %v697
        %1176 = vmatprep.subr.bf16.mxu0 0
        %1177 = vmatpush1.bf16.msra.mxu0 %v698
        %1178 = vmatprep.subr.bf16.mxu0 0
        %1179 = vmatpush1.bf16.msra.mxu0 0
        %1180 = vmatprep.subr.bf16.mxu0 0
        %1181 = vmatpush1.bf16.msra.mxu0 0
        %1182 = vmatprep.subr.bf16.mxu0 0
        %1183 = vmatpush1.bf16.msra.mxu0 0
        %1184 = vmatprep.subr.bf16.mxu0 0
        %1185 = vmatpush1.bf16.msra.mxu0 0
        %1186 = vmatprep.subr.bf16.mxu0 0
        %1187 = vmatpush1.bf16.msra.mxu0 0
        %1188 = vmatprep.subr.bf16.mxu0 0
        %1189 = vmatpush1.bf16.msra.mxu0 0
        %1190 = vmatprep.subr.bf16.mxu0 0
        %1191 = vmatpush1.bf16.msra.mxu0 0
        %1192 = vmatprep.subr.bf16.mxu0 0
        %1193 = vmatpush1.bf16.msra.mxu0 0
        %1194 = vmatprep.subr.bf16.mxu0 0
        %1195 = vmatpush1.bf16.msra.mxu0 0
        %1196 = vmatprep.subr.bf16.mxu0 0
        %1197 = vmatpush1.bf16.msra.mxu0 0
        %1198 = vmatprep.subr.bf16.mxu0 0
        %1199 = vmatpush1.bf16.msra.mxu0 0
        %1200 = vmatprep.subr.bf16.mxu0 0
        %1201 = vmatpush1.bf16.msra.mxu0 0
        %1202 = vmatprep.mubr.bf16.mxu0 0
        %1203 = vmatmul.mubr.bf16.gmra.mrb[0].mxu0 %v1168
        %v1204 = vpop.f32.mrb[0].mxu0
        %v1205 = vadd.f32 0.0, %v1204
        %v1206 = vpop.f32.mrb[0].mxu0
        %v1207 = vpop.f32.mrb[0].mxu0
        %v1208 = vadd.f32 0.0, %v1207
        %v1209 = vpop.f32.mrb[0].mxu0
        %1210 = vdwg.mxu0
        %v1211 = vpack.c.bf16 %v1208, %v1205
        %s1212 = scalar_lea.vmem %s4, 64
        %v1213 = vld [vmem:[%s1212] sm:$0xf]
        %v1214 = vld [vmem:[%s1212 + $0x4] sm:$0xf]
        %v1215 = vld [vmem:[%s1212 + $0x8] sm:$0xf]
        %v1216 = vld [vmem:[%s1212 + $0xc] sm:$0xf]
        %v1221 = vunpack.c.l.b16 %v1213
        %v1222 = vunpack.c.l.b16 %v1214
        %v1223 = vunpack.c.l.b16 %v1215
        %v1224 = vunpack.c.l.b16 %v1216
        %v1225 = vpack.c.b16 %v1222, %v1221
        %v1226 = vpack.c.b16 %v1224, %v1223
        %v1230 = vsel %vm826, %v1211, 0
        %1232 = vmatprep.subr.bf16.mxu0 0
        %1233 = vmatpush1.bf16.msra.mxu0 %v1225
        %1234 = vmatprep.subr.bf16.mxu0 0
        %1235 = vmatpush1.bf16.msra.mxu0 %v1226
        %1236 = vmatprep.subr.bf16.mxu0 0
        %1237 = vmatpush1.bf16.msra.mxu0 0
        %1238 = vmatprep.subr.bf16.mxu0 0
        %1239 = vmatpush1.bf16.msra.mxu0 0
        %1240 = vmatprep.subr.bf16.mxu0 0
        %1241 = vmatpush1.bf16.msra.mxu0 0
        %1242 = vmatprep.subr.bf16.mxu0 0
        %1243 = vmatpush1.bf16.msra.mxu0 0
        %1244 = vmatprep.subr.bf16.mxu0 0
        %1245 = vmatpush1.bf16.msra.mxu0 0
        %1246 = vmatprep.subr.bf16.mxu0 0
        %1247 = vmatpush1.bf16.msra.mxu0 0
        %1248 = vmatprep.subr.bf16.mxu0 0
        %1249 = vmatpush1.bf16.msra.mxu0 0
        %1250 = vmatprep.subr.bf16.mxu0 0
        %1251 = vmatpush1.bf16.msra.mxu0 0
        %1252 = vmatprep.subr.bf16.mxu0 0
        %1253 = vmatpush1.bf16.msra.mxu0 0
        %1254 = vmatprep.subr.bf16.mxu0 0
        %1255 = vmatpush1.bf16.msra.mxu0 0
        %1256 = vmatprep.subr.bf16.mxu0 0
        %1257 = vmatpush1.bf16.msra.mxu0 0
        %1258 = vmatprep.subr.bf16.mxu0 0
        %1259 = vmatpush1.bf16.msra.mxu0 0
        %1260 = vmatprep.subr.bf16.mxu0 0
        %1261 = vmatpush1.bf16.msra.mxu0 0
        %1262 = vmatprep.subr.bf16.mxu0 0
        %1263 = vmatpush1.bf16.msra.mxu0 0
        %1264 = vmatprep.mubr.bf16.mxu0 0
        %1265 = vmatmul.mubr.bf16.gmra.mrb[0].mxu0 %v1230
        %v1266 = vpop.f32.mrb[0].mxu0
        %v1267 = vadd.f32 0.0, %v1266
        %v1268 = vpop.f32.mrb[0].mxu0
        %v1269 = vpop.f32.mrb[0].mxu0
        %v1270 = vadd.f32 0.0, %v1269
        %v1271 = vpop.f32.mrb[0].mxu0
        %1272 = vdwg.mxu0
        %v1273 = vadd.f32 %v1157, %v1267
        %v1274 = vadd.f32 %v1158, %v1270
        %s1275 = scalar_lea.vmem %s3, 40
        %v1276 = vld [vmem:[%s1275] sm:$0xf]
        %v1277 = vld [vmem:[%s1275 + $0x4] sm:$0x1]
        %v1280 = vunpack.c.l.b16 %v1276
        %v1281 = vunpack.c.l.b16 %v1277
        %v1282 = vpack.c.b16 %v1281, %v1280
        %v1284 = vsel %vm706, %v1282, 0
        %1286 = vmatprep.subr.bf16.mxu0 0
        %1287 = vmatpush1.bf16.msra.mxu0 %v695
        %1288 = vmatprep.subr.bf16.mxu0 0
        %1289 = vmatpush1.bf16.msra.mxu0 %v696
        %1290 = vmatprep.subr.bf16.mxu0 0
        %1291 = vmatpush1.bf16.msra.mxu0 %v697
        %1292 = vmatprep.subr.bf16.mxu0 0
        %1293 = vmatpush1.bf16.msra.mxu0 %v698
        %1294 = vmatprep.subr.bf16.mxu0 0
        %1295 = vmatpush1.bf16.msra.mxu0 0
        %1296 = vmatprep.subr.bf16.mxu0 0
        %1297 = vmatpush1.bf16.msra.mxu0 0
        %1298 = vmatprep.subr.bf16.mxu0 0
        %1299 = vmatpush1.bf16.msra.mxu0 0
        %1300 = vmatprep.subr.bf16.mxu0 0
        %1301 = vmatpush1.bf16.msra.mxu0 0
        %1302 = vmatprep.subr.bf16.mxu0 0
        %1303 = vmatpush1.bf16.msra.mxu0 0
        %1304 = vmatprep.subr.bf16.mxu0 0
        %1305 = vmatpush1.bf16.msra.mxu0 0
        %1306 = vmatprep.subr.bf16.mxu0 0
        %1307 = vmatpush1.bf16.msra.mxu0 0
        %1308 = vmatprep.subr.bf16.mxu0 0
        %1309 = vmatpush1.bf16.msra.mxu0 0
        %1310 = vmatprep.subr.bf16.mxu0 0
        %1311 = vmatpush1.bf16.msra.mxu0 0
        %1312 = vmatprep.subr.bf16.mxu0 0
        %1313 = vmatpush1.bf16.msra.mxu0 0
        %1314 = vmatprep.subr.bf16.mxu0 0
        %1315 = vmatpush1.bf16.msra.mxu0 0
        %1316 = vmatprep.subr.bf16.mxu0 0
        %1317 = vmatpush1.bf16.msra.mxu0 0
        %1318 = vmatprep.mubr.bf16.mxu0 0
        %1319 = vmatmul.mubr.bf16.gmra.mrb[0].mxu0 %v1284
        %v1320 = vpop.f32.mrb[0].mxu0
        %v1321 = vadd.f32 0.0, %v1320
        %v1322 = vpop.f32.mrb[0].mxu0
        %v1323 = vpop.f32.mrb[0].mxu0
        %v1324 = vadd.f32 0.0, %v1323
        %v1325 = vpop.f32.mrb[0].mxu0
        %1326 = vdwg.mxu0
        %v1327 = vpack.c.bf16 %v1324, %v1321
        %s1328 = scalar_lea.vmem %s4, 80
        %v1329 = vld [vmem:[%s1328] sm:$0xf]
        %v1330 = vld [vmem:[%s1328 + $0x4] sm:$0xf]
        %v1331 = vld [vmem:[%s1328 + $0x8] sm:$0xf]
        %v1332 = vld [vmem:[%s1328 + $0xc] sm:$0xf]
        %v1337 = vunpack.c.l.b16 %v1329
        %v1338 = vunpack.c.l.b16 %v1330
        %v1339 = vunpack.c.l.b16 %v1331
        %v1340 = vunpack.c.l.b16 %v1332
        %v1341 = vpack.c.b16 %v1338, %v1337
        %v1342 = vpack.c.b16 %v1340, %v1339
        %v1346 = vsel %vm826, %v1327, 0
        %1348 = vmatprep.subr.bf16.mxu0 0
        %1349 = vmatpush1.bf16.msra.mxu0 %v1341
        %1350 = vmatprep.subr.bf16.mxu0 0
        %1351 = vmatpush1.bf16.msra.mxu0 %v1342
        %1352 = vmatprep.subr.bf16.mxu0 0
        %1353 = vmatpush1.bf16.msra.mxu0 0
        %1354 = vmatprep.subr.bf16.mxu0 0
        %1355 = vmatpush1.bf16.msra.mxu0 0
        %1356 = vmatprep.subr.bf16.mxu0 0
        %1357 = vmatpush1.bf16.msra.mxu0 0
        %1358 = vmatprep.subr.bf16.mxu0 0
        %1359 = vmatpush1.bf16.msra.mxu0 0
        %1360 = vmatprep.subr.bf16.mxu0 0
        %1361 = vmatpush1.bf16.msra.mxu0 0
        %1362 = vmatprep.subr.bf16.mxu0 0
        %1363 = vmatpush1.bf16.msra.mxu0 0
        %1364 = vmatprep.subr.bf16.mxu0 0
        %1365 = vmatpush1.bf16.msra.mxu0 0
        %1366 = vmatprep.subr.bf16.mxu0 0
        %1367 = vmatpush1.bf16.msra.mxu0 0
        %1368 = vmatprep.subr.bf16.mxu0 0
        %1369 = vmatpush1.bf16.msra.mxu0 0
        %1370 = vmatprep.subr.bf16.mxu0 0
        %1371 = vmatpush1.bf16.msra.mxu0 0
        %1372 = vmatprep.subr.bf16.mxu0 0
        %1373 = vmatpush1.bf16.msra.mxu0 0
        %1374 = vmatprep.subr.bf16.mxu0 0
        %1375 = vmatpush1.bf16.msra.mxu0 0
        %1376 = vmatprep.subr.bf16.mxu0 0
        %1377 = vmatpush1.bf16.msra.mxu0 0
        %1378 = vmatprep.subr.bf16.mxu0 0
        %1379 = vmatpush1.bf16.msra.mxu0 0
        %1380 = vmatprep.mubr.bf16.mxu0 0
        %1381 = vmatmul.mubr.bf16.gmra.mrb[0].mxu0 %v1346
        %v1382 = vpop.f32.mrb[0].mxu0
        %v1383 = vadd.f32 0.0, %v1382
        %v1384 = vpop.f32.mrb[0].mxu0
        %v1385 = vpop.f32.mrb[0].mxu0
        %v1386 = vadd.f32 0.0, %v1385
        %v1387 = vpop.f32.mrb[0].mxu0
        %1388 = vdwg.mxu0
        %v1389 = vadd.f32 %v1273, %v1383
        %v1390 = vadd.f32 %v1274, %v1386
        %s1391 = scalar_lea.vmem %s3, 48
        %v1392 = vld [vmem:[%s1391] sm:$0xf]
        %v1393 = vld [vmem:[%s1391 + $0x4] sm:$0x1]
        %v1396 = vunpack.c.l.b16 %v1392
        %v1397 = vunpack.c.l.b16 %v1393
        %v1398 = vpack.c.b16 %v1397, %v1396
        %v1400 = vsel %vm706, %v1398, 0
        %1402 = vmatprep.subr.bf16.mxu0 0
        %1403 = vmatpush1.bf16.msra.mxu0 %v695
        %1404 = vmatprep.subr.bf16.mxu0 0
        %1405 = vmatpush1.bf16.msra.mxu0 %v696
        %1406 = vmatprep.subr.bf16.mxu0 0
        %1407 = vmatpush1.bf16.msra.mxu0 %v697
        %1408 = vmatprep.subr.bf16.mxu0 0
        %1409 = vmatpush1.bf16.msra.mxu0 %v698
        %1410 = vmatprep.subr.bf16.mxu0 0
        %1411 = vmatpush1.bf16.msra.mxu0 0
        %1412 = vmatprep.subr.bf16.mxu0 0
        %1413 = vmatpush1.bf16.msra.mxu0 0
        %1414 = vmatprep.subr.bf16.mxu0 0
        %1415 = vmatpush1.bf16.msra.mxu0 0
        %1416 = vmatprep.subr.bf16.mxu0 0
        %1417 = vmatpush1.bf16.msra.mxu0 0
        %1418 = vmatprep.subr.bf16.mxu0 0
        %1419 = vmatpush1.bf16.msra.mxu0 0
        %1420 = vmatprep.subr.bf16.mxu0 0
        %1421 = vmatpush1.bf16.msra.mxu0 0
        %1422 = vmatprep.subr.bf16.mxu0 0
        %1423 = vmatpush1.bf16.msra.mxu0 0
        %1424 = vmatprep.subr.bf16.mxu0 0
        %1425 = vmatpush1.bf16.msra.mxu0 0
        %1426 = vmatprep.subr.bf16.mxu0 0
        %1427 = vmatpush1.bf16.msra.mxu0 0
        %1428 = vmatprep.subr.bf16.mxu0 0
        %1429 = vmatpush1.bf16.msra.mxu0 0
        %1430 = vmatprep.subr.bf16.mxu0 0
        %1431 = vmatpush1.bf16.msra.mxu0 0
        %1432 = vmatprep.subr.bf16.mxu0 0
        %1433 = vmatpush1.bf16.msra.mxu0 0
        %1434 = vmatprep.mubr.bf16.mxu0 0
        %1435 = vmatmul.mubr.bf16.gmra.mrb[0].mxu0 %v1400
        %v1436 = vpop.f32.mrb[0].mxu0
        %v1437 = vadd.f32 0.0, %v1436
        %v1438 = vpop.f32.mrb[0].mxu0
        %v1439 = vpop.f32.mrb[0].mxu0
        %v1440 = vadd.f32 0.0, %v1439
        %v1441 = vpop.f32.mrb[0].mxu0
        %1442 = vdwg.mxu0
        %v1443 = vpack.c.bf16 %v1440, %v1437
        %s1444 = scalar_lea.vmem %s4, 96
        %v1445 = vld [vmem:[%s1444] sm:$0xf]
        %v1446 = vld [vmem:[%s1444 + $0x4] sm:$0xf]
        %v1447 = vld [vmem:[%s1444 + $0x8] sm:$0xf]
        %v1448 = vld [vmem:[%s1444 + $0xc] sm:$0xf]
        %v1453 = vunpack.c.l.b16 %v1445
        %v1454 = vunpack.c.l.b16 %v1446
        %v1455 = vunpack.c.l.b16 %v1447
        %v1456 = vunpack.c.l.b16 %v1448
        %v1457 = vpack.c.b16 %v1454, %v1453
        %v1458 = vpack.c.b16 %v1456, %v1455
        %v1462 = vsel %vm826, %v1443, 0
        %1464 = vmatprep.subr.bf16.mxu0 0
        %1465 = vmatpush1.bf16.msra.mxu0 %v1457
        %1466 = vmatprep.subr.bf16.mxu0 0
        %1467 = vmatpush1.bf16.msra.mxu0 %v1458
        %1468 = vmatprep.subr.bf16.mxu0 0
        %1469 = vmatpush1.bf16.msra.mxu0 0
        %1470 = vmatprep.subr.bf16.mxu0 0
        %1471 = vmatpush1.bf16.msra.mxu0 0
        %1472 = vmatprep.subr.bf16.mxu0 0
        %1473 = vmatpush1.bf16.msra.mxu0 0
        %1474 = vmatprep.subr.bf16.mxu0 0
        %1475 = vmatpush1.bf16.msra.mxu0 0
        %1476 = vmatprep.subr.bf16.mxu0 0
        %1477 = vmatpush1.bf16.msra.mxu0 0
        %1478 = vmatprep.subr.bf16.mxu0 0
        %1479 = vmatpush1.bf16.msra.mxu0 0
        %1480 = vmatprep.subr.bf16.mxu0 0
        %1481 = vmatpush1.bf16.msra.mxu0 0
        %1482 = vmatprep.subr.bf16.mxu0 0
        %1483 = vmatpush1.bf16.msra.mxu0 0
        %1484 = vmatprep.subr.bf16.mxu0 0
        %1485 = vmatpush1.bf16.msra.mxu0 0
        %1486 = vmatprep.subr.bf16.mxu0 0
        %1487 = vmatpush1.bf16.msra.mxu0 0
        %1488 = vmatprep.subr.bf16.mxu0 0
        %1489 = vmatpush1.bf16.msra.mxu0 0
        %1490 = vmatprep.subr.bf16.mxu0 0
        %1491 = vmatpush1.bf16.msra.mxu0 0
        %1492 = vmatprep.subr.bf16.mxu0 0
        %1493 = vmatpush1.bf16.msra.mxu0 0
        %1494 = vmatprep.subr.bf16.mxu0 0
        %1495 = vmatpush1.bf16.msra.mxu0 0
        %1496 = vmatprep.mubr.bf16.mxu0 0
        %1497 = vmatmul.mubr.bf16.gmra.mrb[0].mxu0 %v1462
        %v1498 = vpop.f32.mrb[0].mxu0
        %v1499 = vadd.f32 0.0, %v1498
        %v1500 = vpop.f32.mrb[0].mxu0
        %v1501 = vpop.f32.mrb[0].mxu0
        %v1502 = vadd.f32 0.0, %v1501
        %v1503 = vpop.f32.mrb[0].mxu0
        %1504 = vdwg.mxu0
        %v1505 = vadd.f32 %v1389, %v1499
        %v1506 = vadd.f32 %v1390, %v1502
        %s1507 = scalar_lea.vmem %s3, 56
        %v1508 = vld [vmem:[%s1507] sm:$0xf]
        %v1509 = vld [vmem:[%s1507 + $0x4] sm:$0x1]
        %v1512 = vunpack.c.l.b16 %v1508
        %v1513 = vunpack.c.l.b16 %v1509
        %v1514 = vpack.c.b16 %v1513, %v1512
        %v1516 = vsel %vm706, %v1514, 0
        %1518 = vmatprep.subr.bf16.mxu0 0
        %1519 = vmatpush1.bf16.msra.mxu0 %v695
        %1520 = vmatprep.subr.bf16.mxu0 0
        %1521 = vmatpush1.bf16.msra.mxu0 %v696
        %1522 = vmatprep.subr.bf16.mxu0 0
        %1523 = vmatpush1.bf16.msra.mxu0 %v697
        %1524 = vmatprep.subr.bf16.mxu0 0
        %1525 = vmatpush1.bf16.msra.mxu0 %v698
        %1526 = vmatprep.subr.bf16.mxu0 0
        %1527 = vmatpush1.bf16.msra.mxu0 0
        %1528 = vmatprep.subr.bf16.mxu0 0
        %1529 = vmatpush1.bf16.msra.mxu0 0
        %1530 = vmatprep.subr.bf16.mxu0 0
        %1531 = vmatpush1.bf16.msra.mxu0 0
        %1532 = vmatprep.subr.bf16.mxu0 0
        %1533 = vmatpush1.bf16.msra.mxu0 0
        %1534 = vmatprep.subr.bf16.mxu0 0
        %1535 = vmatpush1.bf16.msra.mxu0 0
        %1536 = vmatprep.subr.bf16.mxu0 0
        %1537 = vmatpush1.bf16.msra.mxu0 0
        %1538 = vmatprep.subr.bf16.mxu0 0
        %1539 = vmatpush1.bf16.msra.mxu0 0
        %1540 = vmatprep.subr.bf16.mxu0 0
        %1541 = vmatpush1.bf16.msra.mxu0 0
        %1542 = vmatprep.subr.bf16.mxu0 0
        %1543 = vmatpush1.bf16.msra.mxu0 0
        %1544 = vmatprep.subr.bf16.mxu0 0
        %1545 = vmatpush1.bf16.msra.mxu0 0
        %1546 = vmatprep.subr.bf16.mxu0 0
        %1547 = vmatpush1.bf16.msra.mxu0 0
        %1548 = vmatprep.subr.bf16.mxu0 0
        %1549 = vmatpush1.bf16.msra.mxu0 0
        %1550 = vmatprep.mubr.bf16.mxu0 0
        %1551 = vmatmul.mubr.bf16.gmra.mrb[0].mxu0 %v1516
        %v1552 = vpop.f32.mrb[0].mxu0
        %v1553 = vadd.f32 0.0, %v1552
        %v1554 = vpop.f32.mrb[0].mxu0
        %v1555 = vpop.f32.mrb[0].mxu0
        %v1556 = vadd.f32 0.0, %v1555
        %v1557 = vpop.f32.mrb[0].mxu0
        %1558 = vdwg.mxu0
        %v1559 = vpack.c.bf16 %v1556, %v1553
        %s1560 = scalar_lea.vmem %s4, 112
        %v1561 = vld [vmem:[%s1560] sm:$0xf]
        %v1562 = vld [vmem:[%s1560 + $0x4] sm:$0xf]
        %v1563 = vld [vmem:[%s1560 + $0x8] sm:$0xf]
        %v1564 = vld [vmem:[%s1560 + $0xc] sm:$0xf]
        %v1569 = vunpack.c.l.b16 %v1561
        %v1570 = vunpack.c.l.b16 %v1562
        %v1571 = vunpack.c.l.b16 %v1563
        %v1572 = vunpack.c.l.b16 %v1564
        %v1573 = vpack.c.b16 %v1570, %v1569
        %v1574 = vpack.c.b16 %v1572, %v1571
        %v1578 = vsel %vm826, %v1559, 0
        %1580 = vmatprep.subr.bf16.mxu0 0
        %1581 = vmatpush1.bf16.msra.mxu0 %v1573
        %1582 = vmatprep.subr.bf16.mxu0 0
        %1583 = vmatpush1.bf16.msra.mxu0 %v1574
        %1584 = vmatprep.subr.bf16.mxu0 0
        %1585 = vmatpush1.bf16.msra.mxu0 0
        %1586 = vmatprep.subr.bf16.mxu0 0
        %1587 = vmatpush1.bf16.msra.mxu0 0
        %1588 = vmatprep.subr.bf16.mxu0 0
        %1589 = vmatpush1.bf16.msra.mxu0 0
        %1590 = vmatprep.subr.bf16.mxu0 0
        %1591 = vmatpush1.bf16.msra.mxu0 0
        %1592 = vmatprep.subr.bf16.mxu0 0
        %1593 = vmatpush1.bf16.msra.mxu0 0
        %1594 = vmatprep.subr.bf16.mxu0 0
        %1595 = vmatpush1.bf16.msra.mxu0 0
        %1596 = vmatprep.subr.bf16.mxu0 0
        %1597 = vmatpush1.bf16.msra.mxu0 0
        %1598 = vmatprep.subr.bf16.mxu0 0
        %1599 = vmatpush1.bf16.msra.mxu0 0
        %1600 = vmatprep.subr.bf16.mxu0 0
        %1601 = vmatpush1.bf16.msra.mxu0 0
        %1602 = vmatprep.subr.bf16.mxu0 0
        %1603 = vmatpush1.bf16.msra.mxu0 0
        %1604 = vmatprep.subr.bf16.mxu0 0
        %1605 = vmatpush1.bf16.msra.mxu0 0
        %1606 = vmatprep.subr.bf16.mxu0 0
        %1607 = vmatpush1.bf16.msra.mxu0 0
        %1608 = vmatprep.subr.bf16.mxu0 0
        %1609 = vmatpush1.bf16.msra.mxu0 0
        %1610 = vmatprep.subr.bf16.mxu0 0
        %1611 = vmatpush1.bf16.msra.mxu0 0
        %1612 = vmatprep.mubr.bf16.mxu0 0
        %1613 = vmatmul.mubr.bf16.gmra.mrb[0].mxu0 %v1578
        %v1614 = vpop.f32.mrb[0].mxu0
        %v1615 = vadd.f32 0.0, %v1614
        %v1616 = vpop.f32.mrb[0].mxu0
        %v1617 = vpop.f32.mrb[0].mxu0
        %v1618 = vadd.f32 0.0, %v1617
        %v1619 = vpop.f32.mrb[0].mxu0
        %1620 = vdwg.mxu0
        %v1621 = vadd.f32 %v1505, %v1615
        %v1622 = vadd.f32 %v1506, %v1618
        %s1623 = scalar_lea.vmem %s3, 64
        %v1624 = vld [vmem:[%s1623] sm:$0xf]
        %v1625 = vld [vmem:[%s1623 + $0x4] sm:$0x1]
        %v1628 = vunpack.c.l.b16 %v1624
        %v1629 = vunpack.c.l.b16 %v1625
        %v1630 = vpack.c.b16 %v1629, %v1628
        %v1632 = vsel %vm706, %v1630, 0
        %1634 = vmatprep.subr.bf16.mxu0 0
        %1635 = vmatpush1.bf16.msra.mxu0 %v695
        %1636 = vmatprep.subr.bf16.mxu0 0
        %1637 = vmatpush1.bf16.msra.mxu0 %v696
        %1638 = vmatprep.subr.bf16.mxu0 0
        %1639 = vmatpush1.bf16.msra.mxu0 %v697
        %1640 = vmatprep.subr.bf16.mxu0 0
        %1641 = vmatpush1.bf16.msra.mxu0 %v698
        %1642 = vmatprep.subr.bf16.mxu0 0
        %1643 = vmatpush1.bf16.msra.mxu0 0
        %1644 = vmatprep.subr.bf16.mxu0 0
        %1645 = vmatpush1.bf16.msra.mxu0 0
        %1646 = vmatprep.subr.bf16.mxu0 0
        %1647 = vmatpush1.bf16.msra.mxu0 0
        %1648 = vmatprep.subr.bf16.mxu0 0
        %1649 = vmatpush1.bf16.msra.mxu0 0
        %1650 = vmatprep.subr.bf16.mxu0 0
        %1651 = vmatpush1.bf16.msra.mxu0 0
        %1652 = vmatprep.subr.bf16.mxu0 0
        %1653 = vmatpush1.bf16.msra.mxu0 0
        %1654 = vmatprep.subr.bf16.mxu0 0
        %1655 = vmatpush1.bf16.msra.mxu0 0
        %1656 = vmatprep.subr.bf16.mxu0 0
        %1657 = vmatpush1.bf16.msra.mxu0 0
        %1658 = vmatprep.subr.bf16.mxu0 0
        %1659 = vmatpush1.bf16.msra.mxu0 0
        %1660 = vmatprep.subr.bf16.mxu0 0
        %1661 = vmatpush1.bf16.msra.mxu0 0
        %1662 = vmatprep.subr.bf16.mxu0 0
        %1663 = vmatpush1.bf16.msra.mxu0 0
        %1664 = vmatprep.subr.bf16.mxu0 0
        %1665 = vmatpush1.bf16.msra.mxu0 0
        %1666 = vmatprep.mubr.bf16.mxu0 0
        %1667 = vmatmul.mubr.bf16.gmra.mrb[0].mxu0 %v1632
        %v1668 = vpop.f32.mrb[0].mxu0
        %v1669 = vadd.f32 0.0, %v1668
        %v1670 = vpop.f32.mrb[0].mxu0
        %v1671 = vpop.f32.mrb[0].mxu0
        %v1672 = vadd.f32 0.0, %v1671
        %v1673 = vpop.f32.mrb[0].mxu0
        %1674 = vdwg.mxu0
        %v1675 = vpack.c.bf16 %v1672, %v1669
        %s1676 = scalar_lea.vmem %s4, 128
        %v1677 = vld [vmem:[%s1676] sm:$0xf]
        %v1678 = vld [vmem:[%s1676 + $0x4] sm:$0xf]
        %v1679 = vld [vmem:[%s1676 + $0x8] sm:$0xf]
        %v1680 = vld [vmem:[%s1676 + $0xc] sm:$0xf]
        %v1685 = vunpack.c.l.b16 %v1677
        %v1686 = vunpack.c.l.b16 %v1678
        %v1687 = vunpack.c.l.b16 %v1679
        %v1688 = vunpack.c.l.b16 %v1680
        %v1689 = vpack.c.b16 %v1686, %v1685
        %v1690 = vpack.c.b16 %v1688, %v1687
        %v1694 = vsel %vm826, %v1675, 0
        %1696 = vmatprep.subr.bf16.mxu0 0
        %1697 = vmatpush1.bf16.msra.mxu0 %v1689
        %1698 = vmatprep.subr.bf16.mxu0 0
        %1699 = vmatpush1.bf16.msra.mxu0 %v1690
        %1700 = vmatprep.subr.bf16.mxu0 0
        %1701 = vmatpush1.bf16.msra.mxu0 0
        %1702 = vmatprep.subr.bf16.mxu0 0
        %1703 = vmatpush1.bf16.msra.mxu0 0
        %1704 = vmatprep.subr.bf16.mxu0 0
        %1705 = vmatpush1.bf16.msra.mxu0 0
        %1706 = vmatprep.subr.bf16.mxu0 0
        %1707 = vmatpush1.bf16.msra.mxu0 0
        %1708 = vmatprep.subr.bf16.mxu0 0
        %1709 = vmatpush1.bf16.msra.mxu0 0
        %1710 = vmatprep.subr.bf16.mxu0 0
        %1711 = vmatpush1.bf16.msra.mxu0 0
        %1712 = vmatprep.subr.bf16.mxu0 0
        %1713 = vmatpush1.bf16.msra.mxu0 0
        %1714 = vmatprep.subr.bf16.mxu0 0
        %1715 = vmatpush1.bf16.msra.mxu0 0
        %1716 = vmatprep.subr.bf16.mxu0 0
        %1717 = vmatpush1.bf16.msra.mxu0 0
        %1718 = vmatprep.subr.bf16.mxu0 0
        %1719 = vmatpush1.bf16.msra.mxu0 0
        %1720 = vmatprep.subr.bf16.mxu0 0
        %1721 = vmatpush1.bf16.msra.mxu0 0
        %1722 = vmatprep.subr.bf16.mxu0 0
        %1723 = vmatpush1.bf16.msra.mxu0 0
        %1724 = vmatprep.subr.bf16.mxu0 0
        %1725 = vmatpush1.bf16.msra.mxu0 0
        %1726 = vmatprep.subr.bf16.mxu0 0
        %1727 = vmatpush1.bf16.msra.mxu0 0
        %1728 = vmatprep.mubr.bf16.mxu0 0
        %1729 = vmatmul.mubr.bf16.gmra.mrb[0].mxu0 %v1694
        %v1730 = vpop.f32.mrb[0].mxu0
        %v1731 = vadd.f32 0.0, %v1730
        %v1732 = vpop.f32.mrb[0].mxu0
        %v1733 = vpop.f32.mrb[0].mxu0
        %v1734 = vadd.f32 0.0, %v1733
        %v1735 = vpop.f32.mrb[0].mxu0
        %1736 = vdwg.mxu0
        %v1737 = vadd.f32 %v1621, %v1731
        %v1738 = vadd.f32 %v1622, %v1734
        %s1739 = scalar_lea.vmem %s3, 72
        %v1740 = vld [vmem:[%s1739] sm:$0xf]
        %v1741 = vld [vmem:[%s1739 + $0x4] sm:$0x1]
        %v1744 = vunpack.c.l.b16 %v1740
        %v1745 = vunpack.c.l.b16 %v1741
        %v1746 = vpack.c.b16 %v1745, %v1744
        %v1748 = vsel %vm706, %v1746, 0
        %1750 = vmatprep.subr.bf16.mxu0 0
        %1751 = vmatpush1.bf16.msra.mxu0 %v695
        %1752 = vmatprep.subr.bf16.mxu0 0
        %1753 = vmatpush1.bf16.msra.mxu0 %v696
        %1754 = vmatprep.subr.bf16.mxu0 0
        %1755 = vmatpush1.bf16.msra.mxu0 %v697
        %1756 = vmatprep.subr.bf16.mxu0 0
        %1757 = vmatpush1.bf16.msra.mxu0 %v698
        %1758 = vmatprep.subr.bf16.mxu0 0
        %1759 = vmatpush1.bf16.msra.mxu0 0
        %1760 = vmatprep.subr.bf16.mxu0 0
        %1761 = vmatpush1.bf16.msra.mxu0 0
        %1762 = vmatprep.subr.bf16.mxu0 0
        %1763 = vmatpush1.bf16.msra.mxu0 0
        %1764 = vmatprep.subr.bf16.mxu0 0
        %1765 = vmatpush1.bf16.msra.mxu0 0
        %1766 = vmatprep.subr.bf16.mxu0 0
        %1767 = vmatpush1.bf16.msra.mxu0 0
        %1768 = vmatprep.subr.bf16.mxu0 0
        %1769 = vmatpush1.bf16.msra.mxu0 0
        %1770 = vmatprep.subr.bf16.mxu0 0
        %1771 = vmatpush1.bf16.msra.mxu0 0
        %1772 = vmatprep.subr.bf16.mxu0 0
        %1773 = vmatpush1.bf16.msra.mxu0 0
        %1774 = vmatprep.subr.bf16.mxu0 0
        %1775 = vmatpush1.bf16.msra.mxu0 0
        %1776 = vmatprep.subr.bf16.mxu0 0
        %1777 = vmatpush1.bf16.msra.mxu0 0
        %1778 = vmatprep.subr.bf16.mxu0 0
        %1779 = vmatpush1.bf16.msra.mxu0 0
        %1780 = vmatprep.subr.bf16.mxu0 0
        %1781 = vmatpush1.bf16.msra.mxu0 0
        %1782 = vmatprep.mubr.bf16.mxu0 0
        %1783 = vmatmul.mubr.bf16.gmra.mrb[0].mxu0 %v1748
        %v1784 = vpop.f32.mrb[0].mxu0
        %v1785 = vadd.f32 0.0, %v1784
        %v1786 = vpop.f32.mrb[0].mxu0
        %v1787 = vpop.f32.mrb[0].mxu0
        %v1788 = vadd.f32 0.0, %v1787
        %v1789 = vpop.f32.mrb[0].mxu0
        %1790 = vdwg.mxu0
        %v1791 = vpack.c.bf16 %v1788, %v1785
        %s1792 = scalar_lea.vmem %s4, 144
        %v1793 = vld [vmem:[%s1792] sm:$0xf]
        %v1794 = vld [vmem:[%s1792 + $0x4] sm:$0xf]
        %v1795 = vld [vmem:[%s1792 + $0x8] sm:$0xf]
        %v1796 = vld [vmem:[%s1792 + $0xc] sm:$0xf]
        %v1801 = vunpack.c.l.b16 %v1793
        %v1802 = vunpack.c.l.b16 %v1794
        %v1803 = vunpack.c.l.b16 %v1795
        %v1804 = vunpack.c.l.b16 %v1796
        %v1805 = vpack.c.b16 %v1802, %v1801
        %v1806 = vpack.c.b16 %v1804, %v1803
        %v1810 = vsel %vm826, %v1791, 0
        %1812 = vmatprep.subr.bf16.mxu0 0
        %1813 = vmatpush1.bf16.msra.mxu0 %v1805
        %1814 = vmatprep.subr.bf16.mxu0 0
        %1815 = vmatpush1.bf16.msra.mxu0 %v1806
        %1816 = vmatprep.subr.bf16.mxu0 0
        %1817 = vmatpush1.bf16.msra.mxu0 0
        %1818 = vmatprep.subr.bf16.mxu0 0
        %1819 = vmatpush1.bf16.msra.mxu0 0
        %1820 = vmatprep.subr.bf16.mxu0 0
        %1821 = vmatpush1.bf16.msra.mxu0 0
        %1822 = vmatprep.subr.bf16.mxu0 0
        %1823 = vmatpush1.bf16.msra.mxu0 0
        %1824 = vmatprep.subr.bf16.mxu0 0
        %1825 = vmatpush1.bf16.msra.mxu0 0
        %1826 = vmatprep.subr.bf16.mxu0 0
        %1827 = vmatpush1.bf16.msra.mxu0 0
        %1828 = vmatprep.subr.bf16.mxu0 0
        %1829 = vmatpush1.bf16.msra.mxu0 0
        %1830 = vmatprep.subr.bf16.mxu0 0
        %1831 = vmatpush1.bf16.msra.mxu0 0
        %1832 = vmatprep.subr.bf16.mxu0 0
        %1833 = vmatpush1.bf16.msra.mxu0 0
        %1834 = vmatprep.subr.bf16.mxu0 0
        %1835 = vmatpush1.bf16.msra.mxu0 0
        %1836 = vmatprep.subr.bf16.mxu0 0
        %1837 = vmatpush1.bf16.msra.mxu0 0
        %1838 = vmatprep.subr.bf16.mxu0 0
        %1839 = vmatpush1.bf16.msra.mxu0 0
        %1840 = vmatprep.subr.bf16.mxu0 0
        %1841 = vmatpush1.bf16.msra.mxu0 0
        %1842 = vmatprep.subr.bf16.mxu0 0
        %1843 = vmatpush1.bf16.msra.mxu0 0
        %1844 = vmatprep.mubr.bf16.mxu0 0
        %1845 = vmatmul.mubr.bf16.gmra.mrb[0].mxu0 %v1810
        %v1846 = vpop.f32.mrb[0].mxu0
        %v1847 = vadd.f32 0.0, %v1846
        %v1848 = vpop.f32.mrb[0].mxu0
        %v1849 = vpop.f32.mrb[0].mxu0
        %v1850 = vadd.f32 0.0, %v1849
        %v1851 = vpop.f32.mrb[0].mxu0
        %1852 = vdwg.mxu0
        %v1853 = vadd.f32 %v1737, %v1847
        %v1854 = vadd.f32 %v1738, %v1850
        %s1855 = scalar_lea.vmem %s3, 80
        %v1856 = vld [vmem:[%s1855] sm:$0xf]
        %v1857 = vld [vmem:[%s1855 + $0x4] sm:$0x1]
        %v1860 = vunpack.c.l.b16 %v1856
        %v1861 = vunpack.c.l.b16 %v1857
        %v1862 = vpack.c.b16 %v1861, %v1860
        %v1864 = vsel %vm706, %v1862, 0
        %1866 = vmatprep.subr.bf16.mxu0 0
        %1867 = vmatpush1.bf16.msra.mxu0 %v695
        %1868 = vmatprep.subr.bf16.mxu0 0
        %1869 = vmatpush1.bf16.msra.mxu0 %v696
        %1870 = vmatprep.subr.bf16.mxu0 0
        %1871 = vmatpush1.bf16.msra.mxu0 %v697
        %1872 = vmatprep.subr.bf16.mxu0 0
        %1873 = vmatpush1.bf16.msra.mxu0 %v698
        %1874 = vmatprep.subr.bf16.mxu0 0
        %1875 = vmatpush1.bf16.msra.mxu0 0
        %1876 = vmatprep.subr.bf16.mxu0 0
        %1877 = vmatpush1.bf16.msra.mxu0 0
        %1878 = vmatprep.subr.bf16.mxu0 0
        %1879 = vmatpush1.bf16.msra.mxu0 0
        %1880 = vmatprep.subr.bf16.mxu0 0
        %1881 = vmatpush1.bf16.msra.mxu0 0
        %1882 = vmatprep.subr.bf16.mxu0 0
        %1883 = vmatpush1.bf16.msra.mxu0 0
        %1884 = vmatprep.subr.bf16.mxu0 0
        %1885 = vmatpush1.bf16.msra.mxu0 0
        %1886 = vmatprep.subr.bf16.mxu0 0
        %1887 = vmatpush1.bf16.msra.mxu0 0
        %1888 = vmatprep.subr.bf16.mxu0 0
        %1889 = vmatpush1.bf16.msra.mxu0 0
        %1890 = vmatprep.subr.bf16.mxu0 0
        %1891 = vmatpush1.bf16.msra.mxu0 0
        %1892 = vmatprep.subr.bf16.mxu0 0
        %1893 = vmatpush1.bf16.msra.mxu0 0
        %1894 = vmatprep.subr.bf16.mxu0 0
        %1895 = vmatpush1.bf16.msra.mxu0 0
        %1896 = vmatprep.subr.bf16.mxu0 0
        %1897 = vmatpush1.bf16.msra.mxu0 0
        %1898 = vmatprep.mubr.bf16.mxu0 0
        %1899 = vmatmul.mubr.bf16.gmra.mrb[0].mxu0 %v1864
        %v1900 = vpop.f32.mrb[0].mxu0
        %v1901 = vadd.f32 0.0, %v1900
        %v1902 = vpop.f32.mrb[0].mxu0
        %v1903 = vpop.f32.mrb[0].mxu0
        %v1904 = vadd.f32 0.0, %v1903
        %v1905 = vpop.f32.mrb[0].mxu0
        %1906 = vdwg.mxu0
        %v1907 = vpack.c.bf16 %v1904, %v1901
        %s1908 = scalar_lea.vmem %s4, 160
        %v1909 = vld [vmem:[%s1908] sm:$0xf]
        %v1910 = vld [vmem:[%s1908 + $0x4] sm:$0xf]
        %v1911 = vld [vmem:[%s1908 + $0x8] sm:$0xf]
        %v1912 = vld [vmem:[%s1908 + $0xc] sm:$0xf]
        %v1917 = vunpack.c.l.b16 %v1909
        %v1918 = vunpack.c.l.b16 %v1910
        %v1919 = vunpack.c.l.b16 %v1911
        %v1920 = vunpack.c.l.b16 %v1912
        %v1921 = vpack.c.b16 %v1918, %v1917
        %v1922 = vpack.c.b16 %v1920, %v1919
        %v1926 = vsel %vm826, %v1907, 0
        %1928 = vmatprep.subr.bf16.mxu0 0
        %1929 = vmatpush1.bf16.msra.mxu0 %v1921
        %1930 = vmatprep.subr.bf16.mxu0 0
        %1931 = vmatpush1.bf16.msra.mxu0 %v1922
        %1932 = vmatprep.subr.bf16.mxu0 0
        %1933 = vmatpush1.bf16.msra.mxu0 0
        %1934 = vmatprep.subr.bf16.mxu0 0
        %1935 = vmatpush1.bf16.msra.mxu0 0
        %1936 = vmatprep.subr.bf16.mxu0 0
        %1937 = vmatpush1.bf16.msra.mxu0 0
        %1938 = vmatprep.subr.bf16.mxu0 0
        %1939 = vmatpush1.bf16.msra.mxu0 0
        %1940 = vmatprep.subr.bf16.mxu0 0
        %1941 = vmatpush1.bf16.msra.mxu0 0
        %1942 = vmatprep.subr.bf16.mxu0 0
        %1943 = vmatpush1.bf16.msra.mxu0 0
        %1944 = vmatprep.subr.bf16.mxu0 0
        %1945 = vmatpush1.bf16.msra.mxu0 0
        %1946 = vmatprep.subr.bf16.mxu0 0
        %1947 = vmatpush1.bf16.msra.mxu0 0
        %1948 = vmatprep.subr.bf16.mxu0 0
        %1949 = vmatpush1.bf16.msra.mxu0 0
        %1950 = vmatprep.subr.bf16.mxu0 0
        %1951 = vmatpush1.bf16.msra.mxu0 0
        %1952 = vmatprep.subr.bf16.mxu0 0
        %1953 = vmatpush1.bf16.msra.mxu0 0
        %1954 = vmatprep.subr.bf16.mxu0 0
        %1955 = vmatpush1.bf16.msra.mxu0 0
        %1956 = vmatprep.subr.bf16.mxu0 0
        %1957 = vmatpush1.bf16.msra.mxu0 0
        %1958 = vmatprep.subr.bf16.mxu0 0
        %1959 = vmatpush1.bf16.msra.mxu0 0
        %1960 = vmatprep.mubr.bf16.mxu0 0
        %1961 = vmatmul.mubr.bf16.gmra.mrb[0].mxu0 %v1926
        %v1962 = vpop.f32.mrb[0].mxu0
        %v1963 = vadd.f32 0.0, %v1962
        %v1964 = vpop.f32.mrb[0].mxu0
        %v1965 = vpop.f32.mrb[0].mxu0
        %v1966 = vadd.f32 0.0, %v1965
        %v1967 = vpop.f32.mrb[0].mxu0
        %1968 = vdwg.mxu0
        %v1969 = vadd.f32 %v1853, %v1963
        %v1970 = vadd.f32 %v1854, %v1966
        %s1971 = scalar_lea.vmem %s3, 88
        %v1972 = vld [vmem:[%s1971] sm:$0xf]
        %v1973 = vld [vmem:[%s1971 + $0x4] sm:$0x1]
        %v1976 = vunpack.c.l.b16 %v1972
        %v1977 = vunpack.c.l.b16 %v1973
        %v1978 = vpack.c.b16 %v1977, %v1976
        %v1980 = vsel %vm706, %v1978, 0
        %1982 = vmatprep.subr.bf16.mxu0 0
        %1983 = vmatpush1.bf16.msra.mxu0 %v695
        %1984 = vmatprep.subr.bf16.mxu0 0
        %1985 = vmatpush1.bf16.msra.mxu0 %v696
        %1986 = vmatprep.subr.bf16.mxu0 0
        %1987 = vmatpush1.bf16.msra.mxu0 %v697
        %1988 = vmatprep.subr.bf16.mxu0 0
        %1989 = vmatpush1.bf16.msra.mxu0 %v698
        %1990 = vmatprep.subr.bf16.mxu0 0
        %1991 = vmatpush1.bf16.msra.mxu0 0
        %1992 = vmatprep.subr.bf16.mxu0 0
        %1993 = vmatpush1.bf16.msra.mxu0 0
        %1994 = vmatprep.subr.bf16.mxu0 0
        %1995 = vmatpush1.bf16.msra.mxu0 0
        %1996 = vmatprep.subr.bf16.mxu0 0
        %1997 = vmatpush1.bf16.msra.mxu0 0
        %1998 = vmatprep.subr.bf16.mxu0 0
        %1999 = vmatpush1.bf16.msra.mxu0 0
        %2000 = vmatprep.subr.bf16.mxu0 0
        %2001 = vmatpush1.bf16.msra.mxu0 0
        %2002 = vmatprep.subr.bf16.mxu0 0
        %2003 = vmatpush1.bf16.msra.mxu0 0
        %2004 = vmatprep.subr.bf16.mxu0 0
        %2005 = vmatpush1.bf16.msra.mxu0 0
        %2006 = vmatprep.subr.bf16.mxu0 0
        %2007 = vmatpush1.bf16.msra.mxu0 0
        %2008 = vmatprep.subr.bf16.mxu0 0
        %2009 = vmatpush1.bf16.msra.mxu0 0
        %2010 = vmatprep.subr.bf16.mxu0 0
        %2011 = vmatpush1.bf16.msra.mxu0 0
        %2012 = vmatprep.subr.bf16.mxu0 0
        %2013 = vmatpush1.bf16.msra.mxu0 0
        %2014 = vmatprep.mubr.bf16.mxu0 0
        %2015 = vmatmul.mubr.bf16.gmra.mrb[0].mxu0 %v1980
        %v2016 = vpop.f32.mrb[0].mxu0
        %v2017 = vadd.f32 0.0, %v2016
        %v2018 = vpop.f32.mrb[0].mxu0
        %v2019 = vpop.f32.mrb[0].mxu0
        %v2020 = vadd.f32 0.0, %v2019
        %v2021 = vpop.f32.mrb[0].mxu0
        %2022 = vdwg.mxu0
        %v2023 = vpack.c.bf16 %v2020, %v2017
        %s2024 = scalar_lea.vmem %s4, 176
        %v2025 = vld [vmem:[%s2024] sm:$0xf]
        %v2026 = vld [vmem:[%s2024 + $0x4] sm:$0xf]
        %v2027 = vld [vmem:[%s2024 + $0x8] sm:$0xf]
        %v2028 = vld [vmem:[%s2024 + $0xc] sm:$0xf]
        %v2033 = vunpack.c.l.b16 %v2025
        %v2034 = vunpack.c.l.b16 %v2026
        %v2035 = vunpack.c.l.b16 %v2027
        %v2036 = vunpack.c.l.b16 %v2028
        %v2037 = vpack.c.b16 %v2034, %v2033
        %v2038 = vpack.c.b16 %v2036, %v2035
        %v2042 = vsel %vm826, %v2023, 0
        %2044 = vmatprep.subr.bf16.mxu0 0
        %2045 = vmatpush1.bf16.msra.mxu0 %v2037
        %2046 = vmatprep.subr.bf16.mxu0 0
        %2047 = vmatpush1.bf16.msra.mxu0 %v2038
        %2048 = vmatprep.subr.bf16.mxu0 0
        %2049 = vmatpush1.bf16.msra.mxu0 0
        %2050 = vmatprep.subr.bf16.mxu0 0
        %2051 = vmatpush1.bf16.msra.mxu0 0
        %2052 = vmatprep.subr.bf16.mxu0 0
        %2053 = vmatpush1.bf16.msra.mxu0 0
        %2054 = vmatprep.subr.bf16.mxu0 0
        %2055 = vmatpush1.bf16.msra.mxu0 0
        %2056 = vmatprep.subr.bf16.mxu0 0
        %2057 = vmatpush1.bf16.msra.mxu0 0
        %2058 = vmatprep.subr.bf16.mxu0 0
        %2059 = vmatpush1.bf16.msra.mxu0 0
        %2060 = vmatprep.subr.bf16.mxu0 0
        %2061 = vmatpush1.bf16.msra.mxu0 0
        %2062 = vmatprep.subr.bf16.mxu0 0
        %2063 = vmatpush1.bf16.msra.mxu0 0
        %2064 = vmatprep.subr.bf16.mxu0 0
        %2065 = vmatpush1.bf16.msra.mxu0 0
        %2066 = vmatprep.subr.bf16.mxu0 0
        %2067 = vmatpush1.bf16.msra.mxu0 0
        %2068 = vmatprep.subr.bf16.mxu0 0
        %2069 = vmatpush1.bf16.msra.mxu0 0
        %2070 = vmatprep.subr.bf16.mxu0 0
        %2071 = vmatpush1.bf16.msra.mxu0 0
        %2072 = vmatprep.subr.bf16.mxu0 0
        %2073 = vmatpush1.bf16.msra.mxu0 0
        %2074 = vmatprep.subr.bf16.mxu0 0
        %2075 = vmatpush1.bf16.msra.mxu0 0
        %2076 = vmatprep.mubr.bf16.mxu0 0
        %2077 = vmatmul.mubr.bf16.gmra.mrb[0].mxu0 %v2042
        %v2078 = vpop.f32.mrb[0].mxu0
        %v2079 = vadd.f32 0.0, %v2078
        %v2080 = vpop.f32.mrb[0].mxu0
        %v2081 = vpop.f32.mrb[0].mxu0
        %v2082 = vadd.f32 0.0, %v2081
        %v2083 = vpop.f32.mrb[0].mxu0
        %2084 = vdwg.mxu0
        %v2085 = vadd.f32 %v1969, %v2079
        %v2086 = vadd.f32 %v1970, %v2082
        %s2087 = scalar_lea.vmem %s3, 96
        %v2088 = vld [vmem:[%s2087] sm:$0xf]
        %v2089 = vld [vmem:[%s2087 + $0x4] sm:$0x1]
        %v2092 = vunpack.c.l.b16 %v2088
        %v2093 = vunpack.c.l.b16 %v2089
        %v2094 = vpack.c.b16 %v2093, %v2092
        %v2096 = vsel %vm706, %v2094, 0
        %2098 = vmatprep.subr.bf16.mxu0 0
        %2099 = vmatpush1.bf16.msra.mxu0 %v695
        %2100 = vmatprep.subr.bf16.mxu0 0
        %2101 = vmatpush1.bf16.msra.mxu0 %v696
        %2102 = vmatprep.subr.bf16.mxu0 0
        %2103 = vmatpush1.bf16.msra.mxu0 %v697
        %2104 = vmatprep.subr.bf16.mxu0 0
        %2105 = vmatpush1.bf16.msra.mxu0 %v698
        %2106 = vmatprep.subr.bf16.mxu0 0
        %2107 = vmatpush1.bf16.msra.mxu0 0
        %2108 = vmatprep.subr.bf16.mxu0 0
        %2109 = vmatpush1.bf16.msra.mxu0 0
        %2110 = vmatprep.subr.bf16.mxu0 0
        %2111 = vmatpush1.bf16.msra.mxu0 0
        %2112 = vmatprep.subr.bf16.mxu0 0
        %2113 = vmatpush1.bf16.msra.mxu0 0
        %2114 = vmatprep.subr.bf16.mxu0 0
        %2115 = vmatpush1.bf16.msra.mxu0 0
        %2116 = vmatprep.subr.bf16.mxu0 0
        %2117 = vmatpush1.bf16.msra.mxu0 0
        %2118 = vmatprep.subr.bf16.mxu0 0
        %2119 = vmatpush1.bf16.msra.mxu0 0
        %2120 = vmatprep.subr.bf16.mxu0 0
        %2121 = vmatpush1.bf16.msra.mxu0 0
        %2122 = vmatprep.subr.bf16.mxu0 0
        %2123 = vmatpush1.bf16.msra.mxu0 0
        %2124 = vmatprep.subr.bf16.mxu0 0
        %2125 = vmatpush1.bf16.msra.mxu0 0
        %2126 = vmatprep.subr.bf16.mxu0 0
        %2127 = vmatpush1.bf16.msra.mxu0 0
        %2128 = vmatprep.subr.bf16.mxu0 0
        %2129 = vmatpush1.bf16.msra.mxu0 0
        %2130 = vmatprep.mubr.bf16.mxu0 0
        %2131 = vmatmul.mubr.bf16.gmra.mrb[0].mxu0 %v2096
        %v2132 = vpop.f32.mrb[0].mxu0
        %v2133 = vadd.f32 0.0, %v2132
        %v2134 = vpop.f32.mrb[0].mxu0
        %v2135 = vpop.f32.mrb[0].mxu0
        %v2136 = vadd.f32 0.0, %v2135
        %v2137 = vpop.f32.mrb[0].mxu0
        %2138 = vdwg.mxu0
        %v2139 = vpack.c.bf16 %v2136, %v2133
        %s2140 = scalar_lea.vmem %s4, 192
        %v2141 = vld [vmem:[%s2140] sm:$0xf]
        %v2142 = vld [vmem:[%s2140 + $0x4] sm:$0xf]
        %v2143 = vld [vmem:[%s2140 + $0x8] sm:$0xf]
        %v2144 = vld [vmem:[%s2140 + $0xc] sm:$0xf]
        %v2149 = vunpack.c.l.b16 %v2141
        %v2150 = vunpack.c.l.b16 %v2142
        %v2151 = vunpack.c.l.b16 %v2143
        %v2152 = vunpack.c.l.b16 %v2144
        %v2153 = vpack.c.b16 %v2150, %v2149
        %v2154 = vpack.c.b16 %v2152, %v2151
        %v2158 = vsel %vm826, %v2139, 0
        %2160 = vmatprep.subr.bf16.mxu0 0
        %2161 = vmatpush1.bf16.msra.mxu0 %v2153
        %2162 = vmatprep.subr.bf16.mxu0 0
        %2163 = vmatpush1.bf16.msra.mxu0 %v2154
        %2164 = vmatprep.subr.bf16.mxu0 0
        %2165 = vmatpush1.bf16.msra.mxu0 0
        %2166 = vmatprep.subr.bf16.mxu0 0
        %2167 = vmatpush1.bf16.msra.mxu0 0
        %2168 = vmatprep.subr.bf16.mxu0 0
        %2169 = vmatpush1.bf16.msra.mxu0 0
        %2170 = vmatprep.subr.bf16.mxu0 0
        %2171 = vmatpush1.bf16.msra.mxu0 0
        %2172 = vmatprep.subr.bf16.mxu0 0
        %2173 = vmatpush1.bf16.msra.mxu0 0
        %2174 = vmatprep.subr.bf16.mxu0 0
        %2175 = vmatpush1.bf16.msra.mxu0 0
        %2176 = vmatprep.subr.bf16.mxu0 0
        %2177 = vmatpush1.bf16.msra.mxu0 0
        %2178 = vmatprep.subr.bf16.mxu0 0
        %2179 = vmatpush1.bf16.msra.mxu0 0
        %2180 = vmatprep.subr.bf16.mxu0 0
        %2181 = vmatpush1.bf16.msra.mxu0 0
        %2182 = vmatprep.subr.bf16.mxu0 0
        %2183 = vmatpush1.bf16.msra.mxu0 0
        %2184 = vmatprep.subr.bf16.mxu0 0
        %2185 = vmatpush1.bf16.msra.mxu0 0
        %2186 = vmatprep.subr.bf16.mxu0 0
        %2187 = vmatpush1.bf16.msra.mxu0 0
        %2188 = vmatprep.subr.bf16.mxu0 0
        %2189 = vmatpush1.bf16.msra.mxu0 0
        %2190 = vmatprep.subr.bf16.mxu0 0
        %2191 = vmatpush1.bf16.msra.mxu0 0
        %2192 = vmatprep.mubr.bf16.mxu0 0
        %2193 = vmatmul.mubr.bf16.gmra.mrb[0].mxu0 %v2158
        %v2194 = vpop.f32.mrb[0].mxu0
        %v2195 = vadd.f32 0.0, %v2194
        %v2196 = vpop.f32.mrb[0].mxu0
        %v2197 = vpop.f32.mrb[0].mxu0
        %v2198 = vadd.f32 0.0, %v2197
        %v2199 = vpop.f32.mrb[0].mxu0
        %2200 = vdwg.mxu0
        %v2201 = vadd.f32 %v2085, %v2195
        %v2202 = vadd.f32 %v2086, %v2198
        %s2203 = scalar_lea.vmem %s3, 104
        %v2204 = vld [vmem:[%s2203] sm:$0xf]
        %v2205 = vld [vmem:[%s2203 + $0x4] sm:$0x1]
        %v2208 = vunpack.c.l.b16 %v2204
        %v2209 = vunpack.c.l.b16 %v2205
        %v2210 = vpack.c.b16 %v2209, %v2208
        %v2212 = vsel %vm706, %v2210, 0
        %2214 = vmatprep.subr.bf16.mxu0 0
        %2215 = vmatpush1.bf16.msra.mxu0 %v695
        %2216 = vmatprep.subr.bf16.mxu0 0
        %2217 = vmatpush1.bf16.msra.mxu0 %v696
        %2218 = vmatprep.subr.bf16.mxu0 0
        %2219 = vmatpush1.bf16.msra.mxu0 %v697
        %2220 = vmatprep.subr.bf16.mxu0 0
        %2221 = vmatpush1.bf16.msra.mxu0 %v698
        %2222 = vmatprep.subr.bf16.mxu0 0
        %2223 = vmatpush1.bf16.msra.mxu0 0
        %2224 = vmatprep.subr.bf16.mxu0 0
        %2225 = vmatpush1.bf16.msra.mxu0 0
        %2226 = vmatprep.subr.bf16.mxu0 0
        %2227 = vmatpush1.bf16.msra.mxu0 0
        %2228 = vmatprep.subr.bf16.mxu0 0
        %2229 = vmatpush1.bf16.msra.mxu0 0
        %2230 = vmatprep.subr.bf16.mxu0 0
        %2231 = vmatpush1.bf16.msra.mxu0 0
        %2232 = vmatprep.subr.bf16.mxu0 0
        %2233 = vmatpush1.bf16.msra.mxu0 0
        %2234 = vmatprep.subr.bf16.mxu0 0
        %2235 = vmatpush1.bf16.msra.mxu0 0
        %2236 = vmatprep.subr.bf16.mxu0 0
        %2237 = vmatpush1.bf16.msra.mxu0 0
        %2238 = vmatprep.subr.bf16.mxu0 0
        %2239 = vmatpush1.bf16.msra.mxu0 0
        %2240 = vmatprep.subr.bf16.mxu0 0
        %2241 = vmatpush1.bf16.msra.mxu0 0
        %2242 = vmatprep.subr.bf16.mxu0 0
        %2243 = vmatpush1.bf16.msra.mxu0 0
        %2244 = vmatprep.subr.bf16.mxu0 0
        %2245 = vmatpush1.bf16.msra.mxu0 0
        %2246 = vmatprep.mubr.bf16.mxu0 0
        %2247 = vmatmul.mubr.bf16.gmra.mrb[0].mxu0 %v2212
        %v2248 = vpop.f32.mrb[0].mxu0
        %v2249 = vadd.f32 0.0, %v2248
        %v2250 = vpop.f32.mrb[0].mxu0
        %v2251 = vpop.f32.mrb[0].mxu0
        %v2252 = vadd.f32 0.0, %v2251
        %v2253 = vpop.f32.mrb[0].mxu0
        %2254 = vdwg.mxu0
        %v2255 = vpack.c.bf16 %v2252, %v2249
        %s2256 = scalar_lea.vmem %s4, 208
        %v2257 = vld [vmem:[%s2256] sm:$0xf]
        %v2258 = vld [vmem:[%s2256 + $0x4] sm:$0xf]
        %v2259 = vld [vmem:[%s2256 + $0x8] sm:$0xf]
        %v2260 = vld [vmem:[%s2256 + $0xc] sm:$0xf]
        %v2265 = vunpack.c.l.b16 %v2257
        %v2266 = vunpack.c.l.b16 %v2258
        %v2267 = vunpack.c.l.b16 %v2259
        %v2268 = vunpack.c.l.b16 %v2260
        %v2269 = vpack.c.b16 %v2266, %v2265
        %v2270 = vpack.c.b16 %v2268, %v2267
        %v2274 = vsel %vm826, %v2255, 0
        %2276 = vmatprep.subr.bf16.mxu0 0
        %2277 = vmatpush1.bf16.msra.mxu0 %v2269
        %2278 = vmatprep.subr.bf16.mxu0 0
        %2279 = vmatpush1.bf16.msra.mxu0 %v2270
        %2280 = vmatprep.subr.bf16.mxu0 0
        %2281 = vmatpush1.bf16.msra.mxu0 0
        %2282 = vmatprep.subr.bf16.mxu0 0
        %2283 = vmatpush1.bf16.msra.mxu0 0
        %2284 = vmatprep.subr.bf16.mxu0 0
        %2285 = vmatpush1.bf16.msra.mxu0 0
        %2286 = vmatprep.subr.bf16.mxu0 0
        %2287 = vmatpush1.bf16.msra.mxu0 0
        %2288 = vmatprep.subr.bf16.mxu0 0
        %2289 = vmatpush1.bf16.msra.mxu0 0
        %2290 = vmatprep.subr.bf16.mxu0 0
        %2291 = vmatpush1.bf16.msra.mxu0 0
        %2292 = vmatprep.subr.bf16.mxu0 0
        %2293 = vmatpush1.bf16.msra.mxu0 0
        %2294 = vmatprep.subr.bf16.mxu0 0
        %2295 = vmatpush1.bf16.msra.mxu0 0
        %2296 = vmatprep.subr.bf16.mxu0 0
        %2297 = vmatpush1.bf16.msra.mxu0 0
        %2298 = vmatprep.subr.bf16.mxu0 0
        %2299 = vmatpush1.bf16.msra.mxu0 0
        %2300 = vmatprep.subr.bf16.mxu0 0
        %2301 = vmatpush1.bf16.msra.mxu0 0
        %2302 = vmatprep.subr.bf16.mxu0 0
        %2303 = vmatpush1.bf16.msra.mxu0 0
        %2304 = vmatprep.subr.bf16.mxu0 0
        %2305 = vmatpush1.bf16.msra.mxu0 0
        %2306 = vmatprep.subr.bf16.mxu0 0
        %2307 = vmatpush1.bf16.msra.mxu0 0
        %2308 = vmatprep.mubr.bf16.mxu0 0
        %2309 = vmatmul.mubr.bf16.gmra.mrb[0].mxu0 %v2274
        %v2310 = vpop.f32.mrb[0].mxu0
        %v2311 = vadd.f32 0.0, %v2310
        %v2312 = vpop.f32.mrb[0].mxu0
        %v2313 = vpop.f32.mrb[0].mxu0
        %v2314 = vadd.f32 0.0, %v2313
        %v2315 = vpop.f32.mrb[0].mxu0
        %2316 = vdwg.mxu0
        %v2317 = vadd.f32 %v2201, %v2311
        %v2318 = vadd.f32 %v2202, %v2314
        %s2319 = scalar_lea.vmem %s3, 112
        %v2320 = vld [vmem:[%s2319] sm:$0xf]
        %v2321 = vld [vmem:[%s2319 + $0x4] sm:$0x1]
        %v2324 = vunpack.c.l.b16 %v2320
        %v2325 = vunpack.c.l.b16 %v2321
        %v2326 = vpack.c.b16 %v2325, %v2324
        %v2328 = vsel %vm706, %v2326, 0
        %2330 = vmatprep.subr.bf16.mxu0 0
        %2331 = vmatpush1.bf16.msra.mxu0 %v695
        %2332 = vmatprep.subr.bf16.mxu0 0
        %2333 = vmatpush1.bf16.msra.mxu0 %v696
        %2334 = vmatprep.subr.bf16.mxu0 0
        %2335 = vmatpush1.bf16.msra.mxu0 %v697
        %2336 = vmatprep.subr.bf16.mxu0 0
        %2337 = vmatpush1.bf16.msra.mxu0 %v698
        %2338 = vmatprep.subr.bf16.mxu0 0
        %2339 = vmatpush1.bf16.msra.mxu0 0
        %2340 = vmatprep.subr.bf16.mxu0 0
        %2341 = vmatpush1.bf16.msra.mxu0 0
        %2342 = vmatprep.subr.bf16.mxu0 0
        %2343 = vmatpush1.bf16.msra.mxu0 0
        %2344 = vmatprep.subr.bf16.mxu0 0
        %2345 = vmatpush1.bf16.msra.mxu0 0
        %2346 = vmatprep.subr.bf16.mxu0 0
        %2347 = vmatpush1.bf16.msra.mxu0 0
        %2348 = vmatprep.subr.bf16.mxu0 0
        %2349 = vmatpush1.bf16.msra.mxu0 0
        %2350 = vmatprep.subr.bf16.mxu0 0
        %2351 = vmatpush1.bf16.msra.mxu0 0
        %2352 = vmatprep.subr.bf16.mxu0 0
        %2353 = vmatpush1.bf16.msra.mxu0 0
        %2354 = vmatprep.subr.bf16.mxu0 0
        %2355 = vmatpush1.bf16.msra.mxu0 0
        %2356 = vmatprep.subr.bf16.mxu0 0
        %2357 = vmatpush1.bf16.msra.mxu0 0
        %2358 = vmatprep.subr.bf16.mxu0 0
        %2359 = vmatpush1.bf16.msra.mxu0 0
        %2360 = vmatprep.subr.bf16.mxu0 0
        %2361 = vmatpush1.bf16.msra.mxu0 0
        %2362 = vmatprep.mubr.bf16.mxu0 0
        %2363 = vmatmul.mubr.bf16.gmra.mrb[0].mxu0 %v2328
        %v2364 = vpop.f32.mrb[0].mxu0
        %v2365 = vadd.f32 0.0, %v2364
        %v2366 = vpop.f32.mrb[0].mxu0
        %v2367 = vpop.f32.mrb[0].mxu0
        %v2368 = vadd.f32 0.0, %v2367
        %v2369 = vpop.f32.mrb[0].mxu0
        %2370 = vdwg.mxu0
        %v2371 = vpack.c.bf16 %v2368, %v2365
        %s2372 = scalar_lea.vmem %s4, 224
        %v2373 = vld [vmem:[%s2372] sm:$0xf]
        %v2374 = vld [vmem:[%s2372 + $0x4] sm:$0xf]
        %v2375 = vld [vmem:[%s2372 + $0x8] sm:$0xf]
        %v2376 = vld [vmem:[%s2372 + $0xc] sm:$0xf]
        %v2381 = vunpack.c.l.b16 %v2373
        %v2382 = vunpack.c.l.b16 %v2374
        %v2383 = vunpack.c.l.b16 %v2375
        %v2384 = vunpack.c.l.b16 %v2376
        %v2385 = vpack.c.b16 %v2382, %v2381
        %v2386 = vpack.c.b16 %v2384, %v2383
        %v2390 = vsel %vm826, %v2371, 0
        %2392 = vmatprep.subr.bf16.mxu0 0
        %2393 = vmatpush1.bf16.msra.mxu0 %v2385
        %2394 = vmatprep.subr.bf16.mxu0 0
        %2395 = vmatpush1.bf16.msra.mxu0 %v2386
        %2396 = vmatprep.subr.bf16.mxu0 0
        %2397 = vmatpush1.bf16.msra.mxu0 0
        %2398 = vmatprep.subr.bf16.mxu0 0
        %2399 = vmatpush1.bf16.msra.mxu0 0
        %2400 = vmatprep.subr.bf16.mxu0 0
        %2401 = vmatpush1.bf16.msra.mxu0 0
        %2402 = vmatprep.subr.bf16.mxu0 0
        %2403 = vmatpush1.bf16.msra.mxu0 0
        %2404 = vmatprep.subr.bf16.mxu0 0
        %2405 = vmatpush1.bf16.msra.mxu0 0
        %2406 = vmatprep.subr.bf16.mxu0 0
        %2407 = vmatpush1.bf16.msra.mxu0 0
        %2408 = vmatprep.subr.bf16.mxu0 0
        %2409 = vmatpush1.bf16.msra.mxu0 0
        %2410 = vmatprep.subr.bf16.mxu0 0
        %2411 = vmatpush1.bf16.msra.mxu0 0
        %2412 = vmatprep.subr.bf16.mxu0 0
        %2413 = vmatpush1.bf16.msra.mxu0 0
        %2414 = vmatprep.subr.bf16.mxu0 0
        %2415 = vmatpush1.bf16.msra.mxu0 0
        %2416 = vmatprep.subr.bf16.mxu0 0
        %2417 = vmatpush1.bf16.msra.mxu0 0
        %2418 = vmatprep.subr.bf16.mxu0 0
        %2419 = vmatpush1.bf16.msra.mxu0 0
        %2420 = vmatprep.subr.bf16.mxu0 0
        %2421 = vmatpush1.bf16.msra.mxu0 0
        %2422 = vmatprep.subr.bf16.mxu0 0
        %2423 = vmatpush1.bf16.msra.mxu0 0
        %2424 = vmatprep.mubr.bf16.mxu0 0
        %2425 = vmatmul.mubr.bf16.gmra.mrb[0].mxu0 %v2390
        %v2426 = vpop.f32.mrb[0].mxu0
        %v2427 = vadd.f32 0.0, %v2426
        %v2428 = vpop.f32.mrb[0].mxu0
        %v2429 = vpop.f32.mrb[0].mxu0
        %v2430 = vadd.f32 0.0, %v2429
        %v2431 = vpop.f32.mrb[0].mxu0
        %2432 = vdwg.mxu0
        %v2433 = vadd.f32 %v2317, %v2427
        %v2434 = vadd.f32 %v2318, %v2430
        %s2435 = scalar_lea.vmem %s3, 120
        %v2436 = vld [vmem:[%s2435] sm:$0xf]
        %v2437 = vld [vmem:[%s2435 + $0x4] sm:$0x1]
        %v2440 = vunpack.c.l.b16 %v2436
        %v2441 = vunpack.c.l.b16 %v2437
        %v2442 = vpack.c.b16 %v2441, %v2440
        %v2444 = vsel %vm706, %v2442, 0
        %2446 = vmatprep.subr.bf16.mxu0 0
        %2447 = vmatpush1.bf16.msra.mxu0 %v695
        %2448 = vmatprep.subr.bf16.mxu0 0
        %2449 = vmatpush1.bf16.msra.mxu0 %v696
        %2450 = vmatprep.subr.bf16.mxu0 0
        %2451 = vmatpush1.bf16.msra.mxu0 %v697
        %2452 = vmatprep.subr.bf16.mxu0 0
        %2453 = vmatpush1.bf16.msra.mxu0 %v698
        %2454 = vmatprep.subr.bf16.mxu0 0
        %2455 = vmatpush1.bf16.msra.mxu0 0
        %2456 = vmatprep.subr.bf16.mxu0 0
        %2457 = vmatpush1.bf16.msra.mxu0 0
        %2458 = vmatprep.subr.bf16.mxu0 0
        %2459 = vmatpush1.bf16.msra.mxu0 0
        %2460 = vmatprep.subr.bf16.mxu0 0
        %2461 = vmatpush1.bf16.msra.mxu0 0
        %2462 = vmatprep.subr.bf16.mxu0 0
        %2463 = vmatpush1.bf16.msra.mxu0 0
        %2464 = vmatprep.subr.bf16.mxu0 0
        %2465 = vmatpush1.bf16.msra.mxu0 0
        %2466 = vmatprep.subr.bf16.mxu0 0
        %2467 = vmatpush1.bf16.msra.mxu0 0
        %2468 = vmatprep.subr.bf16.mxu0 0
        %2469 = vmatpush1.bf16.msra.mxu0 0
        %2470 = vmatprep.subr.bf16.mxu0 0
        %2471 = vmatpush1.bf16.msra.mxu0 0
        %2472 = vmatprep.subr.bf16.mxu0 0
        %2473 = vmatpush1.bf16.msra.mxu0 0
        %2474 = vmatprep.subr.bf16.mxu0 0
        %2475 = vmatpush1.bf16.msra.mxu0 0
        %2476 = vmatprep.subr.bf16.mxu0 0
        %2477 = vmatpush1.bf16.msra.mxu0 0
        %2478 = vmatprep.mubr.bf16.mxu0 0
        %2479 = vmatmul.mubr.bf16.gmra.mrb[0].mxu0 %v2444
        %v2480 = vpop.f32.mrb[0].mxu0
        %v2481 = vadd.f32 0.0, %v2480
        %v2482 = vpop.f32.mrb[0].mxu0
        %v2483 = vpop.f32.mrb[0].mxu0
        %v2484 = vadd.f32 0.0, %v2483
        %v2485 = vpop.f32.mrb[0].mxu0
        %2486 = vdwg.mxu0
        %v2487 = vpack.c.bf16 %v2484, %v2481
        %s2488 = scalar_lea.vmem %s4, 240
        %v2489 = vld [vmem:[%s2488] sm:$0xf]
        %v2490 = vld [vmem:[%s2488 + $0x4] sm:$0xf]
        %v2491 = vld [vmem:[%s2488 + $0x8] sm:$0xf]
        %v2492 = vld [vmem:[%s2488 + $0xc] sm:$0xf]
        %v2497 = vunpack.c.l.b16 %v2489
        %v2498 = vunpack.c.l.b16 %v2490
        %v2499 = vunpack.c.l.b16 %v2491
        %v2500 = vunpack.c.l.b16 %v2492
        %v2501 = vpack.c.b16 %v2498, %v2497
        %v2502 = vpack.c.b16 %v2500, %v2499
        %v2506 = vsel %vm826, %v2487, 0
        %2508 = vmatprep.subr.bf16.mxu0 0
        %2509 = vmatpush1.bf16.msra.mxu0 %v2501
        %2510 = vmatprep.subr.bf16.mxu0 0
        %2511 = vmatpush1.bf16.msra.mxu0 %v2502
        %2512 = vmatprep.subr.bf16.mxu0 0
        %2513 = vmatpush1.bf16.msra.mxu0 0
        %2514 = vmatprep.subr.bf16.mxu0 0
        %2515 = vmatpush1.bf16.msra.mxu0 0
        %2516 = vmatprep.subr.bf16.mxu0 0
        %2517 = vmatpush1.bf16.msra.mxu0 0
        %2518 = vmatprep.subr.bf16.mxu0 0
        %2519 = vmatpush1.bf16.msra.mxu0 0
        %2520 = vmatprep.subr.bf16.mxu0 0
        %2521 = vmatpush1.bf16.msra.mxu0 0
        %2522 = vmatprep.subr.bf16.mxu0 0
        %2523 = vmatpush1.bf16.msra.mxu0 0
        %2524 = vmatprep.subr.bf16.mxu0 0
        %2525 = vmatpush1.bf16.msra.mxu0 0
        %2526 = vmatprep.subr.bf16.mxu0 0
        %2527 = vmatpush1.bf16.msra.mxu0 0
        %2528 = vmatprep.subr.bf16.mxu0 0
        %2529 = vmatpush1.bf16.msra.mxu0 0
        %2530 = vmatprep.subr.bf16.mxu0 0
        %2531 = vmatpush1.bf16.msra.mxu0 0
        %2532 = vmatprep.subr.bf16.mxu0 0
        %2533 = vmatpush1.bf16.msra.mxu0 0
        %2534 = vmatprep.subr.bf16.mxu0 0
        %2535 = vmatpush1.bf16.msra.mxu0 0
        %2536 = vmatprep.subr.bf16.mxu0 0
        %2537 = vmatpush1.bf16.msra.mxu0 0
        %2538 = vmatprep.subr.bf16.mxu0 0
        %2539 = vmatpush1.bf16.msra.mxu0 0
        %2540 = vmatprep.mubr.bf16.mxu0 0
        %2541 = vmatmul.mubr.bf16.gmra.mrb[0].mxu0 %v2506
        %v2542 = vpop.f32.mrb[0].mxu0
        %v2543 = vadd.f32 0.0, %v2542
        %v2544 = vpop.f32.mrb[0].mxu0
        %v2545 = vpop.f32.mrb[0].mxu0
        %v2546 = vadd.f32 0.0, %v2545
        %v2547 = vpop.f32.mrb[0].mxu0
        %2548 = vdwg.mxu0
        %v2549 = vadd.f32 %v2433, %v2543
        %v2550 = vadd.f32 %v2434, %v2546
        %v2551 = vld [vmem:[%s5] sm:$0x1]
        %v2553 = vlaneseq
        %v2554 = vshrl.u32 %v2553, 7
        %v2555 = vsub.s32 0, %v2554
        %v2556 = vrot.slane %v2551, %v2555
        %v2558 = vadd.f32 %v2549, %v2556
        %v2559 = vadd.f32 %v2550, %v2556
        %v2560 = vmax.f32 %v2558, 0.0
        %v2561 = vmax.f32 %v2559, 0.0
        %v2562 = vpack.c.bf16 %v2561, %v2560
        %v2563 = vld [vmem:[%s6] sm:$0x1]
        %vm2564 = vcmask 72704
        %v2566 = vsel %vm2564, %v2563, 0
        %vm2568 = vcmask 1043456
        %vm2569 = vcmask 1044480
        %v2570 = vsel %vm2568, 4294967295, 65535
        %v2571 = vsel %vm2569, %v2570, 0
        %v2573 = vand.u32 %v2562, %v2571
        %2575 = vmatprep.subr.bf16.mxu0 0
        %2576 = vmatpush1.bf16.msra.mxu0 %v2573
        %2577 = vmatprep.subr.bf16.mxu0 0
        %2578 = vmatpush1.bf16.msra.mxu0 0
        %2579 = vmatprep.subr.bf16.mxu0 0
        %2580 = vmatpush1.bf16.msra.mxu0 0
        %2581 = vmatprep.subr.bf16.mxu0 0
        %2582 = vmatpush1.bf16.msra.mxu0 0
        %2583 = vmatprep.subr.bf16.mxu0 0
        %2584 = vmatpush1.bf16.msra.mxu0 0
        %2585 = vmatprep.subr.bf16.mxu0 0
        %2586 = vmatpush1.bf16.msra.mxu0 0
        %2587 = vmatprep.subr.bf16.mxu0 0
        %2588 = vmatpush1.bf16.msra.mxu0 0
        %2589 = vmatprep.subr.bf16.mxu0 0
        %2590 = vmatpush1.bf16.msra.mxu0 0
        %2591 = vmatprep.subr.bf16.mxu0 0
        %2592 = vmatpush1.bf16.msra.mxu0 0
        %2593 = vmatprep.subr.bf16.mxu0 0
        %2594 = vmatpush1.bf16.msra.mxu0 0
        %2595 = vmatprep.subr.bf16.mxu0 0
        %2596 = vmatpush1.bf16.msra.mxu0 0
        %2597 = vmatprep.subr.bf16.mxu0 0
        %2598 = vmatpush1.bf16.msra.mxu0 0
        %2599 = vmatprep.subr.bf16.mxu0 0
        %2600 = vmatpush1.bf16.msra.mxu0 0
        %2601 = vmatprep.subr.bf16.mxu0 0
        %2602 = vmatpush1.bf16.msra.mxu0 0
        %2603 = vmatprep.subr.bf16.mxu0 0
        %2604 = vmatpush1.bf16.msra.mxu0 0
        %2605 = vmatprep.subr.bf16.mxu0 0
        %2606 = vmatpush1.bf16.msra.mxu0 0
        %2607 = vmatprep.mubr.bf16.mxu0 0
        %2608 = vmatmul.mubr.bf16.gmra.mrb[0].mxu0 %v2566
        %v2609 = vpop.f32.mrb[0].mxu0
        %v2610 = vadd.f32 0.0, %v2609
        %v2611 = vpop.f32.mrb[0].mxu0
        %v2612 = vpop.f32.mrb[0].mxu0
        %v2613 = vpop.f32.mrb[0].mxu0
        %2614 = vdwg.mxu0
        %v2615 = vpack.c.bf16 %v2610, %v2610
        %v2616 = vld [vmem:[%s7] sm:$0xf]
        %v2617 = vld [vmem:[%s7 + $0x4] sm:$0xf]
        %v2618 = vld [vmem:[%s7 + $0x8] sm:$0xf]
        %v2619 = vld [vmem:[%s7 + $0xc] sm:$0xf]
        %v2620 = vld [vmem:[%s7 + $0x10] sm:$0xf]
        %v2621 = vld [vmem:[%s7 + $0x14] sm:$0xf]
        %v2622 = vld [vmem:[%s7 + $0x18] sm:$0xf]
        %v2623 = vld [vmem:[%s7 + $0x1c] sm:$0xf]
        %s2624 = scalar_lea.vmem %s6, 1
        %v2625 = vld [vmem:[%s2624] sm:$0x1]
        %v2627 = vsel %vm2564, %v2625, 0
        %2629 = vmatprep.subr.bf16.mxu0 0
        %2630 = vmatpush1.bf16.msra.mxu0 %v2573
        %2631 = vmatprep.subr.bf16.mxu0 0
        %2632 = vmatpush1.bf16.msra.mxu0 0
        %2633 = vmatprep.subr.bf16.mxu0 0
        %2634 = vmatpush1.bf16.msra.mxu0 0
        %2635 = vmatprep.subr.bf16.mxu0 0
        %2636 = vmatpush1.bf16.msra.mxu0 0
        %2637 = vmatprep.subr.bf16.mxu0 0
        %2638 = vmatpush1.bf16.msra.mxu0 0
        %2639 = vmatprep.subr.bf16.mxu0 0
        %2640 = vmatpush1.bf16.msra.mxu0 0
        %2641 = vmatprep.subr.bf16.mxu0 0
        %2642 = vmatpush1.bf16.msra.mxu0 0
        %2643 = vmatprep.subr.bf16.mxu0 0
        %2644 = vmatpush1.bf16.msra.mxu0 0
        %2645 = vmatprep.subr.bf16.mxu0 0
        %2646 = vmatpush1.bf16.msra.mxu0 0
        %2647 = vmatprep.subr.bf16.mxu0 0
        %2648 = vmatpush1.bf16.msra.mxu0 0
        %2649 = vmatprep.subr.bf16.mxu0 0
        %2650 = vmatpush1.bf16.msra.mxu0 0
        %2651 = vmatprep.subr.bf16.mxu0 0
        %2652 = vmatpush1.bf16.msra.mxu0 0
        %2653 = vmatprep.subr.bf16.mxu0 0
        %2654 = vmatpush1.bf16.msra.mxu0 0
        %2655 = vmatprep.subr.bf16.mxu0 0
        %2656 = vmatpush1.bf16.msra.mxu0 0
        %2657 = vmatprep.subr.bf16.mxu0 0
        %2658 = vmatpush1.bf16.msra.mxu0 0
        %2659 = vmatprep.subr.bf16.mxu0 0
        %2660 = vmatpush1.bf16.msra.mxu0 0
        %2661 = vmatprep.mubr.bf16.mxu0 0
        %2662 = vmatmul.mubr.bf16.gmra.mrb[0].mxu0 %v2627
        %v2663 = vpop.f32.mrb[0].mxu0
        %v2664 = vadd.f32 0.0, %v2663
        %v2665 = vpop.f32.mrb[0].mxu0
        %v2666 = vpop.f32.mrb[0].mxu0
        %v2667 = vpop.f32.mrb[0].mxu0
        %2668 = vdwg.mxu0
        %v2669 = vpack.c.bf16 %v2664, %v2664
        %s2670 = scalar_lea.vmem %s7, 32
        %v2671 = vld [vmem:[%s2670] sm:$0xf]
        %v2672 = vld [vmem:[%s2670 + $0x4] sm:$0xf]
        %v2673 = vld [vmem:[%s2670 + $0x8] sm:$0xf]
        %v2674 = vld [vmem:[%s2670 + $0xc] sm:$0xf]
        %v2675 = vld [vmem:[%s2670 + $0x10] sm:$0xf]
        %v2676 = vld [vmem:[%s2670 + $0x14] sm:$0xf]
        %v2677 = vld [vmem:[%s2670 + $0x18] sm:$0xf]
        %v2678 = vld [vmem:[%s2670 + $0x1c] sm:$0xf]
        %v2687 = vunpack.c.l.b16 %v2671
        %v2688 = vunpack.c.l.b16 %v2672
        %v2689 = vunpack.c.l.b16 %v2673
        %v2690 = vunpack.c.l.b16 %v2674
        %v2691 = vunpack.c.l.b16 %v2675
        %v2692 = vunpack.c.l.b16 %v2676
        %v2693 = vunpack.c.l.b16 %v2677
        %v2694 = vunpack.c.l.b16 %v2678
        %v2695 = vpack.c.b16 %v2688, %v2687
        %v2696 = vpack.c.b16 %v2690, %v2689
        %v2697 = vpack.c.b16 %v2692, %v2691
        %v2698 = vpack.c.b16 %v2694, %v2693
        %v2704 = vsel %vm706, %v2669, 0
        %2706 = vmatprep.subr.bf16.mxu0 0
        %2707 = vmatpush1.bf16.msra.mxu0 %v2695
        %2708 = vmatprep.subr.bf16.mxu0 0
        %2709 = vmatpush1.bf16.msra.mxu0 %v2696
        %2710 = vmatprep.subr.bf16.mxu0 0
        %2711 = vmatpush1.bf16.msra.mxu0 %v2697
        %2712 = vmatprep.subr.bf16.mxu0 0
        %2713 = vmatpush1.bf16.msra.mxu0 %v2698
        %2714 = vmatprep.subr.bf16.mxu0 0
        %2715 = vmatpush1.bf16.msra.mxu0 0
        %2716 = vmatprep.subr.bf16.mxu0 0
        %2717 = vmatpush1.bf16.msra.mxu0 0
        %2718 = vmatprep.subr.bf16.mxu0 0
        %2719 = vmatpush1.bf16.msra.mxu0 0
        %2720 = vmatprep.subr.bf16.mxu0 0
        %2721 = vmatpush1.bf16.msra.mxu0 0
        %2722 = vmatprep.subr.bf16.mxu0 0
        %2723 = vmatpush1.bf16.msra.mxu0 0
        %2724 = vmatprep.subr.bf16.mxu0 0
        %2725 = vmatpush1.bf16.msra.mxu0 0
        %2726 = vmatprep.subr.bf16.mxu0 0
        %2727 = vmatpush1.bf16.msra.mxu0 0
        %2728 = vmatprep.subr.bf16.mxu0 0
        %2729 = vmatpush1.bf16.msra.mxu0 0
        %2730 = vmatprep.subr.bf16.mxu0 0
        %2731 = vmatpush1.bf16.msra.mxu0 0
        %2732 = vmatprep.subr.bf16.mxu0 0
        %2733 = vmatpush1.bf16.msra.mxu0 0
        %2734 = vmatprep.subr.bf16.mxu0 0
        %2735 = vmatpush1.bf16.msra.mxu0 0
        %2736 = vmatprep.subr.bf16.mxu0 0
        %2737 = vmatpush1.bf16.msra.mxu0 0
        %2738 = vmatprep.mubr.bf16.mxu0 0
        %2739 = vmatmul.mubr.bf16.gmra.mrb[0].mxu0 %v2704
        %v2740 = vpop.f32.mrb[0].mxu0
        %v2741 = vadd.f32 0.0, %v2740
        %v2742 = vpop.f32.mrb[0].mxu0
        %v2743 = vpop.f32.mrb[0].mxu0
        %v2744 = vpop.f32.mrb[0].mxu0
        %2745 = vdwg.mxu0
        %v2754 = vunpack.c.l.b16 %v2616
        %v2755 = vunpack.c.l.b16 %v2617
        %v2756 = vunpack.c.l.b16 %v2618
        %v2757 = vunpack.c.l.b16 %v2619
        %v2758 = vunpack.c.l.b16 %v2620
        %v2759 = vunpack.c.l.b16 %v2621
        %v2760 = vunpack.c.l.b16 %v2622
        %v2761 = vunpack.c.l.b16 %v2623
        %v2762 = vpack.c.b16 %v2755, %v2754
        %v2763 = vpack.c.b16 %v2757, %v2756
        %v2764 = vpack.c.b16 %v2759, %v2758
        %v2765 = vpack.c.b16 %v2761, %v2760
        %v2771 = vsel %vm706, %v2615, 0
        %2773 = vmatprep.subr.bf16.mxu0 0
        %2774 = vmatpush1.bf16.msra.mxu0 %v2762
        %2775 = vmatprep.subr.bf16.mxu0 0
        %2776 = vmatpush1.bf16.msra.mxu0 %v2763
        %2777 = vmatprep.subr.bf16.mxu0 0
        %2778 = vmatpush1.bf16.msra.mxu0 %v2764
        %2779 = vmatprep.subr.bf16.mxu0 0
        %2780 = vmatpush1.bf16.msra.mxu0 %v2765
        %2781 = vmatprep.subr.bf16.mxu0 0
        %2782 = vmatpush1.bf16.msra.mxu0 0
        %2783 = vmatprep.subr.bf16.mxu0 0
        %2784 = vmatpush1.bf16.msra.mxu0 0
        %2785 = vmatprep.subr.bf16.mxu0 0
        %2786 = vmatpush1.bf16.msra.mxu0 0
        %2787 = vmatprep.subr.bf16.mxu0 0
        %2788 = vmatpush1.bf16.msra.mxu0 0
        %2789 = vmatprep.subr.bf16.mxu0 0
        %2790 = vmatpush1.bf16.msra.mxu0 0
        %2791 = vmatprep.subr.bf16.mxu0 0
        %2792 = vmatpush1.bf16.msra.mxu0 0
        %2793 = vmatprep.subr.bf16.mxu0 0
        %2794 = vmatpush1.bf16.msra.mxu0 0
        %2795 = vmatprep.subr.bf16.mxu0 0
        %2796 = vmatpush1.bf16.msra.mxu0 0
        %2797 = vmatprep.subr.bf16.mxu0 0
        %2798 = vmatpush1.bf16.msra.mxu0 0
        %2799 = vmatprep.subr.bf16.mxu0 0
        %2800 = vmatpush1.bf16.msra.mxu0 0
        %2801 = vmatprep.subr.bf16.mxu0 0
        %2802 = vmatpush1.bf16.msra.mxu0 0
        %2803 = vmatprep.subr.bf16.mxu0 0
        %2804 = vmatpush1.bf16.msra.mxu0 0
        %2805 = vmatprep.mubr.bf16.mxu0 0
        %2806 = vmatmul.mubr.bf16.gmra.mrb[0].mxu0 %v2771
        %v2807 = vpop.f32.mrb[0].mxu0
        %v2808 = vadd.f32 %v2741, %v2807
        %v2809 = vpop.f32.mrb[0].mxu0
        %v2810 = vpop.f32.mrb[0].mxu0
        %v2811 = vpop.f32.mrb[0].mxu0
        %2812 = vdwg.mxu0
        %s2813 = scalar_lea.vmem %s6, 2
        %v2814 = vld [vmem:[%s2813] sm:$0x1]
        %v2816 = vsel %vm2564, %v2814, 0
        %2818 = vmatprep.subr.bf16.mxu0 0
        %2819 = vmatpush1.bf16.msra.mxu0 %v2573
        %2820 = vmatprep.subr.bf16.mxu0 0
        %2821 = vmatpush1.bf16.msra.mxu0 0
        %2822 = vmatprep.subr.bf16.mxu0 0
        %2823 = vmatpush1.bf16.msra.mxu0 0
        %2824 = vmatprep.subr.bf16.mxu0 0
        %2825 = vmatpush1.bf16.msra.mxu0 0
        %2826 = vmatprep.subr.bf16.mxu0 0
        %2827 = vmatpush1.bf16.msra.mxu0 0
        %2828 = vmatprep.subr.bf16.mxu0 0
        %2829 = vmatpush1.bf16.msra.mxu0 0
        %2830 = vmatprep.subr.bf16.mxu0 0
        %2831 = vmatpush1.bf16.msra.mxu0 0
        %2832 = vmatprep.subr.bf16.mxu0 0
        %2833 = vmatpush1.bf16.msra.mxu0 0
        %2834 = vmatprep.subr.bf16.mxu0 0
        %2835 = vmatpush1.bf16.msra.mxu0 0
        %2836 = vmatprep.subr.bf16.mxu0 0
        %2837 = vmatpush1.bf16.msra.mxu0 0
        %2838 = vmatprep.subr.bf16.mxu0 0
        %2839 = vmatpush1.bf16.msra.mxu0 0
        %2840 = vmatprep.subr.bf16.mxu0 0
        %2841 = vmatpush1.bf16.msra.mxu0 0
        %2842 = vmatprep.subr.bf16.mxu0 0
        %2843 = vmatpush1.bf16.msra.mxu0 0
        %2844 = vmatprep.subr.bf16.mxu0 0
        %2845 = vmatpush1.bf16.msra.mxu0 0
        %2846 = vmatprep.subr.bf16.mxu0 0
        %2847 = vmatpush1.bf16.msra.mxu0 0
        %2848 = vmatprep.subr.bf16.mxu0 0
        %2849 = vmatpush1.bf16.msra.mxu0 0
        %2850 = vmatprep.mubr.bf16.mxu0 0
        %2851 = vmatmul.mubr.bf16.gmra.mrb[0].mxu0 %v2816
        %v2852 = vpop.f32.mrb[0].mxu0
        %v2853 = vadd.f32 0.0, %v2852
        %v2854 = vpop.f32.mrb[0].mxu0
        %v2855 = vpop.f32.mrb[0].mxu0
        %v2856 = vpop.f32.mrb[0].mxu0
        %2857 = vdwg.mxu0
        %v2858 = vpack.c.bf16 %v2853, %v2853
        %s2859 = scalar_lea.vmem %s7, 64
        %v2860 = vld [vmem:[%s2859] sm:$0xf]
        %v2861 = vld [vmem:[%s2859 + $0x4] sm:$0xf]
        %v2862 = vld [vmem:[%s2859 + $0x8] sm:$0xf]
        %v2863 = vld [vmem:[%s2859 + $0xc] sm:$0xf]
        %v2864 = vld [vmem:[%s2859 + $0x10] sm:$0xf]
        %v2865 = vld [vmem:[%s2859 + $0x14] sm:$0xf]
        %v2866 = vld [vmem:[%s2859 + $0x18] sm:$0xf]
        %v2867 = vld [vmem:[%s2859 + $0x1c] sm:$0xf]
        %v2876 = vunpack.c.l.b16 %v2860
        %v2877 = vunpack.c.l.b16 %v2861
        %v2878 = vunpack.c.l.b16 %v2862
        %v2879 = vunpack.c.l.b16 %v2863
        %v2880 = vunpack.c.l.b16 %v2864
        %v2881 = vunpack.c.l.b16 %v2865
        %v2882 = vunpack.c.l.b16 %v2866
        %v2883 = vunpack.c.l.b16 %v2867
        %v2884 = vpack.c.b16 %v2877, %v2876
        %v2885 = vpack.c.b16 %v2879, %v2878
        %v2886 = vpack.c.b16 %v2881, %v2880
        %v2887 = vpack.c.b16 %v2883, %v2882
        %v2893 = vsel %vm706, %v2858, 0
        %2895 = vmatprep.subr.bf16.mxu0 0
        %2896 = vmatpush1.bf16.msra.mxu0 %v2884
        %2897 = vmatprep.subr.bf16.mxu0 0
        %2898 = vmatpush1.bf16.msra.mxu0 %v2885
        %2899 = vmatprep.subr.bf16.mxu0 0
        %2900 = vmatpush1.bf16.msra.mxu0 %v2886
        %2901 = vmatprep.subr.bf16.mxu0 0
        %2902 = vmatpush1.bf16.msra.mxu0 %v2887
        %2903 = vmatprep.subr.bf16.mxu0 0
        %2904 = vmatpush1.bf16.msra.mxu0 0
        %2905 = vmatprep.subr.bf16.mxu0 0
        %2906 = vmatpush1.bf16.msra.mxu0 0
        %2907 = vmatprep.subr.bf16.mxu0 0
        %2908 = vmatpush1.bf16.msra.mxu0 0
        %2909 = vmatprep.subr.bf16.mxu0 0
        %2910 = vmatpush1.bf16.msra.mxu0 0
        %2911 = vmatprep.subr.bf16.mxu0 0
        %2912 = vmatpush1.bf16.msra.mxu0 0
        %2913 = vmatprep.subr.bf16.mxu0 0
        %2914 = vmatpush1.bf16.msra.mxu0 0
        %2915 = vmatprep.subr.bf16.mxu0 0
        %2916 = vmatpush1.bf16.msra.mxu0 0
        %2917 = vmatprep.subr.bf16.mxu0 0
        %2918 = vmatpush1.bf16.msra.mxu0 0
        %2919 = vmatprep.subr.bf16.mxu0 0
        %2920 = vmatpush1.bf16.msra.mxu0 0
        %2921 = vmatprep.subr.bf16.mxu0 0
        %2922 = vmatpush1.bf16.msra.mxu0 0
        %2923 = vmatprep.subr.bf16.mxu0 0
        %2924 = vmatpush1.bf16.msra.mxu0 0
        %2925 = vmatprep.subr.bf16.mxu0 0
        %2926 = vmatpush1.bf16.msra.mxu0 0
        %2927 = vmatprep.mubr.bf16.mxu0 0
        %2928 = vmatmul.mubr.bf16.gmra.mrb[0].mxu0 %v2893
        %v2929 = vpop.f32.mrb[0].mxu0
        %v2930 = vadd.f32 0.0, %v2929
        %v2931 = vpop.f32.mrb[0].mxu0
        %v2932 = vpop.f32.mrb[0].mxu0
        %v2933 = vpop.f32.mrb[0].mxu0
        %2934 = vdwg.mxu0
        %v2935 = vadd.f32 %v2808, %v2930
        %s2936 = scalar_lea.vmem %s6, 3
        %v2937 = vld [vmem:[%s2936] sm:$0x1]
        %v2939 = vsel %vm2564, %v2937, 0
        %2941 = vmatprep.subr.bf16.mxu0 0
        %2942 = vmatpush1.bf16.msra.mxu0 %v2573
        %2943 = vmatprep.subr.bf16.mxu0 0
        %2944 = vmatpush1.bf16.msra.mxu0 0
        %2945 = vmatprep.subr.bf16.mxu0 0
        %2946 = vmatpush1.bf16.msra.mxu0 0
        %2947 = vmatprep.subr.bf16.mxu0 0
        %2948 = vmatpush1.bf16.msra.mxu0 0
        %2949 = vmatprep.subr.bf16.mxu0 0
        %2950 = vmatpush1.bf16.msra.mxu0 0
        %2951 = vmatprep.subr.bf16.mxu0 0
        %2952 = vmatpush1.bf16.msra.mxu0 0
        %2953 = vmatprep.subr.bf16.mxu0 0
        %2954 = vmatpush1.bf16.msra.mxu0 0
        %2955 = vmatprep.subr.bf16.mxu0 0
        %2956 = vmatpush1.bf16.msra.mxu0 0
        %2957 = vmatprep.subr.bf16.mxu0 0
        %2958 = vmatpush1.bf16.msra.mxu0 0
        %2959 = vmatprep.subr.bf16.mxu0 0
        %2960 = vmatpush1.bf16.msra.mxu0 0
        %2961 = vmatprep.subr.bf16.mxu0 0
        %2962 = vmatpush1.bf16.msra.mxu0 0
        %2963 = vmatprep.subr.bf16.mxu0 0
        %2964 = vmatpush1.bf16.msra.mxu0 0
        %2965 = vmatprep.subr.bf16.mxu0 0
        %2966 = vmatpush1.bf16.msra.mxu0 0
        %2967 = vmatprep.subr.bf16.mxu0 0
        %2968 = vmatpush1.bf16.msra.mxu0 0
        %2969 = vmatprep.subr.bf16.mxu0 0
        %2970 = vmatpush1.bf16.msra.mxu0 0
        %2971 = vmatprep.subr.bf16.mxu0 0
        %2972 = vmatpush1.bf16.msra.mxu0 0
        %2973 = vmatprep.mubr.bf16.mxu0 0
        %2974 = vmatmul.mubr.bf16.gmra.mrb[0].mxu0 %v2939
        %v2975 = vpop.f32.mrb[0].mxu0
        %v2976 = vadd.f32 0.0, %v2975
        %v2977 = vpop.f32.mrb[0].mxu0
        %v2978 = vpop.f32.mrb[0].mxu0
        %v2979 = vpop.f32.mrb[0].mxu0
        %2980 = vdwg.mxu0
        %v2981 = vpack.c.bf16 %v2976, %v2976
        %s2982 = scalar_lea.vmem %s7, 96
        %v2983 = vld [vmem:[%s2982] sm:$0xf]
        %v2984 = vld [vmem:[%s2982 + $0x4] sm:$0xf]
        %v2985 = vld [vmem:[%s2982 + $0x8] sm:$0xf]
        %v2986 = vld [vmem:[%s2982 + $0xc] sm:$0xf]
        %v2987 = vld [vmem:[%s2982 + $0x10] sm:$0xf]
        %v2988 = vld [vmem:[%s2982 + $0x14] sm:$0xf]
        %v2989 = vld [vmem:[%s2982 + $0x18] sm:$0xf]
        %v2990 = vld [vmem:[%s2982 + $0x1c] sm:$0xf]
        %v2999 = vunpack.c.l.b16 %v2983
        %v3000 = vunpack.c.l.b16 %v2984
        %v3001 = vunpack.c.l.b16 %v2985
        %v3002 = vunpack.c.l.b16 %v2986
        %v3003 = vunpack.c.l.b16 %v2987
        %v3004 = vunpack.c.l.b16 %v2988
        %v3005 = vunpack.c.l.b16 %v2989
        %v3006 = vunpack.c.l.b16 %v2990
        %v3007 = vpack.c.b16 %v3000, %v2999
        %v3008 = vpack.c.b16 %v3002, %v3001
        %v3009 = vpack.c.b16 %v3004, %v3003
        %v3010 = vpack.c.b16 %v3006, %v3005
        %v3016 = vsel %vm706, %v2981, 0
        %3018 = vmatprep.subr.bf16.mxu0 0
        %3019 = vmatpush1.bf16.msra.mxu0 %v3007
        %3020 = vmatprep.subr.bf16.mxu0 0
        %3021 = vmatpush1.bf16.msra.mxu0 %v3008
        %3022 = vmatprep.subr.bf16.mxu0 0
        %3023 = vmatpush1.bf16.msra.mxu0 %v3009
        %3024 = vmatprep.subr.bf16.mxu0 0
        %3025 = vmatpush1.bf16.msra.mxu0 %v3010
        %3026 = vmatprep.subr.bf16.mxu0 0
        %3027 = vmatpush1.bf16.msra.mxu0 0
        %3028 = vmatprep.subr.bf16.mxu0 0
        %3029 = vmatpush1.bf16.msra.mxu0 0
        %3030 = vmatprep.subr.bf16.mxu0 0
        %3031 = vmatpush1.bf16.msra.mxu0 0
        %3032 = vmatprep.subr.bf16.mxu0 0
        %3033 = vmatpush1.bf16.msra.mxu0 0
        %3034 = vmatprep.subr.bf16.mxu0 0
        %3035 = vmatpush1.bf16.msra.mxu0 0
        %3036 = vmatprep.subr.bf16.mxu0 0
        %3037 = vmatpush1.bf16.msra.mxu0 0
        %3038 = vmatprep.subr.bf16.mxu0 0
        %3039 = vmatpush1.bf16.msra.mxu0 0
        %3040 = vmatprep.subr.bf16.mxu0 0
        %3041 = vmatpush1.bf16.msra.mxu0 0
        %3042 = vmatprep.subr.bf16.mxu0 0
        %3043 = vmatpush1.bf16.msra.mxu0 0
        %3044 = vmatprep.subr.bf16.mxu0 0
        %3045 = vmatpush1.bf16.msra.mxu0 0
        %3046 = vmatprep.subr.bf16.mxu0 0
        %3047 = vmatpush1.bf16.msra.mxu0 0
        %3048 = vmatprep.subr.bf16.mxu0 0
        %3049 = vmatpush1.bf16.msra.mxu0 0
        %3050 = vmatprep.mubr.bf16.mxu0 0
        %3051 = vmatmul.mubr.bf16.gmra.mrb[0].mxu0 %v3016
        %v3052 = vpop.f32.mrb[0].mxu0
        %v3053 = vadd.f32 0.0, %v3052
        %v3054 = vpop.f32.mrb[0].mxu0
        %v3055 = vpop.f32.mrb[0].mxu0
        %v3056 = vpop.f32.mrb[0].mxu0
        %3057 = vdwg.mxu0
        %v3058 = vadd.f32 %v2935, %v3053
        %s3059 = scalar_lea.vmem %s6, 4
        %v3060 = vld [vmem:[%s3059] sm:$0x1]
        %v3062 = vsel %vm2564, %v3060, 0
        %3064 = vmatprep.subr.bf16.mxu0 0
        %3065 = vmatpush1.bf16.msra.mxu0 %v2573
        %3066 = vmatprep.subr.bf16.mxu0 0
        %3067 = vmatpush1.bf16.msra.mxu0 0
        %3068 = vmatprep.subr.bf16.mxu0 0
        %3069 = vmatpush1.bf16.msra.mxu0 0
        %3070 = vmatprep.subr.bf16.mxu0 0
        %3071 = vmatpush1.bf16.msra.mxu0 0
        %3072 = vmatprep.subr.bf16.mxu0 0
        %3073 = vmatpush1.bf16.msra.mxu0 0
        %3074 = vmatprep.subr.bf16.mxu0 0
        %3075 = vmatpush1.bf16.msra.mxu0 0
        %3076 = vmatprep.subr.bf16.mxu0 0
        %3077 = vmatpush1.bf16.msra.mxu0 0
        %3078 = vmatprep.subr.bf16.mxu0 0
        %3079 = vmatpush1.bf16.msra.mxu0 0
        %3080 = vmatprep.subr.bf16.mxu0 0
        %3081 = vmatpush1.bf16.msra.mxu0 0
        %3082 = vmatprep.subr.bf16.mxu0 0
        %3083 = vmatpush1.bf16.msra.mxu0 0
        %3084 = vmatprep.subr.bf16.mxu0 0
        %3085 = vmatpush1.bf16.msra.mxu0 0
        %3086 = vmatprep.subr.bf16.mxu0 0
        %3087 = vmatpush1.bf16.msra.mxu0 0
        %3088 = vmatprep.subr.bf16.mxu0 0
        %3089 = vmatpush1.bf16.msra.mxu0 0
        %3090 = vmatprep.subr.bf16.mxu0 0
        %3091 = vmatpush1.bf16.msra.mxu0 0
        %3092 = vmatprep.subr.bf16.mxu0 0
        %3093 = vmatpush1.bf16.msra.mxu0 0
        %3094 = vmatprep.subr.bf16.mxu0 0
        %3095 = vmatpush1.bf16.msra.mxu0 0
        %3096 = vmatprep.mubr.bf16.mxu0 0
        %3097 = vmatmul.mubr.bf16.gmra.mrb[0].mxu0 %v3062
        %v3098 = vpop.f32.mrb[0].mxu0
        %v3099 = vadd.f32 0.0, %v3098
        %v3100 = vpop.f32.mrb[0].mxu0
        %v3101 = vpop.f32.mrb[0].mxu0
        %v3102 = vpop.f32.mrb[0].mxu0
        %3103 = vdwg.mxu0
        %v3104 = vpack.c.bf16 %v3099, %v3099
        %s3105 = scalar_lea.vmem %s7, 128
        %v3106 = vld [vmem:[%s3105] sm:$0xf]
        %v3107 = vld [vmem:[%s3105 + $0x4] sm:$0xf]
        %v3108 = vld [vmem:[%s3105 + $0x8] sm:$0xf]
        %v3109 = vld [vmem:[%s3105 + $0xc] sm:$0xf]
        %v3110 = vld [vmem:[%s3105 + $0x10] sm:$0xf]
        %v3111 = vld [vmem:[%s3105 + $0x14] sm:$0xf]
        %v3112 = vld [vmem:[%s3105 + $0x18] sm:$0xf]
        %v3113 = vld [vmem:[%s3105 + $0x1c] sm:$0xf]
        %v3122 = vunpack.c.l.b16 %v3106
        %v3123 = vunpack.c.l.b16 %v3107
        %v3124 = vunpack.c.l.b16 %v3108
        %v3125 = vunpack.c.l.b16 %v3109
        %v3126 = vunpack.c.l.b16 %v3110
        %v3127 = vunpack.c.l.b16 %v3111
        %v3128 = vunpack.c.l.b16 %v3112
        %v3129 = vunpack.c.l.b16 %v3113
        %v3130 = vpack.c.b16 %v3123, %v3122
        %v3131 = vpack.c.b16 %v3125, %v3124
        %v3132 = vpack.c.b16 %v3127, %v3126
        %v3133 = vpack.c.b16 %v3129, %v3128
        %v3139 = vsel %vm706, %v3104, 0
        %3141 = vmatprep.subr.bf16.mxu0 0
        %3142 = vmatpush1.bf16.msra.mxu0 %v3130
        %3143 = vmatprep.subr.bf16.mxu0 0
        %3144 = vmatpush1.bf16.msra.mxu0 %v3131
        %3145 = vmatprep.subr.bf16.mxu0 0
        %3146 = vmatpush1.bf16.msra.mxu0 %v3132
        %3147 = vmatprep.subr.bf16.mxu0 0
        %3148 = vmatpush1.bf16.msra.mxu0 %v3133
        %3149 = vmatprep.subr.bf16.mxu0 0
        %3150 = vmatpush1.bf16.msra.mxu0 0
        %3151 = vmatprep.subr.bf16.mxu0 0
        %3152 = vmatpush1.bf16.msra.mxu0 0
        %3153 = vmatprep.subr.bf16.mxu0 0
        %3154 = vmatpush1.bf16.msra.mxu0 0
        %3155 = vmatprep.subr.bf16.mxu0 0
        %3156 = vmatpush1.bf16.msra.mxu0 0
        %3157 = vmatprep.subr.bf16.mxu0 0
        %3158 = vmatpush1.bf16.msra.mxu0 0
        %3159 = vmatprep.subr.bf16.mxu0 0
        %3160 = vmatpush1.bf16.msra.mxu0 0
        %3161 = vmatprep.subr.bf16.mxu0 0
        %3162 = vmatpush1.bf16.msra.mxu0 0
        %3163 = vmatprep.subr.bf16.mxu0 0
        %3164 = vmatpush1.bf16.msra.mxu0 0
        %3165 = vmatprep.subr.bf16.mxu0 0
        %3166 = vmatpush1.bf16.msra.mxu0 0
        %3167 = vmatprep.subr.bf16.mxu0 0
        %3168 = vmatpush1.bf16.msra.mxu0 0
        %3169 = vmatprep.subr.bf16.mxu0 0
        %3170 = vmatpush1.bf16.msra.mxu0 0
        %3171 = vmatprep.subr.bf16.mxu0 0
        %3172 = vmatpush1.bf16.msra.mxu0 0
        %3173 = vmatprep.mubr.bf16.mxu0 0
        %3174 = vmatmul.mubr.bf16.gmra.mrb[0].mxu0 %v3139
        %v3175 = vpop.f32.mrb[0].mxu0
        %v3176 = vadd.f32 0.0, %v3175
        %v3177 = vpop.f32.mrb[0].mxu0
        %v3178 = vpop.f32.mrb[0].mxu0
        %v3179 = vpop.f32.mrb[0].mxu0
        %3180 = vdwg.mxu0
        %v3181 = vadd.f32 %v3058, %v3176
        %s3182 = scalar_lea.vmem %s6, 5
        %v3183 = vld [vmem:[%s3182] sm:$0x1]
        %v3185 = vsel %vm2564, %v3183, 0
        %3187 = vmatprep.subr.bf16.mxu0 0
        %3188 = vmatpush1.bf16.msra.mxu0 %v2573
        %3189 = vmatprep.subr.bf16.mxu0 0
        %3190 = vmatpush1.bf16.msra.mxu0 0
        %3191 = vmatprep.subr.bf16.mxu0 0
        %3192 = vmatpush1.bf16.msra.mxu0 0
        %3193 = vmatprep.subr.bf16.mxu0 0
        %3194 = vmatpush1.bf16.msra.mxu0 0
        %3195 = vmatprep.subr.bf16.mxu0 0
        %3196 = vmatpush1.bf16.msra.mxu0 0
        %3197 = vmatprep.subr.bf16.mxu0 0
        %3198 = vmatpush1.bf16.msra.mxu0 0
        %3199 = vmatprep.subr.bf16.mxu0 0
        %3200 = vmatpush1.bf16.msra.mxu0 0
        %3201 = vmatprep.subr.bf16.mxu0 0
        %3202 = vmatpush1.bf16.msra.mxu0 0
        %3203 = vmatprep.subr.bf16.mxu0 0
        %3204 = vmatpush1.bf16.msra.mxu0 0
        %3205 = vmatprep.subr.bf16.mxu0 0
        %3206 = vmatpush1.bf16.msra.mxu0 0
        %3207 = vmatprep.subr.bf16.mxu0 0
        %3208 = vmatpush1.bf16.msra.mxu0 0
        %3209 = vmatprep.subr.bf16.mxu0 0
        %3210 = vmatpush1.bf16.msra.mxu0 0
        %3211 = vmatprep.subr.bf16.mxu0 0
        %3212 = vmatpush1.bf16.msra.mxu0 0
        %3213 = vmatprep.subr.bf16.mxu0 0
        %3214 = vmatpush1.bf16.msra.mxu0 0
        %3215 = vmatprep.subr.bf16.mxu0 0
        %3216 = vmatpush1.bf16.msra.mxu0 0
        %3217 = vmatprep.subr.bf16.mxu0 0
        %3218 = vmatpush1.bf16.msra.mxu0 0
        %3219 = vmatprep.mubr.bf16.mxu0 0
        %3220 = vmatmul.mubr.bf16.gmra.mrb[0].mxu0 %v3185
        %v3221 = vpop.f32.mrb[0].mxu0
        %v3222 = vadd.f32 0.0, %v3221
        %v3223 = vpop.f32.mrb[0].mxu0
        %v3224 = vpop.f32.mrb[0].mxu0
        %v3225 = vpop.f32.mrb[0].mxu0
        %3226 = vdwg.mxu0
        %v3227 = vpack.c.bf16 %v3222, %v3222
        %s3228 = scalar_lea.vmem %s7, 160
        %v3229 = vld [vmem:[%s3228] sm:$0xf]
        %v3230 = vld [vmem:[%s3228 + $0x4] sm:$0xf]
        %v3231 = vld [vmem:[%s3228 + $0x8] sm:$0xf]
        %v3232 = vld [vmem:[%s3228 + $0xc] sm:$0xf]
        %v3233 = vld [vmem:[%s3228 + $0x10] sm:$0xf]
        %v3234 = vld [vmem:[%s3228 + $0x14] sm:$0xf]
        %v3235 = vld [vmem:[%s3228 + $0x18] sm:$0xf]
        %v3236 = vld [vmem:[%s3228 + $0x1c] sm:$0xf]
        %v3245 = vunpack.c.l.b16 %v3229
        %v3246 = vunpack.c.l.b16 %v3230
        %v3247 = vunpack.c.l.b16 %v3231
        %v3248 = vunpack.c.l.b16 %v3232
        %v3249 = vunpack.c.l.b16 %v3233
        %v3250 = vunpack.c.l.b16 %v3234
        %v3251 = vunpack.c.l.b16 %v3235
        %v3252 = vunpack.c.l.b16 %v3236
        %v3253 = vpack.c.b16 %v3246, %v3245
        %v3254 = vpack.c.b16 %v3248, %v3247
        %v3255 = vpack.c.b16 %v3250, %v3249
        %v3256 = vpack.c.b16 %v3252, %v3251
        %v3262 = vsel %vm706, %v3227, 0
        %3264 = vmatprep.subr.bf16.mxu0 0
        %3265 = vmatpush1.bf16.msra.mxu0 %v3253
        %3266 = vmatprep.subr.bf16.mxu0 0
        %3267 = vmatpush1.bf16.msra.mxu0 %v3254
        %3268 = vmatprep.subr.bf16.mxu0 0
        %3269 = vmatpush1.bf16.msra.mxu0 %v3255
        %3270 = vmatprep.subr.bf16.mxu0 0
        %3271 = vmatpush1.bf16.msra.mxu0 %v3256
        %3272 = vmatprep.subr.bf16.mxu0 0
        %3273 = vmatpush1.bf16.msra.mxu0 0
        %3274 = vmatprep.subr.bf16.mxu0 0
        %3275 = vmatpush1.bf16.msra.mxu0 0
        %3276 = vmatprep.subr.bf16.mxu0 0
        %3277 = vmatpush1.bf16.msra.mxu0 0
        %3278 = vmatprep.subr.bf16.mxu0 0
        %3279 = vmatpush1.bf16.msra.mxu0 0
        %3280 = vmatprep.subr.bf16.mxu0 0
        %3281 = vmatpush1.bf16.msra.mxu0 0
        %3282 = vmatprep.subr.bf16.mxu0 0
        %3283 = vmatpush1.bf16.msra.mxu0 0
        %3284 = vmatprep.subr.bf16.mxu0 0
        %3285 = vmatpush1.bf16.msra.mxu0 0
        %3286 = vmatprep.subr.bf16.mxu0 0
        %3287 = vmatpush1.bf16.msra.mxu0 0
        %3288 = vmatprep.subr.bf16.mxu0 0
        %3289 = vmatpush1.bf16.msra.mxu0 0
        %3290 = vmatprep.subr.bf16.mxu0 0
        %3291 = vmatpush1.bf16.msra.mxu0 0
        %3292 = vmatprep.subr.bf16.mxu0 0
        %3293 = vmatpush1.bf16.msra.mxu0 0
        %3294 = vmatprep.subr.bf16.mxu0 0
        %3295 = vmatpush1.bf16.msra.mxu0 0
        %3296 = vmatprep.mubr.bf16.mxu0 0
        %3297 = vmatmul.mubr.bf16.gmra.mrb[0].mxu0 %v3262
        %v3298 = vpop.f32.mrb[0].mxu0
        %v3299 = vadd.f32 0.0, %v3298
        %v3300 = vpop.f32.mrb[0].mxu0
        %v3301 = vpop.f32.mrb[0].mxu0
        %v3302 = vpop.f32.mrb[0].mxu0
        %3303 = vdwg.mxu0
        %v3304 = vadd.f32 %v3181, %v3299
        %s3305 = scalar_lea.vmem %s6, 6
        %v3306 = vld [vmem:[%s3305] sm:$0x1]
        %v3308 = vsel %vm2564, %v3306, 0
        %3310 = vmatprep.subr.bf16.mxu0 0
        %3311 = vmatpush1.bf16.msra.mxu0 %v2573
        %3312 = vmatprep.subr.bf16.mxu0 0
        %3313 = vmatpush1.bf16.msra.mxu0 0
        %3314 = vmatprep.subr.bf16.mxu0 0
        %3315 = vmatpush1.bf16.msra.mxu0 0
        %3316 = vmatprep.subr.bf16.mxu0 0
        %3317 = vmatpush1.bf16.msra.mxu0 0
        %3318 = vmatprep.subr.bf16.mxu0 0
        %3319 = vmatpush1.bf16.msra.mxu0 0
        %3320 = vmatprep.subr.bf16.mxu0 0
        %3321 = vmatpush1.bf16.msra.mxu0 0
        %3322 = vmatprep.subr.bf16.mxu0 0
        %3323 = vmatpush1.bf16.msra.mxu0 0
        %3324 = vmatprep.subr.bf16.mxu0 0
        %3325 = vmatpush1.bf16.msra.mxu0 0
        %3326 = vmatprep.subr.bf16.mxu0 0
        %3327 = vmatpush1.bf16.msra.mxu0 0
        %3328 = vmatprep.subr.bf16.mxu0 0
        %3329 = vmatpush1.bf16.msra.mxu0 0
        %3330 = vmatprep.subr.bf16.mxu0 0
        %3331 = vmatpush1.bf16.msra.mxu0 0
        %3332 = vmatprep.subr.bf16.mxu0 0
        %3333 = vmatpush1.bf16.msra.mxu0 0
        %3334 = vmatprep.subr.bf16.mxu0 0
        %3335 = vmatpush1.bf16.msra.mxu0 0
        %3336 = vmatprep.subr.bf16.mxu0 0
        %3337 = vmatpush1.bf16.msra.mxu0 0
        %3338 = vmatprep.subr.bf16.mxu0 0
        %3339 = vmatpush1.bf16.msra.mxu0 0
        %3340 = vmatprep.subr.bf16.mxu0 0
        %3341 = vmatpush1.bf16.msra.mxu0 0
        %3342 = vmatprep.mubr.bf16.mxu0 0
        %3343 = vmatmul.mubr.bf16.gmra.mrb[0].mxu0 %v3308
        %v3344 = vpop.f32.mrb[0].mxu0
        %v3345 = vadd.f32 0.0, %v3344
        %v3346 = vpop.f32.mrb[0].mxu0
        %v3347 = vpop.f32.mrb[0].mxu0
        %v3348 = vpop.f32.mrb[0].mxu0
        %3349 = vdwg.mxu0
        %v3350 = vpack.c.bf16 %v3345, %v3345
        %s3351 = scalar_lea.vmem %s7, 192
        %v3352 = vld [vmem:[%s3351] sm:$0xf]
        %v3353 = vld [vmem:[%s3351 + $0x4] sm:$0xf]
        %v3354 = vld [vmem:[%s3351 + $0x8] sm:$0xf]
        %v3355 = vld [vmem:[%s3351 + $0xc] sm:$0xf]
        %v3356 = vld [vmem:[%s3351 + $0x10] sm:$0xf]
        %v3357 = vld [vmem:[%s3351 + $0x14] sm:$0xf]
        %v3358 = vld [vmem:[%s3351 + $0x18] sm:$0xf]
        %v3359 = vld [vmem:[%s3351 + $0x1c] sm:$0xf]
        %v3368 = vunpack.c.l.b16 %v3352
        %v3369 = vunpack.c.l.b16 %v3353
        %v3370 = vunpack.c.l.b16 %v3354
        %v3371 = vunpack.c.l.b16 %v3355
        %v3372 = vunpack.c.l.b16 %v3356
        %v3373 = vunpack.c.l.b16 %v3357
        %v3374 = vunpack.c.l.b16 %v3358
        %v3375 = vunpack.c.l.b16 %v3359
        %v3376 = vpack.c.b16 %v3369, %v3368
        %v3377 = vpack.c.b16 %v3371, %v3370
        %v3378 = vpack.c.b16 %v3373, %v3372
        %v3379 = vpack.c.b16 %v3375, %v3374
        %v3385 = vsel %vm706, %v3350, 0
        %3387 = vmatprep.subr.bf16.mxu0 0
        %3388 = vmatpush1.bf16.msra.mxu0 %v3376
        %3389 = vmatprep.subr.bf16.mxu0 0
        %3390 = vmatpush1.bf16.msra.mxu0 %v3377
        %3391 = vmatprep.subr.bf16.mxu0 0
        %3392 = vmatpush1.bf16.msra.mxu0 %v3378
        %3393 = vmatprep.subr.bf16.mxu0 0
        %3394 = vmatpush1.bf16.msra.mxu0 %v3379
        %3395 = vmatprep.subr.bf16.mxu0 0
        %3396 = vmatpush1.bf16.msra.mxu0 0
        %3397 = vmatprep.subr.bf16.mxu0 0
        %3398 = vmatpush1.bf16.msra.mxu0 0
        %3399 = vmatprep.subr.bf16.mxu0 0
        %3400 = vmatpush1.bf16.msra.mxu0 0
        %3401 = vmatprep.subr.bf16.mxu0 0
        %3402 = vmatpush1.bf16.msra.mxu0 0
        %3403 = vmatprep.subr.bf16.mxu0 0
        %3404 = vmatpush1.bf16.msra.mxu0 0
        %3405 = vmatprep.subr.bf16.mxu0 0
        %3406 = vmatpush1.bf16.msra.mxu0 0
        %3407 = vmatprep.subr.bf16.mxu0 0
        %3408 = vmatpush1.bf16.msra.mxu0 0
        %3409 = vmatprep.subr.bf16.mxu0 0
        %3410 = vmatpush1.bf16.msra.mxu0 0
        %3411 = vmatprep.subr.bf16.mxu0 0
        %3412 = vmatpush1.bf16.msra.mxu0 0
        %3413 = vmatprep.subr.bf16.mxu0 0
        %3414 = vmatpush1.bf16.msra.mxu0 0
        %3415 = vmatprep.subr.bf16.mxu0 0
        %3416 = vmatpush1.bf16.msra.mxu0 0
        %3417 = vmatprep.subr.bf16.mxu0 0
        %3418 = vmatpush1.bf16.msra.mxu0 0
        %3419 = vmatprep.mubr.bf16.mxu0 0
        %3420 = vmatmul.mubr.bf16.gmra.mrb[0].mxu0 %v3385
        %v3421 = vpop.f32.mrb[0].mxu0
        %v3422 = vadd.f32 0.0, %v3421
        %v3423 = vpop.f32.mrb[0].mxu0
        %v3424 = vpop.f32.mrb[0].mxu0
        %v3425 = vpop.f32.mrb[0].mxu0
        %3426 = vdwg.mxu0
        %v3427 = vadd.f32 %v3304, %v3422
        %s3428 = scalar_lea.vmem %s6, 7
        %v3429 = vld [vmem:[%s3428] sm:$0x1]
        %v3431 = vsel %vm2564, %v3429, 0
        %3433 = vmatprep.subr.bf16.mxu0 0
        %3434 = vmatpush1.bf16.msra.mxu0 %v2573
        %3435 = vmatprep.subr.bf16.mxu0 0
        %3436 = vmatpush1.bf16.msra.mxu0 0
        %3437 = vmatprep.subr.bf16.mxu0 0
        %3438 = vmatpush1.bf16.msra.mxu0 0
        %3439 = vmatprep.subr.bf16.mxu0 0
        %3440 = vmatpush1.bf16.msra.mxu0 0
        %3441 = vmatprep.subr.bf16.mxu0 0
        %3442 = vmatpush1.bf16.msra.mxu0 0
        %3443 = vmatprep.subr.bf16.mxu0 0
        %3444 = vmatpush1.bf16.msra.mxu0 0
        %3445 = vmatprep.subr.bf16.mxu0 0
        %3446 = vmatpush1.bf16.msra.mxu0 0
        %3447 = vmatprep.subr.bf16.mxu0 0
        %3448 = vmatpush1.bf16.msra.mxu0 0
        %3449 = vmatprep.subr.bf16.mxu0 0
        %3450 = vmatpush1.bf16.msra.mxu0 0
        %3451 = vmatprep.subr.bf16.mxu0 0
        %3452 = vmatpush1.bf16.msra.mxu0 0
        %3453 = vmatprep.subr.bf16.mxu0 0
        %3454 = vmatpush1.bf16.msra.mxu0 0
        %3455 = vmatprep.subr.bf16.mxu0 0
        %3456 = vmatpush1.bf16.msra.mxu0 0
        %3457 = vmatprep.subr.bf16.mxu0 0
        %3458 = vmatpush1.bf16.msra.mxu0 0
        %3459 = vmatprep.subr.bf16.mxu0 0
        %3460 = vmatpush1.bf16.msra.mxu0 0
        %3461 = vmatprep.subr.bf16.mxu0 0
        %3462 = vmatpush1.bf16.msra.mxu0 0
        %3463 = vmatprep.subr.bf16.mxu0 0
        %3464 = vmatpush1.bf16.msra.mxu0 0
        %3465 = vmatprep.mubr.bf16.mxu0 0
        %3466 = vmatmul.mubr.bf16.gmra.mrb[0].mxu0 %v3431
        %v3467 = vpop.f32.mrb[0].mxu0
        %v3468 = vadd.f32 0.0, %v3467
        %v3469 = vpop.f32.mrb[0].mxu0
        %v3470 = vpop.f32.mrb[0].mxu0
        %v3471 = vpop.f32.mrb[0].mxu0
        %3472 = vdwg.mxu0
        %v3473 = vpack.c.bf16 %v3468, %v3468
        %s3474 = scalar_lea.vmem %s7, 224
        %v3475 = vld [vmem:[%s3474] sm:$0xf]
        %v3476 = vld [vmem:[%s3474 + $0x4] sm:$0xf]
        %v3477 = vld [vmem:[%s3474 + $0x8] sm:$0xf]
        %v3478 = vld [vmem:[%s3474 + $0xc] sm:$0xf]
        %v3479 = vld [vmem:[%s3474 + $0x10] sm:$0xf]
        %v3480 = vld [vmem:[%s3474 + $0x14] sm:$0xf]
        %v3481 = vld [vmem:[%s3474 + $0x18] sm:$0xf]
        %v3482 = vld [vmem:[%s3474 + $0x1c] sm:$0xf]
        %v3491 = vunpack.c.l.b16 %v3475
        %v3492 = vunpack.c.l.b16 %v3476
        %v3493 = vunpack.c.l.b16 %v3477
        %v3494 = vunpack.c.l.b16 %v3478
        %v3495 = vunpack.c.l.b16 %v3479
        %v3496 = vunpack.c.l.b16 %v3480
        %v3497 = vunpack.c.l.b16 %v3481
        %v3498 = vunpack.c.l.b16 %v3482
        %v3499 = vpack.c.b16 %v3492, %v3491
        %v3500 = vpack.c.b16 %v3494, %v3493
        %v3501 = vpack.c.b16 %v3496, %v3495
        %v3502 = vpack.c.b16 %v3498, %v3497
        %v3508 = vsel %vm706, %v3473, 0
        %3510 = vmatprep.subr.bf16.mxu0 0
        %3511 = vmatpush1.bf16.msra.mxu0 %v3499
        %3512 = vmatprep.subr.bf16.mxu0 0
        %3513 = vmatpush1.bf16.msra.mxu0 %v3500
        %3514 = vmatprep.subr.bf16.mxu0 0
        %3515 = vmatpush1.bf16.msra.mxu0 %v3501
        %3516 = vmatprep.subr.bf16.mxu0 0
        %3517 = vmatpush1.bf16.msra.mxu0 %v3502
        %3518 = vmatprep.subr.bf16.mxu0 0
        %3519 = vmatpush1.bf16.msra.mxu0 0
        %3520 = vmatprep.subr.bf16.mxu0 0
        %3521 = vmatpush1.bf16.msra.mxu0 0
        %3522 = vmatprep.subr.bf16.mxu0 0
        %3523 = vmatpush1.bf16.msra.mxu0 0
        %3524 = vmatprep.subr.bf16.mxu0 0
        %3525 = vmatpush1.bf16.msra.mxu0 0
        %3526 = vmatprep.subr.bf16.mxu0 0
        %3527 = vmatpush1.bf16.msra.mxu0 0
        %3528 = vmatprep.subr.bf16.mxu0 0
        %3529 = vmatpush1.bf16.msra.mxu0 0
        %3530 = vmatprep.subr.bf16.mxu0 0
        %3531 = vmatpush1.bf16.msra.mxu0 0
        %3532 = vmatprep.subr.bf16.mxu0 0
        %3533 = vmatpush1.bf16.msra.mxu0 0
        %3534 = vmatprep.subr.bf16.mxu0 0
        %3535 = vmatpush1.bf16.msra.mxu0 0
        %3536 = vmatprep.subr.bf16.mxu0 0
        %3537 = vmatpush1.bf16.msra.mxu0 0
        %3538 = vmatprep.subr.bf16.mxu0 0
        %3539 = vmatpush1.bf16.msra.mxu0 0
        %3540 = vmatprep.subr.bf16.mxu0 0
        %3541 = vmatpush1.bf16.msra.mxu0 0
        %3542 = vmatprep.mubr.bf16.mxu0 0
        %3543 = vmatmul.mubr.bf16.gmra.mrb[0].mxu0 %v3508
        %v3544 = vpop.f32.mrb[0].mxu0
        %v3545 = vadd.f32 0.0, %v3544
        %v3546 = vpop.f32.mrb[0].mxu0
        %v3547 = vpop.f32.mrb[0].mxu0
        %v3548 = vpop.f32.mrb[0].mxu0
        %3549 = vdwg.mxu0
        %v3550 = vadd.f32 %v3427, %v3545
        %s3551 = scalar_lea.vmem %s6, 8
        %v3552 = vld [vmem:[%s3551] sm:$0x1]
        %v3554 = vsel %vm2564, %v3552, 0
        %3556 = vmatprep.subr.bf16.mxu0 0
        %3557 = vmatpush1.bf16.msra.mxu0 %v2573
        %3558 = vmatprep.subr.bf16.mxu0 0
        %3559 = vmatpush1.bf16.msra.mxu0 0
        %3560 = vmatprep.subr.bf16.mxu0 0
        %3561 = vmatpush1.bf16.msra.mxu0 0
        %3562 = vmatprep.subr.bf16.mxu0 0
        %3563 = vmatpush1.bf16.msra.mxu0 0
        %3564 = vmatprep.subr.bf16.mxu0 0
        %3565 = vmatpush1.bf16.msra.mxu0 0
        %3566 = vmatprep.subr.bf16.mxu0 0
        %3567 = vmatpush1.bf16.msra.mxu0 0
        %3568 = vmatprep.subr.bf16.mxu0 0
        %3569 = vmatpush1.bf16.msra.mxu0 0
        %3570 = vmatprep.subr.bf16.mxu0 0
        %3571 = vmatpush1.bf16.msra.mxu0 0
        %3572 = vmatprep.subr.bf16.mxu0 0
        %3573 = vmatpush1.bf16.msra.mxu0 0
        %3574 = vmatprep.subr.bf16.mxu0 0
        %3575 = vmatpush1.bf16.msra.mxu0 0
        %3576 = vmatprep.subr.bf16.mxu0 0
        %3577 = vmatpush1.bf16.msra.mxu0 0
        %3578 = vmatprep.subr.bf16.mxu0 0
        %3579 = vmatpush1.bf16.msra.mxu0 0
        %3580 = vmatprep.subr.bf16.mxu0 0
        %3581 = vmatpush1.bf16.msra.mxu0 0
        %3582 = vmatprep.subr.bf16.mxu0 0
        %3583 = vmatpush1.bf16.msra.mxu0 0
        %3584 = vmatprep.subr.bf16.mxu0 0
        %3585 = vmatpush1.bf16.msra.mxu0 0
        %3586 = vmatprep.subr.bf16.mxu0 0
        %3587 = vmatpush1.bf16.msra.mxu0 0
        %3588 = vmatprep.mubr.bf16.mxu0 0
        %3589 = vmatmul.mubr.bf16.gmra.mrb[0].mxu0 %v3554
        %v3590 = vpop.f32.mrb[0].mxu0
        %v3591 = vadd.f32 0.0, %v3590
        %v3592 = vpop.f32.mrb[0].mxu0
        %v3593 = vpop.f32.mrb[0].mxu0
        %v3594 = vpop.f32.mrb[0].mxu0
        %3595 = vdwg.mxu0
        %v3596 = vpack.c.bf16 %v3591, %v3591
        %s3597 = scalar_lea.vmem %s7, 256
        %v3598 = vld [vmem:[%s3597] sm:$0xf]
        %v3599 = vld [vmem:[%s3597 + $0x4] sm:$0xf]
        %v3600 = vld [vmem:[%s3597 + $0x8] sm:$0xf]
        %v3601 = vld [vmem:[%s3597 + $0xc] sm:$0xf]
        %v3602 = vld [vmem:[%s3597 + $0x10] sm:$0xf]
        %v3603 = vld [vmem:[%s3597 + $0x14] sm:$0xf]
        %v3604 = vld [vmem:[%s3597 + $0x18] sm:$0xf]
        %v3605 = vld [vmem:[%s3597 + $0x1c] sm:$0xf]
        %v3614 = vunpack.c.l.b16 %v3598
        %v3615 = vunpack.c.l.b16 %v3599
        %v3616 = vunpack.c.l.b16 %v3600
        %v3617 = vunpack.c.l.b16 %v3601
        %v3618 = vunpack.c.l.b16 %v3602
        %v3619 = vunpack.c.l.b16 %v3603
        %v3620 = vunpack.c.l.b16 %v3604
        %v3621 = vunpack.c.l.b16 %v3605
        %v3622 = vpack.c.b16 %v3615, %v3614
        %v3623 = vpack.c.b16 %v3617, %v3616
        %v3624 = vpack.c.b16 %v3619, %v3618
        %v3625 = vpack.c.b16 %v3621, %v3620
        %v3631 = vsel %vm706, %v3596, 0
        %3633 = vmatprep.subr.bf16.mxu0 0
        %3634 = vmatpush1.bf16.msra.mxu0 %v3622
        %3635 = vmatprep.subr.bf16.mxu0 0
        %3636 = vmatpush1.bf16.msra.mxu0 %v3623
        %3637 = vmatprep.subr.bf16.mxu0 0
        %3638 = vmatpush1.bf16.msra.mxu0 %v3624
        %3639 = vmatprep.subr.bf16.mxu0 0
        %3640 = vmatpush1.bf16.msra.mxu0 %v3625
        %3641 = vmatprep.subr.bf16.mxu0 0
        %3642 = vmatpush1.bf16.msra.mxu0 0
        %3643 = vmatprep.subr.bf16.mxu0 0
        %3644 = vmatpush1.bf16.msra.mxu0 0
        %3645 = vmatprep.subr.bf16.mxu0 0
        %3646 = vmatpush1.bf16.msra.mxu0 0
        %3647 = vmatprep.subr.bf16.mxu0 0
        %3648 = vmatpush1.bf16.msra.mxu0 0
        %3649 = vmatprep.subr.bf16.mxu0 0
        %3650 = vmatpush1.bf16.msra.mxu0 0
        %3651 = vmatprep.subr.bf16.mxu0 0
        %3652 = vmatpush1.bf16.msra.mxu0 0
        %3653 = vmatprep.subr.bf16.mxu0 0
        %3654 = vmatpush1.bf16.msra.mxu0 0
        %3655 = vmatprep.subr.bf16.mxu0 0
        %3656 = vmatpush1.bf16.msra.mxu0 0
        %3657 = vmatprep.subr.bf16.mxu0 0
        %3658 = vmatpush1.bf16.msra.mxu0 0
        %3659 = vmatprep.subr.bf16.mxu0 0
        %3660 = vmatpush1.bf16.msra.mxu0 0
        %3661 = vmatprep.subr.bf16.mxu0 0
        %3662 = vmatpush1.bf16.msra.mxu0 0
        %3663 = vmatprep.subr.bf16.mxu0 0
        %3664 = vmatpush1.bf16.msra.mxu0 0
        %3665 = vmatprep.mubr.bf16.mxu0 0
        %3666 = vmatmul.mubr.bf16.gmra.mrb[0].mxu0 %v3631
        %v3667 = vpop.f32.mrb[0].mxu0
        %v3668 = vadd.f32 0.0, %v3667
        %v3669 = vpop.f32.mrb[0].mxu0
        %v3670 = vpop.f32.mrb[0].mxu0
        %v3671 = vpop.f32.mrb[0].mxu0
        %3672 = vdwg.mxu0
        %v3673 = vadd.f32 %v3550, %v3668
        %v3674 = vld [vmem:[%s8] sm:$0x1]
        %v3675 = vadd.f32 %v3673, %v3674
        %v3676 = vmax.f32 %v3675, 0.0
        %v3677 = vpack.c.bf16 %v3676, %v3676
        %v3678 = vld [vmem:[%s9] sm:$0xff]
        %v3679 = vld [vmem:[%s9 + $0x8] sm:$0xff]
        %v3680 = vld [vmem:[%s9 + $0x10] sm:$0xff]
        %v3681 = vld [vmem:[%s9 + $0x18] sm:$0xff]
        %v3682 = vld [vmem:[%s9 + $0x20] sm:$0xff]
        %v3683 = vld [vmem:[%s9 + $0x28] sm:$0xff]
        %v3684 = vld [vmem:[%s9 + $0x30] sm:$0xff]
        %v3685 = vld [vmem:[%s9 + $0x38] sm:$0xff]
        %v3686 = vld [vmem:[%s9 + $0x40] sm:$0xff]
        %v3687 = vld [vmem:[%s9 + $0x48] sm:$0xff]
        %v3688 = vld [vmem:[%s9 + $0x50] sm:$0xff]
        %v3689 = vld [vmem:[%s9 + $0x58] sm:$0xff]
        %v3690 = vld [vmem:[%s9 + $0x60] sm:$0xff]
        %v3691 = vld [vmem:[%s9 + $0x68] sm:$0xff]
        %v3692 = vld [vmem:[%s9 + $0x70] sm:$0xff]
        %v3693 = vld [vmem:[%s9 + $0x78] sm:$0xff]
        %v3694 = vld [vmem:[%s10] sm:$0xf]
        %v3711 = vunpack.c.l.b16 %v3678
        %v3712 = vunpack.c.h.b16 %v3678
        %v3713 = vunpack.c.l.b16 %v3679
        %v3714 = vunpack.c.h.b16 %v3679
        %v3715 = vunpack.c.l.b16 %v3680
        %v3716 = vunpack.c.h.b16 %v3680
        %v3717 = vunpack.c.l.b16 %v3681
        %v3718 = vunpack.c.h.b16 %v3681
        %v3719 = vunpack.c.l.b16 %v3682
        %v3720 = vunpack.c.h.b16 %v3682
        %v3721 = vunpack.c.l.b16 %v3683
        %v3722 = vunpack.c.h.b16 %v3683
        %v3723 = vunpack.c.l.b16 %v3684
        %v3724 = vunpack.c.h.b16 %v3684
        %v3725 = vunpack.c.l.b16 %v3685
        %v3726 = vunpack.c.h.b16 %v3685
        %v3727 = vunpack.c.l.b16 %v3686
        %v3728 = vunpack.c.h.b16 %v3686
        %v3729 = vunpack.c.l.b16 %v3687
        %v3730 = vunpack.c.h.b16 %v3687
        %v3731 = vunpack.c.l.b16 %v3688
        %v3732 = vunpack.c.h.b16 %v3688
        %v3733 = vunpack.c.l.b16 %v3689
        %v3734 = vunpack.c.h.b16 %v3689
        %v3735 = vunpack.c.l.b16 %v3690
        %v3736 = vunpack.c.h.b16 %v3690
        %v3737 = vunpack.c.l.b16 %v3691
        %v3738 = vunpack.c.h.b16 %v3691
        %v3739 = vunpack.c.l.b16 %v3692
        %v3740 = vunpack.c.h.b16 %v3692
        %v3741 = vunpack.c.l.b16 %v3693
        %v3742 = vunpack.c.h.b16 %v3693
        %v3743 = vpack.c.b16 %v3715, %v3711
        %v3744 = vpack.c.b16 %v3716, %v3712
        %v3745 = vpack.c.b16 %v3717, %v3713
        %v3746 = vpack.c.b16 %v3718, %v3714
        %v3747 = vpack.c.b16 %v3723, %v3719
        %v3748 = vpack.c.b16 %v3724, %v3720
        %v3749 = vpack.c.b16 %v3725, %v3721
        %v3750 = vpack.c.b16 %v3726, %v3722
        %v3751 = vpack.c.b16 %v3731, %v3727
        %v3752 = vpack.c.b16 %v3732, %v3728
        %v3753 = vpack.c.b16 %v3733, %v3729
        %v3754 = vpack.c.b16 %v3734, %v3730
        %v3755 = vpack.c.b16 %v3739, %v3735
        %v3756 = vpack.c.b16 %v3740, %v3736
        %v3757 = vpack.c.b16 %v3741, %v3737
        %v3758 = vpack.c.b16 %v3742, %v3738
        %v3776 = vlaneseq
        %v3777 = vshrl.u32 %v3776, 7
        %v3778 = vsub.s32 0, %v3777
        %v3779 = vrot.slane %v3694, %v3778
        %v3780 = vlaneseq
        %v3781 = vshrl.u32 %v3780, 7
        %v3782 = vsub.s32 1, %v3781
        %v3783 = vrot.slane %v3694, %v3782
        %v3784 = vlaneseq
        %v3785 = vshrl.u32 %v3784, 7
        %v3786 = vsub.s32 2, %v3785
        %v3787 = vrot.slane %v3694, %v3786
        %v3788 = vlaneseq
        %v3789 = vshrl.u32 %v3788, 7
        %v3790 = vsub.s32 3, %v3789
        %v3791 = vrot.slane %v3694, %v3790
        %v3797 = vsel %vm706, %v3677, 0
        %3799 = vmatprep.subr.bf16.mxu0 %v3744
        %3800 = vmatpush1.bf16.msra.mxu0 %v3743
        %3801 = vmatprep.subr.bf16.mxu0 %v3748
        %3802 = vmatpush1.bf16.msra.mxu0 %v3747
        %3803 = vmatprep.subr.bf16.mxu0 %v3752
        %3804 = vmatpush1.bf16.msra.mxu0 %v3751
        %3805 = vmatprep.subr.bf16.mxu0 %v3756
        %3806 = vmatpush1.bf16.msra.mxu0 %v3755
        %3807 = vmatprep.subr.bf16.mxu0 0
        %3808 = vmatpush1.bf16.msra.mxu0 0
        %3809 = vmatprep.subr.bf16.mxu0 0
        %3810 = vmatpush1.bf16.msra.mxu0 0
        %3811 = vmatprep.subr.bf16.mxu0 0
        %3812 = vmatpush1.bf16.msra.mxu0 0
        %3813 = vmatprep.subr.bf16.mxu0 0
        %3814 = vmatpush1.bf16.msra.mxu0 0
        %3815 = vmatprep.subr.bf16.mxu0 0
        %3816 = vmatpush1.bf16.msra.mxu0 0
        %3817 = vmatprep.subr.bf16.mxu0 0
        %3818 = vmatpush1.bf16.msra.mxu0 0
        %3819 = vmatprep.subr.bf16.mxu0 0
        %3820 = vmatpush1.bf16.msra.mxu0 0
        %3821 = vmatprep.subr.bf16.mxu0 0
        %3822 = vmatpush1.bf16.msra.mxu0 0
        %3823 = vmatprep.subr.bf16.mxu0 0
        %3824 = vmatpush1.bf16.msra.mxu0 0
        %3825 = vmatprep.subr.bf16.mxu0 0
        %3826 = vmatpush1.bf16.msra.mxu0 0
        %3827 = vmatprep.subr.bf16.mxu0 0
        %3828 = vmatpush1.bf16.msra.mxu0 0
        %3829 = vmatprep.subr.bf16.mxu0 0
        %3830 = vmatpush1.bf16.msra.mxu0 0
        %3831 = vmatprep.mubr.bf16.mxu0 0
        %3832 = vmatmul.mubr.bf16.gmra.mrb[0].mxu0 %v3797
        %v3833 = vpop.f32.mrb[0].mxu0
        %v3834 = vadd.f32 %v3779, %v3833
        %v3835 = vpop.f32.mrb[0].mxu0
        %v3836 = vadd.f32 %v3783, %v3835
        %v3837 = vpop.f32.mrb[0].mxu0
        %v3838 = vpop.f32.mrb[0].mxu0
        %3839 = vdwg.mxu0
        %3840 = vmatprep.subr.bf16.mxu0 %v3746
        %3841 = vmatpush1.bf16.msra.mxu0 %v3745
        %3842 = vmatprep.subr.bf16.mxu0 %v3750
        %3843 = vmatpush1.bf16.msra.mxu0 %v3749
        %3844 = vmatprep.subr.bf16.mxu0 %v3754
        %3845 = vmatpush1.bf16.msra.mxu0 %v3753
        %3846 = vmatprep.subr.bf16.mxu0 %v3758
        %3847 = vmatpush1.bf16.msra.mxu0 %v3757
        %3848 = vmatprep.subr.bf16.mxu0 0
        %3849 = vmatpush1.bf16.msra.mxu0 0
        %3850 = vmatprep.subr.bf16.mxu0 0
        %3851 = vmatpush1.bf16.msra.mxu0 0
        %3852 = vmatprep.subr.bf16.mxu0 0
        %3853 = vmatpush1.bf16.msra.mxu0 0
        %3854 = vmatprep.subr.bf16.mxu0 0
        %3855 = vmatpush1.bf16.msra.mxu0 0
        %3856 = vmatprep.subr.bf16.mxu0 0
        %3857 = vmatpush1.bf16.msra.mxu0 0
        %3858 = vmatprep.subr.bf16.mxu0 0
        %3859 = vmatpush1.bf16.msra.mxu0 0
        %3860 = vmatprep.subr.bf16.mxu0 0
        %3861 = vmatpush1.bf16.msra.mxu0 0
        %3862 = vmatprep.subr.bf16.mxu0 0
        %3863 = vmatpush1.bf16.msra.mxu0 0
        %3864 = vmatprep.subr.bf16.mxu0 0
        %3865 = vmatpush1.bf16.msra.mxu0 0
        %3866 = vmatprep.subr.bf16.mxu0 0
        %3867 = vmatpush1.bf16.msra.mxu0 0
        %3868 = vmatprep.subr.bf16.mxu0 0
        %3869 = vmatpush1.bf16.msra.mxu0 0
        %3870 = vmatprep.subr.bf16.mxu0 0
        %3871 = vmatpush1.bf16.msra.mxu0 0
        %3872 = vmatprep.mubr.bf16.mxu0 0
        %3873 = vmatmul.mubr.bf16.gmra.mrb[0].mxu0 %v3797
        %v3874 = vpop.f32.mrb[0].mxu0
        %v3875 = vadd.f32 %v3787, %v3874
        %v3876 = vpop.f32.mrb[0].mxu0
        %v3877 = vadd.f32 %v3791, %v3876
        %v3878 = vpop.f32.mrb[0].mxu0
        %v3879 = vpop.f32.mrb[0].mxu0
        %3880 = vdwg.mxu0
        %v3881 = vmax.f32 %v3834, 0.0
        %v3882 = vmax.f32 %v3836, 0.0
        %v3883 = vmax.f32 %v3875, 0.0
        %v3884 = vmax.f32 %v3877, 0.0
        %v3885 = vpack.c.bf16 %v3881, %v3881
        %v3886 = vpack.c.bf16 %v3882, %v3882
        %v3887 = vpack.c.bf16 %v3883, %v3883
        %v3888 = vpack.c.bf16 %v3884, %v3884
        %v3889 = vld [vmem:[%s11] sm:$0xf]
        %v3890 = vld [vmem:[%s11 + $0x4] sm:$0xf]
        %v3891 = vld [vmem:[%s11 + $0x8] sm:$0xf]
        %v3892 = vld [vmem:[%s11 + $0xc] sm:$0xf]
        %v3893 = vld [vmem:[%s11 + $0x10] sm:$0xf]
        %v3894 = vld [vmem:[%s11 + $0x14] sm:$0xf]
        %v3895 = vld [vmem:[%s11 + $0x18] sm:$0xf]
        %v3896 = vld [vmem:[%s11 + $0x1c] sm:$0xf]
        %v3897 = vld [vmem:[%s11 + $0x20] sm:$0xf]
        %v3898 = vld [vmem:[%s11 + $0x24] sm:$0xf]
        %v3899 = vld [vmem:[%s11 + $0x28] sm:$0xf]
        %v3900 = vld [vmem:[%s11 + $0x2c] sm:$0xf]
        %v3901 = vld [vmem:[%s11 + $0x30] sm:$0xf]
        %v3902 = vld [vmem:[%s11 + $0x34] sm:$0xf]
        %v3903 = vld [vmem:[%s11 + $0x38] sm:$0xf]
        %v3904 = vld [vmem:[%s11 + $0x3c] sm:$0xf]
        %v3905 = vld [vmem:[%s11 + $0x40] sm:$0xf]
        %v3906 = vld [vmem:[%s11 + $0x44] sm:$0xf]
        %v3907 = vld [vmem:[%s11 + $0x48] sm:$0xf]
        %v3908 = vld [vmem:[%s11 + $0x4c] sm:$0xf]
        %v3909 = vld [vmem:[%s11 + $0x50] sm:$0xf]
        %v3910 = vld [vmem:[%s11 + $0x54] sm:$0xf]
        %v3911 = vld [vmem:[%s11 + $0x58] sm:$0xf]
        %v3912 = vld [vmem:[%s11 + $0x5c] sm:$0xf]
        %v3913 = vld [vmem:[%s11 + $0x60] sm:$0xf]
        %v3914 = vld [vmem:[%s11 + $0x64] sm:$0xf]
        %v3915 = vld [vmem:[%s11 + $0x68] sm:$0xf]
        %v3916 = vld [vmem:[%s11 + $0x6c] sm:$0xf]
        %v3917 = vld [vmem:[%s11 + $0x70] sm:$0xf]
        %v3918 = vld [vmem:[%s11 + $0x74] sm:$0xf]
        %v3919 = vld [vmem:[%s11 + $0x78] sm:$0xf]
        %v3920 = vld [vmem:[%s11 + $0x7c] sm:$0xf]
        %v3921 = vld [vmem:[%s11 + $0x80] sm:$0xf]
        %v3922 = vld [vmem:[%s11 + $0x84] sm:$0xf]
        %v3923 = vld [vmem:[%s11 + $0x88] sm:$0xf]
        %v3924 = vld [vmem:[%s11 + $0x8c] sm:$0xf]
        %v3925 = vld [vmem:[%s11 + $0x90] sm:$0xf]
        %v3926 = vld [vmem:[%s11 + $0x94] sm:$0xf]
        %v3927 = vld [vmem:[%s11 + $0x98] sm:$0xf]
        %v3928 = vld [vmem:[%s11 + $0x9c] sm:$0xf]
        %v3929 = vld [vmem:[%s11 + $0xa0] sm:$0xf]
        %v3930 = vld [vmem:[%s11 + $0xa4] sm:$0xf]
        %v3931 = vld [vmem:[%s11 + $0xa8] sm:$0xf]
        %v3932 = vld [vmem:[%s11 + $0xac] sm:$0xf]
        %v3933 = vld [vmem:[%s11 + $0xb0] sm:$0xf]
        %v3934 = vld [vmem:[%s11 + $0xb4] sm:$0xf]
        %v3935 = vld [vmem:[%s11 + $0xb8] sm:$0xf]
        %v3936 = vld [vmem:[%s11 + $0xbc] sm:$0xf]
        %v3937 = vld [vmem:[%s11 + $0xc0] sm:$0xf]
        %v3938 = vld [vmem:[%s11 + $0xc4] sm:$0xf]
        %v3939 = vld [vmem:[%s11 + $0xc8] sm:$0xf]
        %v3940 = vld [vmem:[%s11 + $0xcc] sm:$0xf]
        %v3941 = vld [vmem:[%s11 + $0xd0] sm:$0xf]
        %v3942 = vld [vmem:[%s11 + $0xd4] sm:$0xf]
        %v3943 = vld [vmem:[%s11 + $0xd8] sm:$0xf]
        %v3944 = vld [vmem:[%s11 + $0xdc] sm:$0xf]
        %v3945 = vld [vmem:[%s11 + $0xe0] sm:$0xf]
        %v3946 = vld [vmem:[%s11 + $0xe4] sm:$0xf]
        %v3947 = vld [vmem:[%s11 + $0xe8] sm:$0xf]
        %v3948 = vld [vmem:[%s11 + $0xec] sm:$0xf]
        %v3949 = vld [vmem:[%s11 + $0xf0] sm:$0xf]
        %v3950 = vld [vmem:[%s11 + $0xf4] sm:$0xf]
        %v3951 = vld [vmem:[%s11 + $0xf8] sm:$0xf]
        %v3952 = vld [vmem:[%s11 + $0xfc] sm:$0xf]
        %v3953 = vld [vmem:[%s12] sm:$0x1]
        %v4018 = vunpack.c.l.b16 %v3889
        %v4019 = vunpack.c.l.b16 %v3890
        %v4020 = vunpack.c.l.b16 %v3891
        %v4021 = vunpack.c.l.b16 %v3892
        %v4022 = vunpack.c.l.b16 %v3893
        %v4023 = vunpack.c.l.b16 %v3894
        %v4024 = vunpack.c.l.b16 %v3895
        %v4025 = vunpack.c.l.b16 %v3896
        %v4026 = vunpack.c.l.b16 %v3897
        %v4027 = vunpack.c.l.b16 %v3898
        %v4028 = vunpack.c.l.b16 %v3899
        %v4029 = vunpack.c.l.b16 %v3900
        %v4030 = vunpack.c.l.b16 %v3901
        %v4031 = vunpack.c.l.b16 %v3902
        %v4032 = vunpack.c.l.b16 %v3903
        %v4033 = vunpack.c.l.b16 %v3904
        %v4034 = vunpack.c.l.b16 %v3905
        %v4035 = vunpack.c.l.b16 %v3906
        %v4036 = vunpack.c.l.b16 %v3907
        %v4037 = vunpack.c.l.b16 %v3908
        %v4038 = vunpack.c.l.b16 %v3909
        %v4039 = vunpack.c.l.b16 %v3910
        %v4040 = vunpack.c.l.b16 %v3911
        %v4041 = vunpack.c.l.b16 %v3912
        %v4042 = vunpack.c.l.b16 %v3913
        %v4043 = vunpack.c.l.b16 %v3914
        %v4044 = vunpack.c.l.b16 %v3915
        %v4045 = vunpack.c.l.b16 %v3916
        %v4046 = vunpack.c.l.b16 %v3917
        %v4047 = vunpack.c.l.b16 %v3918
        %v4048 = vunpack.c.l.b16 %v3919
        %v4049 = vunpack.c.l.b16 %v3920
        %v4050 = vunpack.c.l.b16 %v3921
        %v4051 = vunpack.c.l.b16 %v3922
        %v4052 = vunpack.c.l.b16 %v3923
        %v4053 = vunpack.c.l.b16 %v3924
        %v4054 = vunpack.c.l.b16 %v3925
        %v4055 = vunpack.c.l.b16 %v3926
        %v4056 = vunpack.c.l.b16 %v3927
        %v4057 = vunpack.c.l.b16 %v3928
        %v4058 = vunpack.c.l.b16 %v3929
        %v4059 = vunpack.c.l.b16 %v3930
        %v4060 = vunpack.c.l.b16 %v3931
        %v4061 = vunpack.c.l.b16 %v3932
        %v4062 = vunpack.c.l.b16 %v3933
        %v4063 = vunpack.c.l.b16 %v3934
        %v4064 = vunpack.c.l.b16 %v3935
        %v4065 = vunpack.c.l.b16 %v3936
        %v4066 = vunpack.c.l.b16 %v3937
        %v4067 = vunpack.c.l.b16 %v3938
        %v4068 = vunpack.c.l.b16 %v3939
        %v4069 = vunpack.c.l.b16 %v3940
        %v4070 = vunpack.c.l.b16 %v3941
        %v4071 = vunpack.c.l.b16 %v3942
        %v4072 = vunpack.c.l.b16 %v3943
        %v4073 = vunpack.c.l.b16 %v3944
        %v4074 = vunpack.c.l.b16 %v3945
        %v4075 = vunpack.c.l.b16 %v3946
        %v4076 = vunpack.c.l.b16 %v3947
        %v4077 = vunpack.c.l.b16 %v3948
        %v4078 = vunpack.c.l.b16 %v3949
        %v4079 = vunpack.c.l.b16 %v3950
        %v4080 = vunpack.c.l.b16 %v3951
        %v4081 = vunpack.c.l.b16 %v3952
        %v4082 = vpack.c.b16 %v4019, %v4018
        %v4083 = vpack.c.b16 %v4021, %v4020
        %v4084 = vpack.c.b16 %v4023, %v4022
        %v4085 = vpack.c.b16 %v4025, %v4024
        %v4086 = vpack.c.b16 %v4027, %v4026
        %v4087 = vpack.c.b16 %v4029, %v4028
        %v4088 = vpack.c.b16 %v4031, %v4030
        %v4089 = vpack.c.b16 %v4033, %v4032
        %v4090 = vpack.c.b16 %v4035, %v4034
        %v4091 = vpack.c.b16 %v4037, %v4036
        %v4092 = vpack.c.b16 %v4039, %v4038
        %v4093 = vpack.c.b16 %v4041, %v4040
        %v4094 = vpack.c.b16 %v4043, %v4042
        %v4095 = vpack.c.b16 %v4045, %v4044
        %v4096 = vpack.c.b16 %v4047, %v4046
        %v4097 = vpack.c.b16 %v4049, %v4048
        %v4098 = vpack.c.b16 %v4051, %v4050
        %v4099 = vpack.c.b16 %v4053, %v4052
        %v4100 = vpack.c.b16 %v4055, %v4054
        %v4101 = vpack.c.b16 %v4057, %v4056
        %v4102 = vpack.c.b16 %v4059, %v4058
        %v4103 = vpack.c.b16 %v4061, %v4060
        %v4104 = vpack.c.b16 %v4063, %v4062
        %v4105 = vpack.c.b16 %v4065, %v4064
        %v4106 = vpack.c.b16 %v4067, %v4066
        %v4107 = vpack.c.b16 %v4069, %v4068
        %v4108 = vpack.c.b16 %v4071, %v4070
        %v4109 = vpack.c.b16 %v4073, %v4072
        %v4110 = vpack.c.b16 %v4075, %v4074
        %v4111 = vpack.c.b16 %v4077, %v4076
        %v4112 = vpack.c.b16 %v4079, %v4078
        %v4113 = vpack.c.b16 %v4081, %v4080
        %4146 = vmatprep.subr.bf16.mxu0 0
        %4147 = vmatpush1.bf16.msra.mxu0 %v4082
        %4148 = vmatprep.subr.bf16.mxu0 0
        %4149 = vmatpush1.bf16.msra.mxu0 %v4083
        %4150 = vmatprep.subr.bf16.mxu0 0
        %4151 = vmatpush1.bf16.msra.mxu0 %v4084
        %4152 = vmatprep.subr.bf16.mxu0 0
        %4153 = vmatpush1.bf16.msra.mxu0 %v4085
        %4154 = vmatprep.subr.bf16.mxu0 0
        %4155 = vmatpush1.bf16.msra.mxu0 %v4086
        %4156 = vmatprep.subr.bf16.mxu0 0
        %4157 = vmatpush1.bf16.msra.mxu0 %v4087
        %4158 = vmatprep.subr.bf16.mxu0 0
        %4159 = vmatpush1.bf16.msra.mxu0 %v4088
        %4160 = vmatprep.subr.bf16.mxu0 0
        %4161 = vmatpush1.bf16.msra.mxu0 %v4089
        %4162 = vmatprep.subr.bf16.mxu0 0
        %4163 = vmatpush1.bf16.msra.mxu0 %v4090
        %4164 = vmatprep.subr.bf16.mxu0 0
        %4165 = vmatpush1.bf16.msra.mxu0 %v4091
        %4166 = vmatprep.subr.bf16.mxu0 0
        %4167 = vmatpush1.bf16.msra.mxu0 %v4092
        %4168 = vmatprep.subr.bf16.mxu0 0
        %4169 = vmatpush1.bf16.msra.mxu0 %v4093
        %4170 = vmatprep.subr.bf16.mxu0 0
        %4171 = vmatpush1.bf16.msra.mxu0 %v4094
        %4172 = vmatprep.subr.bf16.mxu0 0
        %4173 = vmatpush1.bf16.msra.mxu0 %v4095
        %4174 = vmatprep.subr.bf16.mxu0 0
        %4175 = vmatpush1.bf16.msra.mxu0 %v4096
        %4176 = vmatprep.subr.bf16.mxu0 0
        %4177 = vmatpush1.bf16.msra.mxu0 %v4097
        %4178 = vmatprep.mubr.bf16.mxu0 %v3886
        %4179 = vmatmul.mubr.bf16.gmra.mrb[0].mxu0 %v3885
        %v4180 = vpop.f32.mrb[0].mxu0
        %v4181 = vadd.f32 %v3953, %v4180
        %v4182 = vpop.f32.mrb[0].mxu0
        %v4183 = vpop.f32.mrb[0].mxu0
        %v4184 = vpop.f32.mrb[0].mxu0
        %4185 = vdwg.mxu0
        %4186 = vmatprep.subr.bf16.mxu0 0
        %4187 = vmatpush1.bf16.msra.mxu0 %v4098
        %4188 = vmatprep.subr.bf16.mxu0 0
        %4189 = vmatpush1.bf16.msra.mxu0 %v4099
        %4190 = vmatprep.subr.bf16.mxu0 0
        %4191 = vmatpush1.bf16.msra.mxu0 %v4100
        %4192 = vmatprep.subr.bf16.mxu0 0
        %4193 = vmatpush1.bf16.msra.mxu0 %v4101
        %4194 = vmatprep.subr.bf16.mxu0 0
        %4195 = vmatpush1.bf16.msra.mxu0 %v4102
        %4196 = vmatprep.subr.bf16.mxu0 0
        %4197 = vmatpush1.bf16.msra.mxu0 %v4103
        %4198 = vmatprep.subr.bf16.mxu0 0
        %4199 = vmatpush1.bf16.msra.mxu0 %v4104
        %4200 = vmatprep.subr.bf16.mxu0 0
        %4201 = vmatpush1.bf16.msra.mxu0 %v4105
        %4202 = vmatprep.subr.bf16.mxu0 0
        %4203 = vmatpush1.bf16.msra.mxu0 %v4106
        %4204 = vmatprep.subr.bf16.mxu0 0
        %4205 = vmatpush1.bf16.msra.mxu0 %v4107
        %4206 = vmatprep.subr.bf16.mxu0 0
        %4207 = vmatpush1.bf16.msra.mxu0 %v4108
        %4208 = vmatprep.subr.bf16.mxu0 0
        %4209 = vmatpush1.bf16.msra.mxu0 %v4109
        %4210 = vmatprep.subr.bf16.mxu0 0
        %4211 = vmatpush1.bf16.msra.mxu0 %v4110
        %4212 = vmatprep.subr.bf16.mxu0 0
        %4213 = vmatpush1.bf16.msra.mxu0 %v4111
        %4214 = vmatprep.subr.bf16.mxu0 0
        %4215 = vmatpush1.bf16.msra.mxu0 %v4112
        %4216 = vmatprep.subr.bf16.mxu0 0
        %4217 = vmatpush1.bf16.msra.mxu0 %v4113
        %4218 = vmatprep.mubr.bf16.mxu0 %v3888
        %4219 = vmatmul.mubr.bf16.gmra.mrb[0].mxu0 %v3887
        %v4220 = vpop.f32.mrb[0].mxu0
        %v4221 = vadd.f32 %v4181, %v4220
        %v4222 = vpop.f32.mrb[0].mxu0
        %v4223 = vpop.f32.mrb[0].mxu0
        %v4224 = vpop.f32.mrb[0].mxu0
        %4225 = vdwg.mxu0
        %4226 = vst [vmem:[%s432] sm:$0x1] %v4221
        %s4227 = sand.u32 %s313, 1
        %s4228 = scalar_lea.sflag [#allocation3], %s4227
        %s4229 = sand.u32 %s313, 1
        %s4230 = scalar_lea.vmem [#allocation2], %s4229
        // Predicated region
        $region73: #{dqn_forward.1} parent=71 // pred_check
          %p4231 = pneg %p323
        $region74: #{dqn_forward.1} parent=71 // pred_check_branch
          %4233 = sbr.rel (%p4231) target = $region76
        $region75: #{dqn_forward.1} parent=71 // pred_region
          %s4235 = ssub.s32 16, 16
          %4236 = vsyncadd %s4228, %s4235
          %s4237 = smul.addr %s27, 16
          %s4238 = scalar_lea.hbm %s13, %s4237
          %s4240 = sshll.u32 %s4230, 4
          %s4241 = int_to_ptr.vmem [resolvable:$true] %s4240
          %4243 = dma.vmem_to_hbm [thread:$0]  %s4241, 16, %s4238, %s4228
        $region76: #{dqn_forward.1} parent=71 // pred_fallthru
          _
      $region72: #{dqn_forward.1} parent=5 // pred_fallthru
        _
      %p4244 = scmp.le.s32.totalorder 2, %s22
      // Predicated region
      $region77: #{dqn_forward.1} parent=5 // pred_check
        %p4245 = pneg %p4244
      $region78: #{dqn_forward.1} parent=5 // pred_check_branch
        %4247 = sbr.rel (%p4245) target = $region80
      $region79: #{dqn_forward.1} parent=5 // pred_region
        %s4248 = ssub.s32 %s22, 2
        // Predicated region
        $region81: #{dqn_forward.1} parent=79 // pred_check
          %p4249 = pneg %p329
        $region82: #{dqn_forward.1} parent=79 // pred_check_branch
          %4251 = sbr.rel (%p4249) target = $region84
        $region83: #{dqn_forward.1} parent=79 // pred_region
          %s4252 = sand.u32 %s314, 1
          %s4253 = scalar_lea.sflag [#allocation3], %s4252
          %s4254 = sand.u32 %s314, 1
          %s4255 = scalar_lea.vmem [#allocation2], %s4254
          %4256 = dma.done %s4253, 16
        $region84: #{dqn_forward.1} parent=79 // pred_fallthru
          _
      $region80: #{dqn_forward.1} parent=5 // pred_fallthru
        _
    $region6: #{dqn_forward.1} parent=1 // loop_footer
      %s26 = sadd.s32 1, %s22
    $region7: #{dqn_forward.1} parent=1 // loop_footer_branch
      %21 = sbr.rel target = $region3
    $region8: #{dqn_forward.1} parent=1 // loop_exit
      _
    %4257 = vsyncpa [#allocation3], 1
    %s4258 = scalar_lea.sflag [#allocation3], 1
    %4259 = vsyncpa %s4258, 1

</llo_original>
